<compile_context>
chip_gen: v6e
topology: v6e:2x2x1
jax: 0.10.0
libtpu: 0.0.40
codegen_flags: <defaults>
</compile_context>

<pallas_src>
import jax
import jax.numpy as jnp
from jax import lax
from jax.experimental import pallas as pl
from jax.experimental.pallas import tpu as pltpu

EPS = 1e-5
LANES = 128


# --------------------------------------------------------------------------
# small helpers
# --------------------------------------------------------------------------
def _round_up(x, m):
    return (x + m - 1) // m * m


def _largest_divisor(n, cap):
    cap = max(1, min(cap, n))
    for d in range(cap, 0, -1):
        if n % d == 0:
            return d
    return 1


def _vmem_limit_bytes():
    # generation-aware VMEM budget (v5e/v6e: 128 MiB, v7x: 64 MiB per TC), with headroom
    try:
        cap = int(pltpu.get_tpu_info().vmem_capacity_bytes)
    except Exception:
        cap = 64 * 1024 * 1024
    return int(min(cap * 3 // 4, 100 * 1024 * 1024))


def _prep_weight(w_oihw, C, Cp):
    # (Cout, Cin, 3, 3) -> (9*Cp, Cp) bf16; contraction index = (kh*3 + kw)*Cp + cin
    wt = jnp.transpose(w_oihw.astype(jnp.float32), (2, 3, 1, 0))          # (3,3,Cin,Cout)
    wt = jnp.pad(wt, ((0, 0), (0, 0), (0, Cp - C), (0, Cp - C)))
    return wt.reshape(9 * Cp, Cp).astype(jnp.bfloat16)


def _pad_vec(v, Cp):
    return jnp.pad(v.astype(jnp.float32), (0, Cp - v.shape[0]))


def _finalize_stats(s, ss, count):
    # s, ss: (N, nI, 1, Cp) per-tile partials -> (Cp,) mean / invstd (biased var, BN style)
    s = jnp.sum(s, axis=(0, 1)).reshape(-1)
    ss = jnp.sum(ss, axis=(0, 1)).reshape(-1)
    mean = s / count
    # NOTE: E[x^2]-E[x]^2 in f32 with a clamp; fine at these scales, cancellation-prone
    #       for very large-mean activations.
    var = jnp.maximum(ss / count - mean * mean, 0.0)
    return mean, lax.rsqrt(var + EPS)


# --------------------------------------------------------------------------
# Fused conv3x3 (+ optional BN1-affine/PReLU prologue) + per-tile BN statistics.
# --------------------------------------------------------------------------
def _conv_bn_pass(x, w, scale, shift, alpha, *, H, W, Cp, th, apply_prologue,
                  out_dtype, vmem_limit):
    """3x3 SAME conv (no bias) with fused per-row-tile BN batch-stat partials.

    x : (N, Hq, W, Cp) with Hq a multiple of th (rows >= H are zero / don't-care).
    w : (9*Cp, Cp) bf16, contraction index (kh*3 + kw)*Cp + cin.
    If apply_prologue: y = PReLU(x*scale + shift) is applied ONCE per element before the
    conv; the conv's zero padding of that activation is reproduced by zeroing halo /
    invalid positions AFTER the prologue.
    Returns h (N, Hq, W, Cp) out_dtype and s, ss (N, nI, 1, Cp) f32 partial sums over
    valid rows only.
    """
    N, Hq = x.shape[0], x.shape[1]
    nI = Hq // th
    has_tail = (Hq != H)                                   # static

    def kernel(*refs):
        if apply_prologue:
            (top_ref, mid_ref, bot_ref, w_ref, sc_ref, sh_ref, a_ref,
             o_ref, s_ref, ss_ref) = refs
        else:
            top_ref, mid_ref, bot_ref, w_ref, o_ref, s_ref, ss_ref = refs

        r0 = pl.program_id(1) * th

        # (th+2, W, Cp) band: one halo row above / below the output row tile
        band = jnp.concatenate([top_ref[0], mid_ref[0], bot_ref[0]], axis=0)
        band = band.astype(jnp.float32)
        if apply_prologue:                                  # hoisted: once per element
            y = band * sc_ref[...].reshape(1, 1, Cp) + sh_ref[...].reshape(1, 1, Cp)
            band = jnp.where(y > 0, y, a_ref[0, 0] * y)     # PReLU
        # zero the row halo / tail rows AFTER the prologue (they must be exactly 0)
        p = lax.broadcasted_iota(jnp.int32, (th + 2, W, 1), 0) + (r0 - 1)
        band = jnp.where((p >= 0) & (p < H), band, 0.0).astype(jnp.bfloat16)
        # zero column halo
        zcol = jnp.zeros((th + 2, 1, Cp), jnp.bfloat16)
        pband = jnp.concatenate([zcol, band, zcol], axis=1)            # (th+2, W+2, Cp)

        # assemble the 9 taps along the contraction axis -> a single deep-K MXU dot
        patch = jnp.concatenate(
            [pband[kh:kh + th, kw:kw + W, :] for kh in range(3) for kw in range(3)],
            axis=-1)                                                   # (th, W, 9*Cp)
        acc = jnp.dot(patch.reshape(th * W, 9 * Cp), w_ref[...],
                      preferred_element_type=jnp.float32)              # (th*W, Cp) f32
        tile = acc.reshape(th, W, Cp)
        o_ref[...] = tile.reshape(1, th, W, Cp).astype(o_ref.dtype)

        if has_tail:                      # exclude rows >= H from the batch statistics
            q = lax.broadcasted_iota(jnp.int32, (th, W, 1), 0) + r0
            tile = jnp.where(q < H, tile, 0.0)
        s_ref[...] = jnp.sum(tile, axis=(0, 1)).reshape(1, 1, 1, Cp)
        ss_ref[...] = jnp.sum(tile * tile, axis=(0, 1)).reshape(1, 1, 1, Cp)

    row_top = lambda n, i: (n, jnp.maximum(i * th - 1, 0), 0, 0)
    row_bot = lambda n, i: (n, jnp.minimum(i * th + th, Hq - 1), 0, 0)
    in_specs = [
        pl.BlockSpec((1, 1, W, Cp), row_top),                          # halo row above
        pl.BlockSpec((1, th, W, Cp), lambda n, i: (n, i, 0, 0)),       # row tile
        pl.BlockSpec((1, 1, W, Cp), row_bot),                          # halo row below
        pl.BlockSpec((9 * Cp, Cp), lambda n, i: (0, 0)),               # resident weights
    ]
    args = [x, x, x, w]
    if apply_prologue:
        in_specs += [
            pl.BlockSpec((1, Cp), lambda n, i: (0, 0)),                # gamma1*invstd1
            pl.BlockSpec((1, Cp), lambda n, i: (0, 0)),                # beta1 - mean1*...
            pl.BlockSpec(memory_space=pltpu.MemorySpace.SMEM),         # PReLU alpha scalar
        ]
        args += [scale, shift, alpha]

    out_shape = (
        jax.ShapeDtypeStruct((N, Hq, W, Cp), out_dtype),
        jax.ShapeDtypeStruct((N, nI, 1, Cp), jnp.float32),
        jax.ShapeDtypeStruct((N, nI, 1, Cp), jnp.float32),
    )
    out_specs = (
        pl.BlockSpec((1, th, W, Cp), lambda n, i: (n, i, 0, 0)),
        pl.BlockSpec((1, 1, 1, Cp), lambda n, i: (n, i, 0, 0)),
        pl.BlockSpec((1, 1, 1, Cp), lambda n, i: (n, i, 0, 0)),
    )
    return pl.pallas_call(
        kernel,
        out_shape=out_shape,
        grid_spec=pltpu.PrefetchScalarGridSpec(
            num_scalar_prefetch=0,
            grid=(N, nI),
            in_specs=in_specs,
            out_specs=out_specs,
        ),
        compiler_params=pltpu.CompilerParams(
            dimension_semantics=("parallel", "parallel"),
            vmem_limit_bytes=vmem_limit,
        ),
    )(*args)


# --------------------------------------------------------------------------
# BN2 affine + residual add (lane-dense streaming elementwise pass).
# --------------------------------------------------------------------------
def _bn2_residual_pass(h2, res, scale2, shift2, *, W, Cp, tr, vmem_limit):
    R = h2.shape[0]

    def kernel(h_ref, r_ref, sc_ref, sh_ref, o_ref):
        o_ref[...] = h_ref[...] * sc_ref[...] + sh_ref[...] + r_ref[...]

    row = lambda: pl.BlockSpec((tr, W, Cp), lambda i: (i, 0, 0))
    ch = lambda: pl.BlockSpec((1, 1, Cp), lambda i: (0, 0, 0))
    return pl.pallas_call(
        kernel,
        out_shape=jax.ShapeDtypeStruct((R, W, Cp), jnp.float32),
        grid_spec=pltpu.PrefetchScalarGridSpec(
            num_scalar_prefetch=0,
            grid=(R // tr,),
            in_specs=[row(), row(), ch(), ch()],
            out_specs=row(),
        ),
        compiler_params=pltpu.CompilerParams(
            dimension_semantics=("parallel",),
            vmem_limit_bytes=vmem_limit,
        ),
    )(h2, res, scale2, shift2)


# --------------------------------------------------------------------------
# Full ResidualBlock forward.
# --------------------------------------------------------------------------
@jax.jit
def residual_block_forward(x_nchw, params):
    x = jnp.transpose(x_nchw, (0, 2, 3, 1)).astype(jnp.float32)        # NCHW -> NHWC
    N, H, W, C = x.shape
    Cp = _round_up(C, LANES)                                           # lane-dense channels

    vmem_limit = _vmem_limit_bytes()
    # VMEM-aware row-tile: ~Cp*64 bytes of working set per output pixel (patch/band/acc/buffers)
    thw_target = max(256, min(4096, (vmem_limit // 3) // (Cp * 64)))
    th = max(1, min(H, thw_target // max(W, 1)))
    Hq = _round_up(H, th)                                              # tail rows masked in-kernel

    # channel pad to full lanes + row pad (zeros); this f32 array doubles as the residual.
    xc = jnp.pad(x, ((0, 0), (0, Hq - H), (0, 0), (0, Cp - C)))        # (N, Hq, W, Cp) f32

    w1 = _prep_weight(params["w1"], C, Cp)
    w2 = _prep_weight(params["w2"], C, Cp)
    gamma1, beta1 = _pad_vec(params["gamma1"], Cp), _pad_vec(params["beta1"], Cp)
    gamma2, beta2 = _pad_vec(params["gamma2"], Cp), _pad_vec(params["beta2"], Cp)
    count = float(N * H * W)
    # NOTE: conv biases b1/b2 are intentionally dropped - training-mode BatchNorm subtracts the
    #       batch mean, which absorbs any constant per-channel bias exactly.

    # ---- conv1 + fused per-tile BN1 batch statistics (h1 stored bf16).
    h1, s1, ss1 = _conv_bn_pass(xc, w1, None, None, None,
                                H=H, W=W, Cp=Cp, th=th, apply_prologue=False,
                                out_dtype=jnp.bfloat16, vmem_limit=vmem_limit)
    mean1, invstd1 = _finalize_stats(s1, ss1, count)
    scale1 = (gamma1 * invstd1).reshape(1, Cp)
    shift1 = (beta1 - mean1 * gamma1 * invstd1).reshape(1, Cp)

    # ---- conv2 with hoisted BN1-affine + PReLU prologue + fused BN2 statistics.
    alpha = params["alpha"].astype(jnp.float32).reshape(1, 1)
    h2, s2, ss2 = _conv_bn_pass(h1, w2, scale1, shift1, alpha,
                                H=H, W=W, Cp=Cp, th=th, apply_prologue=True,
                                out_dtype=jnp.float32, vmem_limit=vmem_limit)
    mean2, invstd2 = _finalize_stats(s2, ss2, count)
    scale2 = (gamma2 * invstd2).reshape(1, 1, Cp)
    shift2 = (beta2 - mean2 * gamma2 * invstd2).reshape(1, 1, Cp)

    # ---- BN2 affine + residual add (pure HBM-roofline streaming pass).
    # TODO(synk): h2 could be stored bf16 to cut pass-3 read bytes ~40% if output tolerance allows.
    R = N * Hq
    k = _largest_divisor(R // th, max(1, 4096 // max(th * W, 1)))
    tr = th * k
    out3 = _bn2_residual_pass(h2.reshape(R, W, Cp), xc.reshape(R, W, Cp),
                              scale2, shift2, W=W, Cp=Cp, tr=tr, vmem_limit=vmem_limit)

    # TODO(synk): final channel-slice + NHWC->NCHW transpose stays in XLA (small, C << Cp).
    out = out3.reshape(N, Hq, W, Cp)[:, :H, :, :C]
    return jnp.transpose(out, (0, 3, 1, 2))                            # NHWC -> NCHW


# --------------------------------------------------------------------------
# Pure-JAX reference (full PyTorch semantics, f32, including conv bias) + params.
# --------------------------------------------------------------------------
def reference_forward(x, p):
    def conv(x, w, b):
        y = lax.conv_general_dilated(
            x, w, (1, 1), "SAME", dimension_numbers=("NCHW", "OIHW", "NCHW"))
        return y + b[None, :, None, None]

    def bn(x, g, bta):
        mean = x.mean(axis=(0, 2, 3), keepdims=True)
        var = x.var(axis=(0, 2, 3), keepdims=True)   # biased
        return (x - mean) * lax.rsqrt(var + EPS) * g[None, :, None, None] + bta[None, :, None, None]

    h = bn(conv(x, p["w1"], p["b1"]), p["gamma1"], p["beta1"])
    h = jnp.where(h > 0, h, p["alpha"][0] * h)
    h = bn(conv(h, p["w2"], p["b2"]), p["gamma2"], p["beta2"])
    return h + x


def init_params(key, channels):
    ks = jax.random.split(key, 4)
    fan_in = channels * 3 * 3
    bound = 1.0 / jnp.sqrt(fan_in)
    return {
        "w1": jax.random.uniform(ks[0], (channels, channels, 3, 3), jnp.float32, -bound, bound),
        "b1": jax.random.uniform(ks[1], (channels,), jnp.float32, -bound, bound),
        "w2": jax.random.uniform(ks[2], (channels, channels, 3, 3), jnp.float32, -bound, bound),
        "b2": jax.random.uniform(ks[3], (channels,), jnp.float32, -bound, bound),
        "gamma1": jnp.ones((channels,), jnp.float32),
        "beta1": jnp.zeros((channels,), jnp.float32),
        "gamma2": jnp.ones((channels,), jnp.float32),
        "beta2": jnp.zeros((channels,), jnp.float32),
        "alpha": jnp.full((1,), 0.25, jnp.float32),   # PReLU default init
    }


if __name__ == "__main__":
    key = jax.random.PRNGKey(0)
    kx, kp = jax.random.split(key)

    N, C, H, W = 2, 4, 16, 16
    x = jax.random.normal(kx, (N, C, H, W), jnp.float32)
    params = init_params(kp, C)

    out = residual_block_forward(x, params)
    out = jax.block_until_ready(out)

    ref = reference_forward(x, params)
    err = float(jnp.max(jnp.abs(out - ref)))
    assert out.shape == (N, C, H, W)
    # bf16 MXU operands / bf16 h1 intermediate (f32 accumulation) -> loosened tolerance vs f32 ref.
    assert jnp.allclose(out, ref, atol=5e-2, rtol=5e-2), f"max abs err = {err}"

    print("KERNEL_OK")
</pallas_src>

<mosaic_0001>
module attributes {stable_mosaic.version = 11 : i64} {
  func.func @kernel(%arg0: i32, %arg1: memref<32x16x128xf32, #tpu.memory_space<vmem>>, %arg2: memref<32x16x128xf32, #tpu.memory_space<vmem>>, %arg3: memref<1x1x128xf32, #tpu.memory_space<vmem>>, %arg4: memref<1x1x128xf32, #tpu.memory_space<vmem>>, %arg5: memref<32x16x128xf32, #tpu.memory_space<vmem>>) attributes {dimension_semantics = [#tpu.dimension_semantics<parallel>], iteration_bounds = array<i64: 1>, scalar_prefetch = 0 : i64, scratch_operands = 0 : i64, tpu.core_type = #tpu.core_type<tc>, window_params = [{transform_indices = @transform_0, window_bounds = array<i64: 32, 16, 128>}, {transform_indices = @transform_1, window_bounds = array<i64: 32, 16, 128>}, {pipeline_mode = #tpu.pipeline_mode<synchronous>, transform_indices = @transform_2, window_bounds = array<i64: 1, 1, 128>}, {pipeline_mode = #tpu.pipeline_mode<synchronous>, transform_indices = @transform_3, window_bounds = array<i64: 1, 1, 128>}, {transform_indices = @transform_4, window_bounds = array<i64: 32, 16, 128>}]} {
    %c0 = arith.constant 0 : index
    %c0_0 = arith.constant 0 : index
    %c0_1 = arith.constant 0 : index
    %0 = vector.load %arg1[%c0, %c0_0, %c0_1] : memref<32x16x128xf32, #tpu.memory_space<vmem>>, vector<32x16x128xf32>
    %c0_2 = arith.constant 0 : index
    %c0_3 = arith.constant 0 : index
    %c0_4 = arith.constant 0 : index
    %1 = vector.load %arg3[%c0_2, %c0_3, %c0_4] : memref<1x1x128xf32, #tpu.memory_space<vmem>>, vector<1x1x128xf32>
    %2 = vector.broadcast %1 : vector<1x1x128xf32> to vector<32x16x128xf32>
    %3 = arith.mulf %0, %2 : vector<32x16x128xf32>
    %c0_5 = arith.constant 0 : index
    %c0_6 = arith.constant 0 : index
    %c0_7 = arith.constant 0 : index
    %4 = vector.load %arg4[%c0_5, %c0_6, %c0_7] : memref<1x1x128xf32, #tpu.memory_space<vmem>>, vector<1x1x128xf32>
    %5 = vector.broadcast %4 : vector<1x1x128xf32> to vector<32x16x128xf32>
    %6 = arith.addf %3, %5 : vector<32x16x128xf32>
    %c0_8 = arith.constant 0 : index
    %c0_9 = arith.constant 0 : index
    %c0_10 = arith.constant 0 : index
    %7 = vector.load %arg2[%c0_8, %c0_9, %c0_10] : memref<32x16x128xf32, #tpu.memory_space<vmem>>, vector<32x16x128xf32>
    %8 = arith.addf %6, %7 : vector<32x16x128xf32>
    %c0_11 = arith.constant 0 : index
    %c0_12 = arith.constant 0 : index
    %c0_13 = arith.constant 0 : index
    %9 = vector.load %arg5[%c0_11, %c0_12, %c0_13] : memref<32x16x128xf32, #tpu.memory_space<vmem>>, vector<32x16x128xf32>
    tpu.vector_store %arg5[%c0_11, %c0_12, %c0_13], %8 {strides = array<i32>} : memref<32x16x128xf32, #tpu.memory_space<vmem>>, vector<32x16x128xf32>,
    return
  }
  func.func @transform_0(%arg0: i32) -> (i32, i32, i32) {
    %c0_i32 = arith.constant 0 : i32
    %c0_i32_0 = arith.constant 0 : i32
    %c0_i32_1 = arith.constant 0 : i32
    return %arg0, %c0_i32, %c0_i32_0 : i32, i32, i32
  }
  func.func @transform_1(%arg0: i32) -> (i32, i32, i32) {
    %c0_i32 = arith.constant 0 : i32
    %c0_i32_0 = arith.constant 0 : i32
    %c0_i32_1 = arith.constant 0 : i32
    return %arg0, %c0_i32, %c0_i32_0 : i32, i32, i32
  }
  func.func @transform_2(%arg0: i32) -> (i32, i32, i32) {
    %c0_i32 = arith.constant 0 : i32
    %c0_i32_0 = arith.constant 0 : i32
    %c0_i32_1 = arith.constant 0 : i32
    %c0_i32_2 = arith.constant 0 : i32
    return %c0_i32, %c0_i32_0, %c0_i32_1 : i32, i32, i32
  }
  func.func @transform_3(%arg0: i32) -> (i32, i32, i32) {
    %c0_i32 = arith.constant 0 : i32
    %c0_i32_0 = arith.constant 0 : i32
    %c0_i32_1 = arith.constant 0 : i32
    %c0_i32_2 = arith.constant 0 : i32
    return %c0_i32, %c0_i32_0, %c0_i32_1 : i32, i32, i32
  }
  func.func @transform_4(%arg0: i32) -> (i32, i32, i32) {
    %c0_i32 = arith.constant 0 : i32
    %c0_i32_0 = arith.constant 0 : i32
    %c0_i32_1 = arith.constant 0 : i32
    return %arg0, %c0_i32, %c0_i32_0 : i32, i32, i32
  }
}

module attributes {stable_mosaic.version = 11 : i64} {
  func.func @kernel(%arg0: i32, %arg1: i32, %arg2: memref<1x1x16x128xbf16, #tpu.memory_space<vmem>>, %arg3: memref<1x16x16x128xbf16, #tpu.memory_space<vmem>>, %arg4: memref<1x1x16x128xbf16, #tpu.memory_space<vmem>>, %arg5: memref<1152x128xbf16, #tpu.memory_space<vmem>>, %arg6: memref<1x128xf32, #tpu.memory_space<vmem>>, %arg7: memref<1x128xf32, #tpu.memory_space<vmem>>, %arg8: memref<1x1xf32, #tpu.memory_space<smem>>, %arg9: memref<1x16x16x128xf32, #tpu.memory_space<vmem>>, %arg10: memref<1x1x1x128xf32, #tpu.memory_space<vmem>>, %arg11: memref<1x1x1x128xf32, #tpu.memory_space<vmem>>) attributes {dimension_semantics = [#tpu.dimension_semantics<parallel>, #tpu.dimension_semantics<parallel>], iteration_bounds = array<i64: 2, 1>, scalar_prefetch = 0 : i64, scratch_operands = 0 : i64, tpu.core_type = #tpu.core_type<tc>, window_params = [{transform_indices = @transform_0, window_bounds = array<i64: 1, 1, 16, 128>}, {transform_indices = @transform_1, window_bounds = array<i64: 1, 16, 16, 128>}, {transform_indices = @transform_2, window_bounds = array<i64: 1, 1, 16, 128>}, {pipeline_mode = #tpu.pipeline_mode<synchronous>, transform_indices = @transform_3, window_bounds = array<i64: 1152, 128>}, {pipeline_mode = #tpu.pipeline_mode<synchronous>, transform_indices = @transform_4, window_bounds = array<i64: 1, 128>}, {pipeline_mode = #tpu.pipeline_mode<synchronous>, transform_indices = @transform_5, window_bounds = array<i64: 1, 128>}, {transform_indices = @transform_6, window_bounds = array<i64: 1, 1>}, {transform_indices = @transform_7, window_bounds = array<i64: 1, 16, 16, 128>}, {transform_indices = @transform_8, window_bounds = array<i64: 1, 1, 1, 128>}, {transform_indices = @transform_9, window_bounds = array<i64: 1, 1, 1, 128>}]} {
    %c16_i32 = arith.constant 16 : i32
    %0 = arith.muli %arg1, %c16_i32 : i32
    %c0 = arith.constant 0 : index
    %c0_0 = arith.constant 0 : index
    %c0_1 = arith.constant 0 : index
    %c0_2 = arith.constant 0 : index
    %1 = vector.load %arg2[%c0, %c0_0, %c0_1, %c0_2] : memref<1x1x16x128xbf16, #tpu.memory_space<vmem>>, vector<1x1x16x128xbf16>
    %2 = vector.shape_cast %1 : vector<1x1x16x128xbf16> to vector<1x16x128xbf16>
    %c0_3 = arith.constant 0 : index
    %c0_4 = arith.constant 0 : index
    %c0_5 = arith.constant 0 : index
    %c0_6 = arith.constant 0 : index
    %3 = vector.load %arg3[%c0_3, %c0_4, %c0_5, %c0_6] : memref<1x16x16x128xbf16, #tpu.memory_space<vmem>>, vector<1x16x16x128xbf16>
    %4 = vector.shape_cast %3 : vector<1x16x16x128xbf16> to vector<16x16x128xbf16>
    %c0_7 = arith.constant 0 : index
    %c0_8 = arith.constant 0 : index
    %c0_9 = arith.constant 0 : index
    %c0_10 = arith.constant 0 : index
    %5 = vector.load %arg4[%c0_7, %c0_8, %c0_9, %c0_10] : memref<1x1x16x128xbf16, #tpu.memory_space<vmem>>, vector<1x1x16x128xbf16>
    %6 = vector.shape_cast %5 : vector<1x1x16x128xbf16> to vector<1x16x128xbf16>
    %7 = tpu.concatenate %2, %4, %6 in 0 : vector<1x16x128xbf16>, vector<16x16x128xbf16>, vector<1x16x128xbf16> -> vector<18x16x128xbf16>
    %8 = arith.extf %7 : vector<18x16x128xbf16> to vector<18x16x128xf32>
    %c0_11 = arith.constant 0 : index
    %c0_12 = arith.constant 0 : index
    %9 = vector.load %arg6[%c0_11, %c0_12] : memref<1x128xf32, #tpu.memory_space<vmem>>, vector<1x128xf32>
    %10 = vector.shape_cast %9 : vector<1x128xf32> to vector<1x1x128xf32>
    %11 = vector.broadcast %10 : vector<1x1x128xf32> to vector<18x16x128xf32>
    %12 = arith.mulf %8, %11 : vector<18x16x128xf32>
    %c0_13 = arith.constant 0 : index
    %c0_14 = arith.constant 0 : index
    %13 = vector.load %arg7[%c0_13, %c0_14] : memref<1x128xf32, #tpu.memory_space<vmem>>, vector<1x128xf32>
    %14 = vector.shape_cast %13 : vector<1x128xf32> to vector<1x1x128xf32>
    %15 = vector.broadcast %14 : vector<1x1x128xf32> to vector<18x16x128xf32>
    %16 = arith.addf %12, %15 : vector<18x16x128xf32>
    %cst = arith.constant 0.000000e+00 : f32
    %17 = vector.broadcast %cst : f32 to vector<18x16x128xf32>
    %18 = arith.cmpf ogt, %16, %17 : vector<18x16x128xf32>
    %c0_15 = arith.constant 0 : index
    %c0_16 = arith.constant 0 : index
    %19 = memref.load %arg8[%c0_15, %c0_16] : memref<1x1xf32, #tpu.memory_space<smem>>
    %20 = vector.broadcast %19 : f32 to vector<18x16x128xf32>
    %21 = arith.mulf %20, %16 : vector<18x16x128xf32>
    %22 = arith.select %18, %16, %21 : vector<18x16x128xi1>, vector<18x16x128xf32>
    %23 = tpu.iota {dimensions = array<i32: 0>} : vector<18x16x1xi32>
    %c1_i32 = arith.constant 1 : i32
    %24 = arith.subi %0, %c1_i32 : i32
    %25 = vector.broadcast %24 : i32 to vector<18x16x1xi32>
    %26 = arith.addi %23, %25 : vector<18x16x1xi32>
    %c0_i32 = arith.constant 0 : i32
    %27 = vector.broadcast %c0_i32 : i32 to vector<18x16x1xi32>
    %28 = arith.cmpi sge, %26, %27 : vector<18x16x1xi32>
    %c16_i32_17 = arith.constant 16 : i32
    %29 = vector.broadcast %c16_i32_17 : i32 to vector<18x16x1xi32>
    %30 = arith.cmpi slt, %26, %29 : vector<18x16x1xi32>
    %31 = arith.andi %28, %30 : vector<18x16x1xi1>
    %cst_18 = arith.constant 0.000000e+00 : f32
    %32 = vector.shape_cast %31 : vector<18x16x1xi1> to vector<18x16x1xi1>
    %33 = vector.broadcast %32 : vector<18x16x1xi1> to vector<18x16x128xi1>
    %34 = vector.broadcast %cst_18 : f32 to vector<18x16x128xf32>
    %35 = arith.select %33, %22, %34 : vector<18x16x128xi1>, vector<18x16x128xf32>
    %36 = arith.truncf %35 : vector<18x16x128xf32> to vector<18x16x128xbf16>
    %cst_19 = arith.constant 0.000000e+00 : bf16
    %37 = vector.broadcast %cst_19 : bf16 to vector<18x1x128xbf16>
    %38 = tpu.concatenate %37, %36, %37 in 1 : vector<18x1x128xbf16>, vector<18x16x128xbf16>, vector<18x1x128xbf16> -> vector<18x18x128xbf16>
    %39 = vector.extract_strided_slice %38 {offsets = [0, 0, 0], sizes = [16, 16, 128], strides = [1, 1, 1]} : vector<18x18x128xbf16> to vector<16x16x128xbf16>
    %40 = vector.extract_strided_slice %38 {offsets = [0, 1, 0], sizes = [16, 16, 128], strides = [1, 1, 1]} : vector<18x18x128xbf16> to vector<16x16x128xbf16>
    %41 = vector.extract_strided_slice %38 {offsets = [0, 2, 0], sizes = [16, 16, 128], strides = [1, 1, 1]} : vector<18x18x128xbf16> to vector<16x16x128xbf16>
    %42 = vector.extract_strided_slice %38 {offsets = [1, 0, 0], sizes = [16, 16, 128], strides = [1, 1, 1]} : vector<18x18x128xbf16> to vector<16x16x128xbf16>
    %43 = vector.extract_strided_slice %38 {offsets = [1, 1, 0], sizes = [16, 16, 128], strides = [1, 1, 1]} : vector<18x18x128xbf16> to vector<16x16x128xbf16>
    %44 = vector.extract_strided_slice %38 {offsets = [1, 2, 0], sizes = [16, 16, 128], strides = [1, 1, 1]} : vector<18x18x128xbf16> to vector<16x16x128xbf16>
    %45 = vector.extract_strided_slice %38 {offsets = [2, 0, 0], sizes = [16, 16, 128], strides = [1, 1, 1]} : vector<18x18x128xbf16> to vector<16x16x128xbf16>
    %46 = vector.extract_strided_slice %38 {offsets = [2, 1, 0], sizes = [16, 16, 128], strides = [1, 1, 1]} : vector<18x18x128xbf16> to vector<16x16x128xbf16>
    %47 = vector.extract_strided_slice %38 {offsets = [2, 2, 0], sizes = [16, 16, 128], strides = [1, 1, 1]} : vector<18x18x128xbf16> to vector<16x16x128xbf16>
    %48 = tpu.concatenate %39, %40, %41, %42, %43, %44, %45, %46, %47 in 2 : vector<16x16x128xbf16>, vector<16x16x128xbf16>, vector<16x16x128xbf16>, vector<16x16x128xbf16>, vector<16x16x128xbf16>, vector<16x16x128xbf16>, vector<16x16x128xbf16>, vector<16x16x128xbf16>, vector<16x16x128xbf16> -> vector<16x16x1152xbf16>
    %49 = vector.shape_cast %48 : vector<16x16x1152xbf16> to vector<256x1152xbf16>
    %c0_20 = arith.constant 0 : index
    %c0_21 = arith.constant 0 : index
    %50 = vector.load %arg5[%c0_20, %c0_21] : memref<1152x128xbf16, #tpu.memory_space<vmem>>, vector<1152x128xbf16>
    %cst_22 = arith.constant dense<0.000000e+00> : vector<256x128xf32>
    %51 = tpu.matmul %49, %50, %cst_22 {dimension_numbers = #tpu.dot_dimension_numbers<[1], [0], [0], [1], [0, 0, 1, 1], [], []>} : vector<256x1152xbf16>, vector<1152x128xbf16>, vector<256x128xf32> -> vector<256x128xf32>
    %52 = vector.shape_cast %51 : vector<256x128xf32> to vector<16x16x128xf32>
    %53 = vector.shape_cast %52 : vector<16x16x128xf32> to vector<1x16x16x128xf32>
    %c0_23 = arith.constant 0 : index
    %c0_24 = arith.constant 0 : index
    %c0_25 = arith.constant 0 : index
    %c0_26 = arith.constant 0 : index
    %54 = vector.load %arg9[%c0_23, %c0_24, %c0_25, %c0_26] : memref<1x16x16x128xf32, #tpu.memory_space<vmem>>, vector<1x16x16x128xf32>
    tpu.vector_store %arg9[%c0_23, %c0_24, %c0_25, %c0_26], %53 {strides = array<i32>} : memref<1x16x16x128xf32, #tpu.memory_space<vmem>>, vector<1x16x16x128xf32>,
    %cst_27 = arith.constant dense<0.000000e+00> : vector<128xf32>
    %55 = vector.multi_reduction <add>, %52, %cst_27 [0, 1] : vector<16x16x128xf32> to vector<128xf32>
    %56 = vector.shape_cast %55 : vector<128xf32> to vector<1x1x1x128xf32>
    %c0_28 = arith.constant 0 : index
    %c0_29 = arith.constant 0 : index
    %c0_30 = arith.constant 0 : index
    %c0_31 = arith.constant 0 : index
    %57 = vector.load %arg10[%c0_28, %c0_29, %c0_30, %c0_31] : memref<1x1x1x128xf32, #tpu.memory_space<vmem>>, vector<1x1x1x128xf32>
    tpu.vector_store %arg10[%c0_28, %c0_29, %c0_30, %c0_31], %56 {strides = array<i32>} : memref<1x1x1x128xf32, #tpu.memory_space<vmem>>, vector<1x1x1x128xf32>,
    %58 = arith.mulf %52, %52 : vector<16x16x128xf32>
    %cst_32 = arith.constant dense<0.000000e+00> : vector<128xf32>
    %59 = vector.multi_reduction <add>, %58, %cst_32 [0, 1] : vector<16x16x128xf32> to vector<128xf32>
    %60 = vector.shape_cast %59 : vector<128xf32> to vector<1x1x1x128xf32>
    %c0_33 = arith.constant 0 : index
    %c0_34 = arith.constant 0 : index
    %c0_35 = arith.constant 0 : index
    %c0_36 = arith.constant 0 : index
    %61 = vector.load %arg11[%c0_33, %c0_34, %c0_35, %c0_36] : memref<1x1x1x128xf32, #tpu.memory_space<vmem>>, vector<1x1x1x128xf32>
    tpu.vector_store %arg11[%c0_33, %c0_34, %c0_35, %c0_36], %60 {strides = array<i32>} : memref<1x1x1x128xf32, #tpu.memory_space<vmem>>, vector<1x1x1x128xf32>,
    return
  }
  func.func @transform_0(%arg0: i32, %arg1: i32) -> (i32, i32, i32, i32) {
    %c16_i32 = arith.constant 16 : i32
    %0 = arith.muli %arg1, %c16_i32 : i32
    %c1_i32 = arith.constant 1 : i32
    %1 = arith.subi %0, %c1_i32 : i32
    %c0_i32 = arith.constant 0 : i32
    %2 = arith.maxsi %1, %c0_i32 : i32
    %c0_i32_0 = arith.constant 0 : i32
    %c0_i32_1 = arith.constant 0 : i32
    %c0_i32_2 = arith.constant 0 : i32
    return %arg0, %2, %c0_i32_0, %c0_i32_1 : i32, i32, i32, i32
  }
  func.func @transform_1(%arg0: i32, %arg1: i32) -> (i32, i32, i32, i32) {
    %c0_i32 = arith.constant 0 : i32
    %c0_i32_0 = arith.constant 0 : i32
    %c0_i32_1 = arith.constant 0 : i32
    return %arg0, %arg1, %c0_i32, %c0_i32_0 : i32, i32, i32, i32
  }
  func.func @transform_2(%arg0: i32, %arg1: i32) -> (i32, i32, i32, i32) {
    %c16_i32 = arith.constant 16 : i32
    %0 = arith.muli %arg1, %c16_i32 : i32
    %c16_i32_0 = arith.constant 16 : i32
    %1 = arith.addi %0, %c16_i32_0 : i32
    %c15_i32 = arith.constant 15 : i32
    %2 = arith.minsi %1, %c15_i32 : i32
    %c0_i32 = arith.constant 0 : i32
    %c0_i32_1 = arith.constant 0 : i32
    %c0_i32_2 = arith.constant 0 : i32
    return %arg0, %2, %c0_i32, %c0_i32_1 : i32, i32, i32, i32
  }
  func.func @transform_3(%arg0: i32, %arg1: i32) -> (i32, i32) {
    %c0_i32 = arith.constant 0 : i32
    %c0_i32_0 = arith.constant 0 : i32
    %c0_i32_1 = arith.constant 0 : i32
    return %c0_i32, %c0_i32_0 : i32, i32
  }
  func.func @transform_4(%arg0: i32, %arg1: i32) -> (i32, i32) {
    %c0_i32 = arith.constant 0 : i32
    %c0_i32_0 = arith.constant 0 : i32
    %c0_i32_1 = arith.constant 0 : i32
    return %c0_i32, %c0_i32_0 : i32, i32
  }
  func.func @transform_5(%arg0: i32, %arg1: i32) -> (i32, i32) {
    %c0_i32 = arith.constant 0 : i32
    %c0_i32_0 = arith.constant 0 : i32
    %c0_i32_1 = arith.constant 0 : i32
    return %c0_i32, %c0_i32_0 : i32, i32
  }
  func.func @transform_6(%arg0: i32, %arg1: i32) -> (i32, i32) {
    %c0_i32 = arith.constant 0 : i32
    %c0_i32_0 = arith.constant 0 : i32
    %c0_i32_1 = arith.constant 0 : i32
    return %c0_i32, %c0_i32_0 : i32, i32
  }
  func.func @transform_7(%arg0: i32, %arg1: i32) -> (i32, i32, i32, i32) {
    %c0_i32 = arith.constant 0 : i32
    %c0_i32_0 = arith.constant 0 : i32
    %c0_i32_1 = arith.constant 0 : i32
    return %arg0, %arg1, %c0_i32, %c0_i32_0 : i32, i32, i32, i32
  }
  func.func @transform_8(%arg0: i32, %arg1: i32) -> (i32, i32, i32, i32) {
    %c0_i32 = arith.constant 0 : i32
    %c0_i32_0 = arith.constant 0 : i32
    %c0_i32_1 = arith.constant 0 : i32
    return %arg0, %arg1, %c0_i32, %c0_i32_0 : i32, i32, i32, i32
  }
  func.func @transform_9(%arg0: i32, %arg1: i32) -> (i32, i32, i32, i32) {
    %c0_i32 = arith.constant 0 : i32
    %c0_i32_0 = arith.constant 0 : i32
    %c0_i32_1 = arith.constant 0 : i32
    return %arg0, %arg1, %c0_i32, %c0_i32_0 : i32, i32, i32, i32
  }
}

module attributes {stable_mosaic.version = 11 : i64} {
  func.func @kernel(%arg0: i32, %arg1: i32, %arg2: memref<1x1x16x128xf32, #tpu.memory_space<vmem>>, %arg3: memref<1x16x16x128xf32, #tpu.memory_space<vmem>>, %arg4: memref<1x1x16x128xf32, #tpu.memory_space<vmem>>, %arg5: memref<1152x128xbf16, #tpu.memory_space<vmem>>, %arg6: memref<1x16x16x128xbf16, #tpu.memory_space<vmem>>, %arg7: memref<1x1x1x128xf32, #tpu.memory_space<vmem>>, %arg8: memref<1x1x1x128xf32, #tpu.memory_space<vmem>>) attributes {dimension_semantics = [#tpu.dimension_semantics<parallel>, #tpu.dimension_semantics<parallel>], iteration_bounds = array<i64: 2, 1>, scalar_prefetch = 0 : i64, scratch_operands = 0 : i64, tpu.core_type = #tpu.core_type<tc>, window_params = [{transform_indices = @transform_0, window_bounds = array<i64: 1, 1, 16, 128>}, {transform_indices = @transform_1, window_bounds = array<i64: 1, 16, 16, 128>}, {transform_indices = @transform_2, window_bounds = array<i64: 1, 1, 16, 128>}, {pipeline_mode = #tpu.pipeline_mode<synchronous>, transform_indices = @transform_3, window_bounds = array<i64: 1152, 128>}, {transform_indices = @transform_4, window_bounds = array<i64: 1, 16, 16, 128>}, {transform_indices = @transform_5, window_bounds = array<i64: 1, 1, 1, 128>}, {transform_indices = @transform_6, window_bounds = array<i64: 1, 1, 1, 128>}]} {
    %c16_i32 = arith.constant 16 : i32
    %0 = arith.muli %arg1, %c16_i32 : i32
    %c0 = arith.constant 0 : index
    %c0_0 = arith.constant 0 : index
    %c0_1 = arith.constant 0 : index
    %c0_2 = arith.constant 0 : index
    %1 = vector.load %arg2[%c0, %c0_0, %c0_1, %c0_2] : memref<1x1x16x128xf32, #tpu.memory_space<vmem>>, vector<1x1x16x128xf32>
    %2 = vector.shape_cast %1 : vector<1x1x16x128xf32> to vector<1x16x128xf32>
    %c0_3 = arith.constant 0 : index
    %c0_4 = arith.constant 0 : index
    %c0_5 = arith.constant 0 : index
    %c0_6 = arith.constant 0 : index
    %3 = vector.load %arg3[%c0_3, %c0_4, %c0_5, %c0_6] : memref<1x16x16x128xf32, #tpu.memory_space<vmem>>, vector<1x16x16x128xf32>
    %4 = vector.shape_cast %3 : vector<1x16x16x128xf32> to vector<16x16x128xf32>
    %c0_7 = arith.constant 0 : index
    %c0_8 = arith.constant 0 : index
    %c0_9 = arith.constant 0 : index
    %c0_10 = arith.constant 0 : index
    %5 = vector.load %arg4[%c0_7, %c0_8, %c0_9, %c0_10] : memref<1x1x16x128xf32, #tpu.memory_space<vmem>>, vector<1x1x16x128xf32>
    %6 = vector.shape_cast %5 : vector<1x1x16x128xf32> to vector<1x16x128xf32>
    %7 = tpu.concatenate %2, %4, %6 in 0 : vector<1x16x128xf32>, vector<16x16x128xf32>, vector<1x16x128xf32> -> vector<18x16x128xf32>
    %8 = tpu.iota {dimensions = array<i32: 0>} : vector<18x16x1xi32>
    %c1_i32 = arith.constant 1 : i32
    %9 = arith.subi %0, %c1_i32 : i32
    %10 = vector.broadcast %9 : i32 to vector<18x16x1xi32>
    %11 = arith.addi %8, %10 : vector<18x16x1xi32>
    %c0_i32 = arith.constant 0 : i32
    %12 = vector.broadcast %c0_i32 : i32 to vector<18x16x1xi32>
    %13 = arith.cmpi sge, %11, %12 : vector<18x16x1xi32>
    %c16_i32_11 = arith.constant 16 : i32
    %14 = vector.broadcast %c16_i32_11 : i32 to vector<18x16x1xi32>
    %15 = arith.cmpi slt, %11, %14 : vector<18x16x1xi32>
    %16 = arith.andi %13, %15 : vector<18x16x1xi1>
    %cst = arith.constant 0.000000e+00 : f32
    %17 = vector.shape_cast %16 : vector<18x16x1xi1> to vector<18x16x1xi1>
    %18 = vector.broadcast %17 : vector<18x16x1xi1> to vector<18x16x128xi1>
    %19 = vector.broadcast %cst : f32 to vector<18x16x128xf32>
    %20 = arith.select %18, %7, %19 : vector<18x16x128xi1>, vector<18x16x128xf32>
    %21 = arith.truncf %20 : vector<18x16x128xf32> to vector<18x16x128xbf16>
    %cst_12 = arith.constant 0.000000e+00 : bf16
    %22 = vector.broadcast %cst_12 : bf16 to vector<18x1x128xbf16>
    %23 = tpu.concatenate %22, %21, %22 in 1 : vector<18x1x128xbf16>, vector<18x16x128xbf16>, vector<18x1x128xbf16> -> vector<18x18x128xbf16>
    %24 = vector.extract_strided_slice %23 {offsets = [0, 0, 0], sizes = [16, 16, 128], strides = [1, 1, 1]} : vector<18x18x128xbf16> to vector<16x16x128xbf16>
    %25 = vector.extract_strided_slice %23 {offsets = [0, 1, 0], sizes = [16, 16, 128], strides = [1, 1, 1]} : vector<18x18x128xbf16> to vector<16x16x128xbf16>
    %26 = vector.extract_strided_slice %23 {offsets = [0, 2, 0], sizes = [16, 16, 128], strides = [1, 1, 1]} : vector<18x18x128xbf16> to vector<16x16x128xbf16>
    %27 = vector.extract_strided_slice %23 {offsets = [1, 0, 0], sizes = [16, 16, 128], strides = [1, 1, 1]} : vector<18x18x128xbf16> to vector<16x16x128xbf16>
    %28 = vector.extract_strided_slice %23 {offsets = [1, 1, 0], sizes = [16, 16, 128], strides = [1, 1, 1]} : vector<18x18x128xbf16> to vector<16x16x128xbf16>
    %29 = vector.extract_strided_slice %23 {offsets = [1, 2, 0], sizes = [16, 16, 128], strides = [1, 1, 1]} : vector<18x18x128xbf16> to vector<16x16x128xbf16>
    %30 = vector.extract_strided_slice %23 {offsets = [2, 0, 0], sizes = [16, 16, 128], strides = [1, 1, 1]} : vector<18x18x128xbf16> to vector<16x16x128xbf16>
    %31 = vector.extract_strided_slice %23 {offsets = [2, 1, 0], sizes = [16, 16, 128], strides = [1, 1, 1]} : vector<18x18x128xbf16> to vector<16x16x128xbf16>
    %32 = vector.extract_strided_slice %23 {offsets = [2, 2, 0], sizes = [16, 16, 128], strides = [1, 1, 1]} : vector<18x18x128xbf16> to vector<16x16x128xbf16>
    %33 = tpu.concatenate %24, %25, %26, %27, %28, %29, %30, %31, %32 in 2 : vector<16x16x128xbf16>, vector<16x16x128xbf16>, vector<16x16x128xbf16>, vector<16x16x128xbf16>, vector<16x16x128xbf16>, vector<16x16x128xbf16>, vector<16x16x128xbf16>, vector<16x16x128xbf16>, vector<16x16x128xbf16> -> vector<16x16x1152xbf16>
    %34 = vector.shape_cast %33 : vector<16x16x1152xbf16> to vector<256x1152xbf16>
    %c0_13 = arith.constant 0 : index
    %c0_14 = arith.constant 0 : index
    %35 = vector.load %arg5[%c0_13, %c0_14] : memref<1152x128xbf16, #tpu.memory_space<vmem>>, vector<1152x128xbf16>
    %cst_15 = arith.constant dense<0.000000e+00> : vector<256x128xf32>
    %36 = tpu.matmul %34, %35, %cst_15 {dimension_numbers = #tpu.dot_dimension_numbers<[1], [0], [0], [1], [0, 0, 1, 1], [], []>} : vector<256x1152xbf16>, vector<1152x128xbf16>, vector<256x128xf32> -> vector<256x128xf32>
    %37 = vector.shape_cast %36 : vector<256x128xf32> to vector<16x16x128xf32>
    %38 = vector.shape_cast %37 : vector<16x16x128xf32> to vector<1x16x16x128xf32>
    %39 = arith.truncf %38 : vector<1x16x16x128xf32> to vector<1x16x16x128xbf16>
    %c0_16 = arith.constant 0 : index
    %c0_17 = arith.constant 0 : index
    %c0_18 = arith.constant 0 : index
    %c0_19 = arith.constant 0 : index
    %40 = vector.load %arg6[%c0_16, %c0_17, %c0_18, %c0_19] : memref<1x16x16x128xbf16, #tpu.memory_space<vmem>>, vector<1x16x16x128xbf16>
    tpu.vector_store %arg6[%c0_16, %c0_17, %c0_18, %c0_19], %39 {strides = array<i32>} : memref<1x16x16x128xbf16, #tpu.memory_space<vmem>>, vector<1x16x16x128xbf16>,
    %cst_20 = arith.constant dense<0.000000e+00> : vector<128xf32>
    %41 = vector.multi_reduction <add>, %37, %cst_20 [0, 1] : vector<16x16x128xf32> to vector<128xf32>
    %42 = vector.shape_cast %41 : vector<128xf32> to vector<1x1x1x128xf32>
    %c0_21 = arith.constant 0 : index
    %c0_22 = arith.constant 0 : index
    %c0_23 = arith.constant 0 : index
    %c0_24 = arith.constant 0 : index
    %43 = vector.load %arg7[%c0_21, %c0_22, %c0_23, %c0_24] : memref<1x1x1x128xf32, #tpu.memory_space<vmem>>, vector<1x1x1x128xf32>
    tpu.vector_store %arg7[%c0_21, %c0_22, %c0_23, %c0_24], %42 {strides = array<i32>} : memref<1x1x1x128xf32, #tpu.memory_space<vmem>>, vector<1x1x1x128xf32>,
    %44 = arith.mulf %37, %37 : vector<16x16x128xf32>
    %cst_25 = arith.constant dense<0.000000e+00> : vector<128xf32>
    %45 = vector.multi_reduction <add>, %44, %cst_25 [0, 1] : vector<16x16x128xf32> to vector<128xf32>
    %46 = vector.shape_cast %45 : vector<128xf32> to vector<1x1x1x128xf32>
    %c0_26 = arith.constant 0 : index
    %c0_27 = arith.constant 0 : index
    %c0_28 = arith.constant 0 : index
    %c0_29 = arith.constant 0 : index
    %47 = vector.load %arg8[%c0_26, %c0_27, %c0_28, %c0_29] : memref<1x1x1x128xf32, #tpu.memory_space<vmem>>, vector<1x1x1x128xf32>
    tpu.vector_store %arg8[%c0_26, %c0_27, %c0_28, %c0_29], %46 {strides = array<i32>} : memref<1x1x1x128xf32, #tpu.memory_space<vmem>>, vector<1x1x1x128xf32>,
    return
  }
  func.func @transform_0(%arg0: i32, %arg1: i32) -> (i32, i32, i32, i32) {
    %c16_i32 = arith.constant 16 : i32
    %0 = arith.muli %arg1, %c16_i32 : i32
    %c1_i32 = arith.constant 1 : i32
    %1 = arith.subi %0, %c1_i32 : i32
    %c0_i32 = arith.constant 0 : i32
    %2 = arith.maxsi %1, %c0_i32 : i32
    %c0_i32_0 = arith.constant 0 : i32
    %c0_i32_1 = arith.constant 0 : i32
    %c0_i32_2 = arith.constant 0 : i32
    return %arg0, %2, %c0_i32_0, %c0_i32_1 : i32, i32, i32, i32
  }
  func.func @transform_1(%arg0: i32, %arg1: i32) -> (i32, i32, i32, i32) {
    %c0_i32 = arith.constant 0 : i32
    %c0_i32_0 = arith.constant 0 : i32
    %c0_i32_1 = arith.constant 0 : i32
    return %arg0, %arg1, %c0_i32, %c0_i32_0 : i32, i32, i32, i32
  }
  func.func @transform_2(%arg0: i32, %arg1: i32) -> (i32, i32, i32, i32) {
    %c16_i32 = arith.constant 16 : i32
    %0 = arith.muli %arg1, %c16_i32 : i32
    %c16_i32_0 = arith.constant 16 : i32
    %1 = arith.addi %0, %c16_i32_0 : i32
    %c15_i32 = arith.constant 15 : i32
    %2 = arith.minsi %1, %c15_i32 : i32
    %c0_i32 = arith.constant 0 : i32
    %c0_i32_1 = arith.constant 0 : i32
    %c0_i32_2 = arith.constant 0 : i32
    return %arg0, %2, %c0_i32, %c0_i32_1 : i32, i32, i32, i32
  }
  func.func @transform_3(%arg0: i32, %arg1: i32) -> (i32, i32) {
    %c0_i32 = arith.constant 0 : i32
    %c0_i32_0 = arith.constant 0 : i32
    %c0_i32_1 = arith.constant 0 : i32
    return %c0_i32, %c0_i32_0 : i32, i32
  }
  func.func @transform_4(%arg0: i32, %arg1: i32) -> (i32, i32, i32, i32) {
    %c0_i32 = arith.constant 0 : i32
    %c0_i32_0 = arith.constant 0 : i32
    %c0_i32_1 = arith.constant 0 : i32
    return %arg0, %arg1, %c0_i32, %c0_i32_0 : i32, i32, i32, i32
  }
  func.func @transform_5(%arg0: i32, %arg1: i32) -> (i32, i32, i32, i32) {
    %c0_i32 = arith.constant 0 : i32
    %c0_i32_0 = arith.constant 0 : i32
    %c0_i32_1 = arith.constant 0 : i32
    return %arg0, %arg1, %c0_i32, %c0_i32_0 : i32, i32, i32, i32
  }
  func.func @transform_6(%arg0: i32, %arg1: i32) -> (i32, i32, i32, i32) {
    %c0_i32 = arith.constant 0 : i32
    %c0_i32_0 = arith.constant 0 : i32
    %c0_i32_1 = arith.constant 0 : i32
    return %arg0, %arg1, %c0_i32, %c0_i32_0 : i32, i32, i32, i32
  }
}

</mosaic_0001>

<llo_original>
// kernel: residual_block_forward.5
$region0: #{residual_block_forward.5}
  #allocation0 [shape = 'u32[]', space=smem, size = 0x4, offset = 0x4, fixed_abs, tag = 'smem constant byte address 0x4 - core index']
  #allocation1 [shape = 'u32[144,128]{1,0:T(1,128)}', space=vmem, size = 0x12000, scoped, tag = 'internal scratch']
  %s0 = inlined_call_operand.vmem [shape: f32[32,16,128], index: 0, kind: input, shape index: {}]
  %s1 = inlined_call_operand.vmem [shape: f32[32,16,128], index: 1, kind: input, shape index: {}]
  %s2 = inlined_call_operand.vmem [shape: f32[1,1,128], index: 2, kind: input, shape index: {}]
  %s3 = inlined_call_operand.vmem [shape: f32[1,1,128], index: 3, kind: input, shape index: {}]
  %s4 = inlined_call_operand.vmem [shape: f32[32,16,128], index: 4, kind: output, shape index: {}]
  %s5 = sld [smem:[#allocation0]]
  $region26: #{residual_block_forward.5} parent=0
    _
  %s7 = ssub.s32 1, %s5
  %s8 = scalar_select 0, %s7, %s5
  // Predicated region
  $region2: #{residual_block_forward.5} parent=0 // pred_check
    _
  $region3: #{residual_block_forward.5} parent=0 // pred_check_branch
    %10 = sbr.rel (0) target = $region5
  $region4: #{residual_block_forward.5} parent=0 // pred_region
    _
  $region5: #{residual_block_forward.5} parent=0 // pred_fallthru
    _
  // Predicated region
  $region6: #{residual_block_forward.5} parent=0 // pred_check
    _
  $region7: #{residual_block_forward.5} parent=0 // pred_check_branch
    %12 = sbr.rel (0) target = $region9
  $region8: #{residual_block_forward.5} parent=0 // pred_region
    _
  $region9: #{residual_block_forward.5} parent=0 // pred_fallthru
    _
  // Predicated region
  $region10: #{residual_block_forward.5} parent=0 // pred_check
    _
  $region11: #{residual_block_forward.5} parent=0 // pred_check_branch
    %14 = sbr.rel (0) target = $region13
  $region12: #{residual_block_forward.5} parent=0 // pred_region
    _
  $region13: #{residual_block_forward.5} parent=0 // pred_fallthru
    _
  // Predicated region
  $region14: #{residual_block_forward.5} parent=0 // pred_check
    _
  $region15: #{residual_block_forward.5} parent=0 // pred_check_branch
    %16 = sbr.rel (0) target = $region17
  $region16: #{residual_block_forward.5} parent=0 // pred_region
    _
  $region17: #{residual_block_forward.5} parent=0 // pred_fallthru
    _
  %v17 = vld [vmem:[%s0] sm:$0xff]
  %v18 = vld [vmem:[%s0 + $0x8] sm:$0xff]
  %v19 = vld [vmem:[%s0 + $0x10] sm:$0xff]
  %v20 = vld [vmem:[%s0 + $0x18] sm:$0xff]
  %v21 = vld [vmem:[%s0 + $0x20] sm:$0xff]
  %v22 = vld [vmem:[%s0 + $0x28] sm:$0xff]
  %v23 = vld [vmem:[%s0 + $0x30] sm:$0xff]
  %v24 = vld [vmem:[%s0 + $0x38] sm:$0xff]
  %v25 = vld [vmem:[%s0 + $0x40] sm:$0xff]
  %v26 = vld [vmem:[%s0 + $0x48] sm:$0xff]
  %v27 = vld [vmem:[%s0 + $0x50] sm:$0xff]
  %v28 = vld [vmem:[%s0 + $0x58] sm:$0xff]
  %v29 = vld [vmem:[%s0 + $0x60] sm:$0xff]
  %v30 = vld [vmem:[%s0 + $0x68] sm:$0xff]
  %v31 = vld [vmem:[%s0 + $0x70] sm:$0xff]
  %v32 = vld [vmem:[%s0 + $0x78] sm:$0xff]
  %v33 = vld [vmem:[%s0 + $0x80] sm:$0xff]
  %v34 = vld [vmem:[%s0 + $0x88] sm:$0xff]
  %v35 = vld [vmem:[%s0 + $0x90] sm:$0xff]
  %v36 = vld [vmem:[%s0 + $0x98] sm:$0xff]
  %v37 = vld [vmem:[%s0 + $0xa0] sm:$0xff]
  %v38 = vld [vmem:[%s0 + $0xa8] sm:$0xff]
  %v39 = vld [vmem:[%s0 + $0xb0] sm:$0xff]
  %v40 = vld [vmem:[%s0 + $0xb8] sm:$0xff]
  %v41 = vld [vmem:[%s0 + $0xc0] sm:$0xff]
  %v42 = vld [vmem:[%s0 + $0xc8] sm:$0xff]
  %v43 = vld [vmem:[%s0 + $0xd0] sm:$0xff]
  %v44 = vld [vmem:[%s0 + $0xd8] sm:$0xff]
  %v45 = vld [vmem:[%s0 + $0xe0] sm:$0xff]
  %v46 = vld [vmem:[%s0 + $0xe8] sm:$0xff]
  %v47 = vld [vmem:[%s0 + $0xf0] sm:$0xff]
  %v48 = vld [vmem:[%s0 + $0xf8] sm:$0xff]
  %v49 = vld [vmem:[%s0 + $0x100] sm:$0xff]
  %v50 = vld [vmem:[%s0 + $0x108] sm:$0xff]
  %v51 = vld [vmem:[%s0 + $0x110] sm:$0xff]
  %v52 = vld [vmem:[%s0 + $0x118] sm:$0xff]
  %v53 = vld [vmem:[%s0 + $0x120] sm:$0xff]
  %v54 = vld [vmem:[%s0 + $0x128] sm:$0xff]
  %v55 = vld [vmem:[%s0 + $0x130] sm:$0xff]
  %v56 = vld [vmem:[%s0 + $0x138] sm:$0xff]
  %v57 = vld [vmem:[%s0 + $0x140] sm:$0xff]
  %v58 = vld [vmem:[%s0 + $0x148] sm:$0xff]
  %v59 = vld [vmem:[%s0 + $0x150] sm:$0xff]
  %v60 = vld [vmem:[%s0 + $0x158] sm:$0xff]
  %v61 = vld [vmem:[%s0 + $0x160] sm:$0xff]
  %v62 = vld [vmem:[%s0 + $0x168] sm:$0xff]
  %v63 = vld [vmem:[%s0 + $0x170] sm:$0xff]
  %v64 = vld [vmem:[%s0 + $0x178] sm:$0xff]
  %v65 = vld [vmem:[%s0 + $0x180] sm:$0xff]
  %v66 = vld [vmem:[%s0 + $0x188] sm:$0xff]
  %v67 = vld [vmem:[%s0 + $0x190] sm:$0xff]
  %v68 = vld [vmem:[%s0 + $0x198] sm:$0xff]
  %v69 = vld [vmem:[%s0 + $0x1a0] sm:$0xff]
  %v70 = vld [vmem:[%s0 + $0x1a8] sm:$0xff]
  %v71 = vld [vmem:[%s0 + $0x1b0] sm:$0xff]
  %v72 = vld [vmem:[%s0 + $0x1b8] sm:$0xff]
  %v73 = vld [vmem:[%s0 + $0x1c0] sm:$0xff]
  %v74 = vld [vmem:[%s0 + $0x1c8] sm:$0xff]
  %v75 = vld [vmem:[%s0 + $0x1d0] sm:$0xff]
  %v76 = vld [vmem:[%s0 + $0x1d8] sm:$0xff]
  %v77 = vld [vmem:[%s0 + $0x1e0] sm:$0xff]
  %v78 = vld [vmem:[%s0 + $0x1e8] sm:$0xff]
  %v79 = vld [vmem:[%s0 + $0x1f0] sm:$0xff]
  %v80 = vld [vmem:[%s0 + $0x1f8] sm:$0xff]
  %v81 = vld [vmem:[%s2] sm:$0x1]
  %v83 = vlaneseq
  %v84 = vshrl.u32 %v83, 7
  %v85 = vsub.s32 0, %v84
  %v86 = vrot.slane %v81, %v85
  %v88 = vmul.f32 %v17, %v86
  %v89 = vmul.f32 %v18, %v86
  %v90 = vmul.f32 %v19, %v86
  %v91 = vmul.f32 %v20, %v86
  %v92 = vmul.f32 %v21, %v86
  %v93 = vmul.f32 %v22, %v86
  %v94 = vmul.f32 %v23, %v86
  %v95 = vmul.f32 %v24, %v86
  %v96 = vmul.f32 %v25, %v86
  %v97 = vmul.f32 %v26, %v86
  %v98 = vmul.f32 %v27, %v86
  %v99 = vmul.f32 %v28, %v86
  %v100 = vmul.f32 %v29, %v86
  %v101 = vmul.f32 %v30, %v86
  %v102 = vmul.f32 %v31, %v86
  %v103 = vmul.f32 %v32, %v86
  %v104 = vmul.f32 %v33, %v86
  %v105 = vmul.f32 %v34, %v86
  %v106 = vmul.f32 %v35, %v86
  %v107 = vmul.f32 %v36, %v86
  %v108 = vmul.f32 %v37, %v86
  %v109 = vmul.f32 %v38, %v86
  %v110 = vmul.f32 %v39, %v86
  %v111 = vmul.f32 %v40, %v86
  %v112 = vmul.f32 %v41, %v86
  %v113 = vmul.f32 %v42, %v86
  %v114 = vmul.f32 %v43, %v86
  %v115 = vmul.f32 %v44, %v86
  %v116 = vmul.f32 %v45, %v86
  %v117 = vmul.f32 %v46, %v86
  %v118 = vmul.f32 %v47, %v86
  %v119 = vmul.f32 %v48, %v86
  %v120 = vmul.f32 %v49, %v86
  %v121 = vmul.f32 %v50, %v86
  %v122 = vmul.f32 %v51, %v86
  %v123 = vmul.f32 %v52, %v86
  %v124 = vmul.f32 %v53, %v86
  %v125 = vmul.f32 %v54, %v86
  %v126 = vmul.f32 %v55, %v86
  %v127 = vmul.f32 %v56, %v86
  %v128 = vmul.f32 %v57, %v86
  %v129 = vmul.f32 %v58, %v86
  %v130 = vmul.f32 %v59, %v86
  %v131 = vmul.f32 %v60, %v86
  %v132 = vmul.f32 %v61, %v86
  %v133 = vmul.f32 %v62, %v86
  %v134 = vmul.f32 %v63, %v86
  %v135 = vmul.f32 %v64, %v86
  %v136 = vmul.f32 %v65, %v86
  %v137 = vmul.f32 %v66, %v86
  %v138 = vmul.f32 %v67, %v86
  %v139 = vmul.f32 %v68, %v86
  %v140 = vmul.f32 %v69, %v86
  %v141 = vmul.f32 %v70, %v86
  %v142 = vmul.f32 %v71, %v86
  %v143 = vmul.f32 %v72, %v86
  %v144 = vmul.f32 %v73, %v86
  %v145 = vmul.f32 %v74, %v86
  %v146 = vmul.f32 %v75, %v86
  %v147 = vmul.f32 %v76, %v86
  %v148 = vmul.f32 %v77, %v86
  %v149 = vmul.f32 %v78, %v86
  %v150 = vmul.f32 %v79, %v86
  %v151 = vmul.f32 %v80, %v86
  %v152 = vld [vmem:[%s3] sm:$0x1]
  %v154 = vlaneseq
  %v155 = vshrl.u32 %v154, 7
  %v156 = vsub.s32 0, %v155
  %v157 = vrot.slane %v152, %v156
  %v159 = vadd.f32 %v88, %v157
  %v160 = vadd.f32 %v89, %v157
  %v161 = vadd.f32 %v90, %v157
  %v162 = vadd.f32 %v91, %v157
  %v163 = vadd.f32 %v92, %v157
  %v164 = vadd.f32 %v93, %v157
  %v165 = vadd.f32 %v94, %v157
  %v166 = vadd.f32 %v95, %v157
  %v167 = vadd.f32 %v96, %v157
  %v168 = vadd.f32 %v97, %v157
  %v169 = vadd.f32 %v98, %v157
  %v170 = vadd.f32 %v99, %v157
  %v171 = vadd.f32 %v100, %v157
  %v172 = vadd.f32 %v101, %v157
  %v173 = vadd.f32 %v102, %v157
  %v174 = vadd.f32 %v103, %v157
  %v175 = vadd.f32 %v104, %v157
  %v176 = vadd.f32 %v105, %v157
  %v177 = vadd.f32 %v106, %v157
  %v178 = vadd.f32 %v107, %v157
  %v179 = vadd.f32 %v108, %v157
  %v180 = vadd.f32 %v109, %v157
  %v181 = vadd.f32 %v110, %v157
  %v182 = vadd.f32 %v111, %v157
  %v183 = vadd.f32 %v112, %v157
  %v184 = vadd.f32 %v113, %v157
  %v185 = vadd.f32 %v114, %v157
  %v186 = vadd.f32 %v115, %v157
  %v187 = vadd.f32 %v116, %v157
  %v188 = vadd.f32 %v117, %v157
  %v189 = vadd.f32 %v118, %v157
  %v190 = vadd.f32 %v119, %v157
  %v191 = vadd.f32 %v120, %v157
  %v192 = vadd.f32 %v121, %v157
  %v193 = vadd.f32 %v122, %v157
  %v194 = vadd.f32 %v123, %v157
  %v195 = vadd.f32 %v124, %v157
  %v196 = vadd.f32 %v125, %v157
  %v197 = vadd.f32 %v126, %v157
  %v198 = vadd.f32 %v127, %v157
  %v199 = vadd.f32 %v128, %v157
  %v200 = vadd.f32 %v129, %v157
  %v201 = vadd.f32 %v130, %v157
  %v202 = vadd.f32 %v131, %v157
  %v203 = vadd.f32 %v132, %v157
  %v204 = vadd.f32 %v133, %v157
  %v205 = vadd.f32 %v134, %v157
  %v206 = vadd.f32 %v135, %v157
  %v207 = vadd.f32 %v136, %v157
  %v208 = vadd.f32 %v137, %v157
  %v209 = vadd.f32 %v138, %v157
  %v210 = vadd.f32 %v139, %v157
  %v211 = vadd.f32 %v140, %v157
  %v212 = vadd.f32 %v141, %v157
  %v213 = vadd.f32 %v142, %v157
  %v214 = vadd.f32 %v143, %v157
  %v215 = vadd.f32 %v144, %v157
  %v216 = vadd.f32 %v145, %v157
  %v217 = vadd.f32 %v146, %v157
  %v218 = vadd.f32 %v147, %v157
  %v219 = vadd.f32 %v148, %v157
  %v220 = vadd.f32 %v149, %v157
  %v221 = vadd.f32 %v150, %v157
  %v222 = vadd.f32 %v151, %v157
  %v223 = vld [vmem:[%s1] sm:$0xff]
  %v224 = vld [vmem:[%s1 + $0x8] sm:$0xff]
  %v225 = vld [vmem:[%s1 + $0x10] sm:$0xff]
  %v226 = vld [vmem:[%s1 + $0x18] sm:$0xff]
  %v227 = vld [vmem:[%s1 + $0x20] sm:$0xff]
  %v228 = vld [vmem:[%s1 + $0x28] sm:$0xff]
  %v229 = vld [vmem:[%s1 + $0x30] sm:$0xff]
  %v230 = vld [vmem:[%s1 + $0x38] sm:$0xff]
  %v231 = vld [vmem:[%s1 + $0x40] sm:$0xff]
  %v232 = vld [vmem:[%s1 + $0x48] sm:$0xff]
  %v233 = vld [vmem:[%s1 + $0x50] sm:$0xff]
  %v234 = vld [vmem:[%s1 + $0x58] sm:$0xff]
  %v235 = vld [vmem:[%s1 + $0x60] sm:$0xff]
  %v236 = vld [vmem:[%s1 + $0x68] sm:$0xff]
  %v237 = vld [vmem:[%s1 + $0x70] sm:$0xff]
  %v238 = vld [vmem:[%s1 + $0x78] sm:$0xff]
  %v239 = vld [vmem:[%s1 + $0x80] sm:$0xff]
  %v240 = vld [vmem:[%s1 + $0x88] sm:$0xff]
  %v241 = vld [vmem:[%s1 + $0x90] sm:$0xff]
  %v242 = vld [vmem:[%s1 + $0x98] sm:$0xff]
  %v243 = vld [vmem:[%s1 + $0xa0] sm:$0xff]
  %v244 = vld [vmem:[%s1 + $0xa8] sm:$0xff]
  %v245 = vld [vmem:[%s1 + $0xb0] sm:$0xff]
  %v246 = vld [vmem:[%s1 + $0xb8] sm:$0xff]
  %v247 = vld [vmem:[%s1 + $0xc0] sm:$0xff]
  %v248 = vld [vmem:[%s1 + $0xc8] sm:$0xff]
  %v249 = vld [vmem:[%s1 + $0xd0] sm:$0xff]
  %v250 = vld [vmem:[%s1 + $0xd8] sm:$0xff]
  %v251 = vld [vmem:[%s1 + $0xe0] sm:$0xff]
  %v252 = vld [vmem:[%s1 + $0xe8] sm:$0xff]
  %v253 = vld [vmem:[%s1 + $0xf0] sm:$0xff]
  %v254 = vld [vmem:[%s1 + $0xf8] sm:$0xff]
  %v255 = vld [vmem:[%s1 + $0x100] sm:$0xff]
  %v256 = vld [vmem:[%s1 + $0x108] sm:$0xff]
  %v257 = vld [vmem:[%s1 + $0x110] sm:$0xff]
  %v258 = vld [vmem:[%s1 + $0x118] sm:$0xff]
  %v259 = vld [vmem:[%s1 + $0x120] sm:$0xff]
  %v260 = vld [vmem:[%s1 + $0x128] sm:$0xff]
  %v261 = vld [vmem:[%s1 + $0x130] sm:$0xff]
  %v262 = vld [vmem:[%s1 + $0x138] sm:$0xff]
  %v263 = vld [vmem:[%s1 + $0x140] sm:$0xff]
  %v264 = vld [vmem:[%s1 + $0x148] sm:$0xff]
  %v265 = vld [vmem:[%s1 + $0x150] sm:$0xff]
  %v266 = vld [vmem:[%s1 + $0x158] sm:$0xff]
  %v267 = vld [vmem:[%s1 + $0x160] sm:$0xff]
  %v268 = vld [vmem:[%s1 + $0x168] sm:$0xff]
  %v269 = vld [vmem:[%s1 + $0x170] sm:$0xff]
  %v270 = vld [vmem:[%s1 + $0x178] sm:$0xff]
  %v271 = vld [vmem:[%s1 + $0x180] sm:$0xff]
  %v272 = vld [vmem:[%s1 + $0x188] sm:$0xff]
  %v273 = vld [vmem:[%s1 + $0x190] sm:$0xff]
  %v274 = vld [vmem:[%s1 + $0x198] sm:$0xff]
  %v275 = vld [vmem:[%s1 + $0x1a0] sm:$0xff]
  %v276 = vld [vmem:[%s1 + $0x1a8] sm:$0xff]
  %v277 = vld [vmem:[%s1 + $0x1b0] sm:$0xff]
  %v278 = vld [vmem:[%s1 + $0x1b8] sm:$0xff]
  %v279 = vld [vmem:[%s1 + $0x1c0] sm:$0xff]
  %v280 = vld [vmem:[%s1 + $0x1c8] sm:$0xff]
  %v281 = vld [vmem:[%s1 + $0x1d0] sm:$0xff]
  %v282 = vld [vmem:[%s1 + $0x1d8] sm:$0xff]
  %v283 = vld [vmem:[%s1 + $0x1e0] sm:$0xff]
  %v284 = vld [vmem:[%s1 + $0x1e8] sm:$0xff]
  %v285 = vld [vmem:[%s1 + $0x1f0] sm:$0xff]
  %v286 = vld [vmem:[%s1 + $0x1f8] sm:$0xff]
  %v287 = vadd.f32 %v159, %v223
  %v288 = vadd.f32 %v160, %v224
  %v289 = vadd.f32 %v161, %v225
  %v290 = vadd.f32 %v162, %v226
  %v291 = vadd.f32 %v163, %v227
  %v292 = vadd.f32 %v164, %v228
  %v293 = vadd.f32 %v165, %v229
  %v294 = vadd.f32 %v166, %v230
  %v295 = vadd.f32 %v167, %v231
  %v296 = vadd.f32 %v168, %v232
  %v297 = vadd.f32 %v169, %v233
  %v298 = vadd.f32 %v170, %v234
  %v299 = vadd.f32 %v171, %v235
  %v300 = vadd.f32 %v172, %v236
  %v301 = vadd.f32 %v173, %v237
  %v302 = vadd.f32 %v174, %v238
  %v303 = vadd.f32 %v175, %v239
  %v304 = vadd.f32 %v176, %v240
  %v305 = vadd.f32 %v177, %v241
  %v306 = vadd.f32 %v178, %v242
  %v307 = vadd.f32 %v179, %v243
  %v308 = vadd.f32 %v180, %v244
  %v309 = vadd.f32 %v181, %v245
  %v310 = vadd.f32 %v182, %v246
  %v311 = vadd.f32 %v183, %v247
  %v312 = vadd.f32 %v184, %v248
  %v313 = vadd.f32 %v185, %v249
  %v314 = vadd.f32 %v186, %v250
  %v315 = vadd.f32 %v187, %v251
  %v316 = vadd.f32 %v188, %v252
  %v317 = vadd.f32 %v189, %v253
  %v318 = vadd.f32 %v190, %v254
  %v319 = vadd.f32 %v191, %v255
  %v320 = vadd.f32 %v192, %v256
  %v321 = vadd.f32 %v193, %v257
  %v322 = vadd.f32 %v194, %v258
  %v323 = vadd.f32 %v195, %v259
  %v324 = vadd.f32 %v196, %v260
  %v325 = vadd.f32 %v197, %v261
  %v326 = vadd.f32 %v198, %v262
  %v327 = vadd.f32 %v199, %v263
  %v328 = vadd.f32 %v200, %v264
  %v329 = vadd.f32 %v201, %v265
  %v330 = vadd.f32 %v202, %v266
  %v331 = vadd.f32 %v203, %v267
  %v332 = vadd.f32 %v204, %v268
  %v333 = vadd.f32 %v205, %v269
  %v334 = vadd.f32 %v206, %v270
  %v335 = vadd.f32 %v207, %v271
  %v336 = vadd.f32 %v208, %v272
  %v337 = vadd.f32 %v209, %v273
  %v338 = vadd.f32 %v210, %v274
  %v339 = vadd.f32 %v211, %v275
  %v340 = vadd.f32 %v212, %v276
  %v341 = vadd.f32 %v213, %v277
  %v342 = vadd.f32 %v214, %v278
  %v343 = vadd.f32 %v215, %v279
  %v344 = vadd.f32 %v216, %v280
  %v345 = vadd.f32 %v217, %v281
  %v346 = vadd.f32 %v218, %v282
  %v347 = vadd.f32 %v219, %v283
  %v348 = vadd.f32 %v220, %v284
  %v349 = vadd.f32 %v221, %v285
  %v350 = vadd.f32 %v222, %v286
  %351 = vst [vmem:[%s4] sm:$0xff] %v287
  %352 = vst [vmem:[%s4 + $0x8] sm:$0xff] %v288
  %353 = vst [vmem:[%s4 + $0x10] sm:$0xff] %v289
  %354 = vst [vmem:[%s4 + $0x18] sm:$0xff] %v290
  %355 = vst [vmem:[%s4 + $0x20] sm:$0xff] %v291
  %356 = vst [vmem:[%s4 + $0x28] sm:$0xff] %v292
  %357 = vst [vmem:[%s4 + $0x30] sm:$0xff] %v293
  %358 = vst [vmem:[%s4 + $0x38] sm:$0xff] %v294
  %359 = vst [vmem:[%s4 + $0x40] sm:$0xff] %v295
  %360 = vst [vmem:[%s4 + $0x48] sm:$0xff] %v296
  %361 = vst [vmem:[%s4 + $0x50] sm:$0xff] %v297
  %362 = vst [vmem:[%s4 + $0x58] sm:$0xff] %v298
  %363 = vst [vmem:[%s4 + $0x60] sm:$0xff] %v299
  %364 = vst [vmem:[%s4 + $0x68] sm:$0xff] %v300
  %365 = vst [vmem:[%s4 + $0x70] sm:$0xff] %v301
  %366 = vst [vmem:[%s4 + $0x78] sm:$0xff] %v302
  %367 = vst [vmem:[%s4 + $0x80] sm:$0xff] %v303
  %368 = vst [vmem:[%s4 + $0x88] sm:$0xff] %v304
  %369 = vst [vmem:[%s4 + $0x90] sm:$0xff] %v305
  %370 = vst [vmem:[%s4 + $0x98] sm:$0xff] %v306
  %371 = vst [vmem:[%s4 + $0xa0] sm:$0xff] %v307
  %372 = vst [vmem:[%s4 + $0xa8] sm:$0xff] %v308
  %373 = vst [vmem:[%s4 + $0xb0] sm:$0xff] %v309
  %374 = vst [vmem:[%s4 + $0xb8] sm:$0xff] %v310
  %375 = vst [vmem:[%s4 + $0xc0] sm:$0xff] %v311
  %376 = vst [vmem:[%s4 + $0xc8] sm:$0xff] %v312
  %377 = vst [vmem:[%s4 + $0xd0] sm:$0xff] %v313
  %378 = vst [vmem:[%s4 + $0xd8] sm:$0xff] %v314
  %379 = vst [vmem:[%s4 + $0xe0] sm:$0xff] %v315
  %380 = vst [vmem:[%s4 + $0xe8] sm:$0xff] %v316
  %381 = vst [vmem:[%s4 + $0xf0] sm:$0xff] %v317
  %382 = vst [vmem:[%s4 + $0xf8] sm:$0xff] %v318
  %383 = vst [vmem:[%s4 + $0x100] sm:$0xff] %v319
  %384 = vst [vmem:[%s4 + $0x108] sm:$0xff] %v320
  %385 = vst [vmem:[%s4 + $0x110] sm:$0xff] %v321
  %386 = vst [vmem:[%s4 + $0x118] sm:$0xff] %v322
  %387 = vst [vmem:[%s4 + $0x120] sm:$0xff] %v323
  %388 = vst [vmem:[%s4 + $0x128] sm:$0xff] %v324
  %389 = vst [vmem:[%s4 + $0x130] sm:$0xff] %v325
  %390 = vst [vmem:[%s4 + $0x138] sm:$0xff] %v326
  %391 = vst [vmem:[%s4 + $0x140] sm:$0xff] %v327
  %392 = vst [vmem:[%s4 + $0x148] sm:$0xff] %v328
  %393 = vst [vmem:[%s4 + $0x150] sm:$0xff] %v329
  %394 = vst [vmem:[%s4 + $0x158] sm:$0xff] %v330
  %395 = vst [vmem:[%s4 + $0x160] sm:$0xff] %v331
  %396 = vst [vmem:[%s4 + $0x168] sm:$0xff] %v332
  %397 = vst [vmem:[%s4 + $0x170] sm:$0xff] %v333
  %398 = vst [vmem:[%s4 + $0x178] sm:$0xff] %v334
  %399 = vst [vmem:[%s4 + $0x180] sm:$0xff] %v335
  %400 = vst [vmem:[%s4 + $0x188] sm:$0xff] %v336
  %401 = vst [vmem:[%s4 + $0x190] sm:$0xff] %v337
  %402 = vst [vmem:[%s4 + $0x198] sm:$0xff] %v338
  %403 = vst [vmem:[%s4 + $0x1a0] sm:$0xff] %v339
  %404 = vst [vmem:[%s4 + $0x1a8] sm:$0xff] %v340
  %405 = vst [vmem:[%s4 + $0x1b0] sm:$0xff] %v341
  %406 = vst [vmem:[%s4 + $0x1b8] sm:$0xff] %v342
  %407 = vst [vmem:[%s4 + $0x1c0] sm:$0xff] %v343
  %408 = vst [vmem:[%s4 + $0x1c8] sm:$0xff] %v344
  %409 = vst [vmem:[%s4 + $0x1d0] sm:$0xff] %v345
  %410 = vst [vmem:[%s4 + $0x1d8] sm:$0xff] %v346
  %411 = vst [vmem:[%s4 + $0x1e0] sm:$0xff] %v347
  %412 = vst [vmem:[%s4 + $0x1e8] sm:$0xff] %v348
  %413 = vst [vmem:[%s4 + $0x1f0] sm:$0xff] %v349
  %414 = vst [vmem:[%s4 + $0x1f8] sm:$0xff] %v350
  // Predicated region
  $region18: #{residual_block_forward.5} parent=0 // pred_check
    _
  $region19: #{residual_block_forward.5} parent=0 // pred_check_branch
    %416 = sbr.rel (0) target = $region21
  $region20: #{residual_block_forward.5} parent=0 // pred_region
    _
  $region21: #{residual_block_forward.5} parent=0 // pred_fallthru
    _
  // Predicated region
  $region22: #{residual_block_forward.5} parent=0 // pred_check
    _
  $region23: #{residual_block_forward.5} parent=0 // pred_check_branch
    %418 = sbr.rel (0) target = $region25
  $region24: #{residual_block_forward.5} parent=0 // pred_region
    _
  $region25: #{residual_block_forward.5} parent=0 // pred_fallthru
    _

// kernel: residual_block_forward.3
$region0: #{residual_block_forward.3}
  #allocation0 [shape = 'u32[]', space=smem, size = 0x4, offset = 0x4, fixed_abs, tag = 'smem constant byte address 0x4 - core index']
  #allocation1 [shape = 'u32[144,128]{1,0:T(1,128)}', space=vmem, size = 0x12000, scoped, tag = 'internal scratch']
  %s0 = inlined_call_operand.vmem [shape: f32[2,16,16,128], index: 0, kind: input, shape index: {}, may-alias: {0,1,2}]
  %s1 = inlined_call_operand.vmem [shape: f32[2,16,16,128], index: 1, kind: input, shape index: {}, may-alias: {0,1,2}]
  %s2 = inlined_call_operand.vmem [shape: f32[2,16,16,128], index: 2, kind: input, shape index: {}, may-alias: {0,1,2}]
  %s3 = inlined_call_operand.vmem [shape: bf16[1152,128], index: 3, kind: input, shape index: {}]
  %s4 = inlined_call_operand.vmem [shape: bf16[2,16,16,128], index: 4, kind: output, shape index: {0}]
  %s5 = inlined_call_operand.vmem [shape: f32[2,1,1,128], index: 5, kind: output, shape index: {1}]
  %s6 = inlined_call_operand.vmem [shape: f32[2,1,1,128], index: 6, kind: output, shape index: {2}]
  %7 = xla_tuple %s4, %s5, %s6
  %s8 = sld [smem:[#allocation0]]
  $region65: #{residual_block_forward.3} parent=0
    _
  %s10 = ssub.s32 1, %s8
  %s11 = scalar_select 0, %s10, %s8
  loop: start=0, step=1, limit=4
  $region2: #{residual_block_forward.3} parent=0 // loop_pre_header
    _
  $region3: #{residual_block_forward.3} parent=0 // loop_header
    %s13 = sphi 0, %s17
    %p14 = scmp.ge.s32.totalorder %s13, 4
    %s20 = sphi 0, %s32
    %s21 = sphi 0, %s28
    %s22 = sphi 0, %s20
    %s23 = sphi 0, %s21
    %s24 = sphi 0, %s22
    %s25 = sphi 0, %s23
    %s45 = sphi 0, %s47
    %s48 = sphi 0, %s45
    %s49 = sphi 0, %s48
    %s65 = sphi 0, %s49
    %s73 = sphi 0, %s75
    %s76 = sphi 0, %s73
    %s77 = sphi 0, %s76
    %s93 = sphi 0, %s77
    %s109 = sphi 0, %s111
    %s112 = sphi 0, %s109
    %s113 = sphi 0, %s112
    %s129 = sphi 0, %s113
    %s133 = sphi 0, %s133
    %s135 = sphi 0, %s133
    %s136 = sphi 0, %s135
    %s150 = sphi 0, %s136
    %s158 = sphi 0, %s160
    %s161 = sphi 0, %s158
    %s162 = sphi 0, %s161
    %s178 = sphi 0, %s162
    %s186 = sphi 0, %s188
    %s189 = sphi 0, %s186
    %s190 = sphi 0, %s189
    %s206 = sphi 0, %s190
    %s214 = sphi 0, %s216
    %s217 = sphi 0, %s214
    %s218 = sphi 0, %s217
    %s234 = sphi 0, %s218
  $region4: #{residual_block_forward.3} parent=0 // loop_header_branch
    %16 = sbr.rel (%p14) target = $region8
  $region5: #{residual_block_forward.3} parent=0 // loop_body
    %s18 = ssub.s32 %s13, 1
    %s19 = ssub.s32 %s13, 2
    %s26 = sadd.s32 1, %s21
    %p27 = scmp.ge.s32.totalorder %s26, 1
    %s28 = scalar_select %p27, 0, %s26
    %s29 = sadd.s32 1, %s20
    %s30 = scalar_select %p27, %s29, %s20
    %p31 = scmp.ge.s32.totalorder %s30, 2
    %s32 = scalar_select %p31, 0, %s30
    %s33 = smul.u32 %s21, 16
    %s34 = ssub.s32 %s33, 1
    %p35 = scmp.gt.s32.totalorder %s34, 0
    %s36 = scalar_select %p35, %s34, 0
    %s37 = smul.u32 %s28, 16
    %s38 = ssub.s32 %s37, 1
    %p39 = scmp.gt.s32.totalorder %s38, 0
    %s40 = scalar_select %p39, %s38, 0
    %s41 = ssub.s32 %s20, %s32
    %s42 = ssub.s32 %s36, %s40
    %s43 = sor.u32 %s41, %s42
    %p44 = scmp.eq.s32.totalorder %s43, 0
    %s46 = sadd.s32 %s45, 1
    %s47 = scalar_select %p44, %s45, %s46
    %p50 = pneg %p44
    %p51 = scmp.eq.s32.totalorder %s13, 1
    %p52 = por %p50, %p51
    %p53 = scmp.ne.s32.totalorder %s45, %s48
    %p54 = scmp.eq.s32.totalorder %s13, 0
    %p55 = por %p53, %p54
    %p56 = scmp.ne.s32.totalorder %s45, %s48
    %p57 = scmp.eq.s32.totalorder %s18, 1
    %p58 = por %p56, %p57
    %p59 = scmp.ne.s32.totalorder %s48, %s49
    %p60 = scmp.eq.s32.totalorder %s18, 0
    %p61 = por %p59, %p60
    %p62 = scmp.ne.s32.totalorder %s48, %s49
    %p63 = scmp.eq.s32.totalorder %s19, 1
    %p64 = por %p62, %p63
    %p66 = scmp.ne.s32.totalorder %s49, %s65
    %p67 = scmp.eq.s32.totalorder %s19, 0
    %p68 = por %p66, %p67
    %s69 = ssub.s32 %s20, %s32
    %s70 = ssub.s32 %s21, %s28
    %s71 = sor.u32 %s69, %s70
    %p72 = scmp.eq.s32.totalorder %s71, 0
    %s74 = sadd.s32 %s73, 1
    %s75 = scalar_select %p72, %s73, %s74
    %p78 = pneg %p72
    %p79 = scmp.eq.s32.totalorder %s13, 1
    %p80 = por %p78, %p79
    %p81 = scmp.ne.s32.totalorder %s73, %s76
    %p82 = scmp.eq.s32.totalorder %s13, 0
    %p83 = por %p81, %p82
    %p84 = scmp.ne.s32.totalorder %s73, %s76
    %p85 = scmp.eq.s32.totalorder %s18, 1
    %p86 = por %p84, %p85
    %p87 = scmp.ne.s32.totalorder %s76, %s77
    %p88 = scmp.eq.s32.totalorder %s18, 0
    %p89 = por %p87, %p88
    %p90 = scmp.ne.s32.totalorder %s76, %s77
    %p91 = scmp.eq.s32.totalorder %s19, 1
    %p92 = por %p90, %p91
    %p94 = scmp.ne.s32.totalorder %s77, %s93
    %p95 = scmp.eq.s32.totalorder %s19, 0
    %p96 = por %p94, %p95
    %s97 = smul.u32 %s21, 16
    %s98 = sadd.s32 %s97, 16
    %p99 = scmp.lt.s32.totalorder %s98, 15
    %s100 = scalar_select %p99, %s98, 15
    %s101 = smul.u32 %s28, 16
    %s102 = sadd.s32 %s101, 16
    %p103 = scmp.lt.s32.totalorder %s102, 15
    %s104 = scalar_select %p103, %s102, 15
    %s105 = ssub.s32 %s20, %s32
    %s106 = ssub.s32 %s100, %s104
    %s107 = sor.u32 %s105, %s106
    %p108 = scmp.eq.s32.totalorder %s107, 0
    %s110 = sadd.s32 %s109, 1
    %s111 = scalar_select %p108, %s109, %s110
    %p114 = pneg %p108
    %p115 = scmp.eq.s32.totalorder %s13, 1
    %p116 = por %p114, %p115
    %p117 = scmp.ne.s32.totalorder %s109, %s112
    %p118 = scmp.eq.s32.totalorder %s13, 0
    %p119 = por %p117, %p118
    %p120 = scmp.ne.s32.totalorder %s109, %s112
    %p121 = scmp.eq.s32.totalorder %s18, 1
    %p122 = por %p120, %p121
    %p123 = scmp.ne.s32.totalorder %s112, %s113
    %p124 = scmp.eq.s32.totalorder %s18, 0
    %p125 = por %p123, %p124
    %p126 = scmp.ne.s32.totalorder %s112, %s113
    %p127 = scmp.eq.s32.totalorder %s19, 1
    %p128 = por %p126, %p127
    %p130 = scmp.ne.s32.totalorder %s113, %s129
    %p131 = scmp.eq.s32.totalorder %s19, 0
    %p132 = por %p130, %p131
    %s134 = sadd.s32 %s133, 1
    %p137 = scmp.eq.s32.totalorder %s13, 1
    %p138 = scmp.ne.s32.totalorder %s133, %s135
    %p139 = scmp.eq.s32.totalorder %s13, 0
    %p140 = por %p138, %p139
    %p141 = scmp.ne.s32.totalorder %s133, %s135
    %p142 = scmp.eq.s32.totalorder %s18, 1
    %p143 = por %p141, %p142
    %p144 = scmp.ne.s32.totalorder %s135, %s136
    %p145 = scmp.eq.s32.totalorder %s18, 0
    %p146 = por %p144, %p145
    %p147 = scmp.ne.s32.totalorder %s135, %s136
    %p148 = scmp.eq.s32.totalorder %s19, 1
    %p149 = por %p147, %p148
    %p151 = scmp.ne.s32.totalorder %s136, %s150
    %p152 = scmp.eq.s32.totalorder %s19, 0
    %p153 = por %p151, %p152
    %s154 = ssub.s32 %s20, %s32
    %s155 = ssub.s32 %s21, %s28
    %s156 = sor.u32 %s154, %s155
    %p157 = scmp.eq.s32.totalorder %s156, 0
    %s159 = sadd.s32 %s158, 1
    %s160 = scalar_select %p157, %s158, %s159
    %p163 = pneg %p157
    %p164 = scmp.eq.s32.totalorder %s13, 1
    %p165 = por %p163, %p164
    %p166 = scmp.ne.s32.totalorder %s158, %s161
    %p167 = scmp.eq.s32.totalorder %s13, 0
    %p168 = por %p166, %p167
    %p169 = scmp.ne.s32.totalorder %s158, %s161
    %p170 = scmp.eq.s32.totalorder %s18, 1
    %p171 = por %p169, %p170
    %p172 = scmp.ne.s32.totalorder %s161, %s162
    %p173 = scmp.eq.s32.totalorder %s18, 0
    %p174 = por %p172, %p173
    %p175 = scmp.ne.s32.totalorder %s161, %s162
    %p176 = scmp.eq.s32.totalorder %s19, 1
    %p177 = por %p175, %p176
    %p179 = scmp.ne.s32.totalorder %s162, %s178
    %p180 = scmp.eq.s32.totalorder %s19, 0
    %p181 = por %p179, %p180
    %s182 = ssub.s32 %s20, %s32
    %s183 = ssub.s32 %s21, %s28
    %s184 = sor.u32 %s182, %s183
    %p185 = scmp.eq.s32.totalorder %s184, 0
    %s187 = sadd.s32 %s186, 1
    %s188 = scalar_select %p185, %s186, %s187
    %p191 = pneg %p185
    %p192 = scmp.eq.s32.totalorder %s13, 1
    %p193 = por %p191, %p192
    %p194 = scmp.ne.s32.totalorder %s186, %s189
    %p195 = scmp.eq.s32.totalorder %s13, 0
    %p196 = por %p194, %p195
    %p197 = scmp.ne.s32.totalorder %s186, %s189
    %p198 = scmp.eq.s32.totalorder %s18, 1
    %p199 = por %p197, %p198
    %p200 = scmp.ne.s32.totalorder %s189, %s190
    %p201 = scmp.eq.s32.totalorder %s18, 0
    %p202 = por %p200, %p201
    %p203 = scmp.ne.s32.totalorder %s189, %s190
    %p204 = scmp.eq.s32.totalorder %s19, 1
    %p205 = por %p203, %p204
    %p207 = scmp.ne.s32.totalorder %s190, %s206
    %p208 = scmp.eq.s32.totalorder %s19, 0
    %p209 = por %p207, %p208
    %s210 = ssub.s32 %s20, %s32
    %s211 = ssub.s32 %s21, %s28
    %s212 = sor.u32 %s210, %s211
    %p213 = scmp.eq.s32.totalorder %s212, 0
    %s215 = sadd.s32 %s214, 1
    %s216 = scalar_select %p213, %s214, %s215
    %p219 = pneg %p213
    %p220 = scmp.eq.s32.totalorder %s13, 1
    %p221 = por %p219, %p220
    %p222 = scmp.ne.s32.totalorder %s214, %s217
    %p223 = scmp.eq.s32.totalorder %s13, 0
    %p224 = por %p222, %p223
    %p225 = scmp.ne.s32.totalorder %s214, %s217
    %p226 = scmp.eq.s32.totalorder %s18, 1
    %p227 = por %p225, %p226
    %p228 = scmp.ne.s32.totalorder %s217, %s218
    %p229 = scmp.eq.s32.totalorder %s18, 0
    %p230 = por %p228, %p229
    %p231 = scmp.ne.s32.totalorder %s217, %s218
    %p232 = scmp.eq.s32.totalorder %s19, 1
    %p233 = por %p231, %p232
    %p235 = scmp.ne.s32.totalorder %s218, %s234
    %p236 = scmp.eq.s32.totalorder %s19, 0
    %p237 = por %p235, %p236
    %p238 = scmp.le.s32.totalorder 1, %s13
    %p239 = scmp.lt.s32.totalorder %s13, 3
    %p240 = pnand %p238, %p239
    %p241 = pneg %p240
    // Predicated region
    $region9: #{residual_block_forward.3} parent=5 // pred_check
      _
    $region10: #{residual_block_forward.3} parent=5 // pred_check_branch
      %243 = sbr.rel (%p240) target = $region12
    $region11: #{residual_block_forward.3} parent=5 // pred_region
      %s244 = ssub.s32 %s13, 1
      // Predicated region
      $region13: #{residual_block_forward.3} parent=11 // pred_check
        %p245 = pneg %p146
      $region14: #{residual_block_forward.3} parent=11 // pred_check_branch
        %247 = sbr.rel (%p245) target = $region16
      $region15: #{residual_block_forward.3} parent=11 // pred_region
        _
      $region16: #{residual_block_forward.3} parent=11 // pred_fallthru
        _
    $region12: #{residual_block_forward.3} parent=5 // pred_fallthru
      _
    %p248 = scmp.lt.s32.totalorder %s13, 2
    // Predicated region
    $region17: #{residual_block_forward.3} parent=5 // pred_check
      %p249 = pneg %p248
    $region18: #{residual_block_forward.3} parent=5 // pred_check_branch
      %251 = sbr.rel (%p249) target = $region20
    $region19: #{residual_block_forward.3} parent=5 // pred_region
      // Predicated region
      $region21: #{residual_block_forward.3} parent=19 // pred_check
        %p252 = pneg %p55
      $region22: #{residual_block_forward.3} parent=19 // pred_check_branch
        %254 = sbr.rel (%p252) target = $region24
      $region23: #{residual_block_forward.3} parent=19 // pred_region
        %s255 = smul.u32 %s21, 16
        %s256 = ssub.s32 %s255, 1
        %p257 = scmp.gt.s32.totalorder %s256, 0
        %s258 = scalar_select %p257, %s256, 0
        %p259 = scmp.lt.s32.totalorder %s20, 1
        %s260 = scalar_select %p259, %s20, 1
        %p261 = scmp.lt.s32.totalorder %s258, 15
        %s262 = scalar_select %p261, %s258, 15
        %s263 = smul.addr %s262, 2
        %s264 = smul.addr %s260, 32
        %s265 = sadd.s32 %s263, %s264
        %s266 = smul.addr %s265, 8
        %s267 = scalar_lea.vmem %s0, %s266
        %s268 = smul.u32 %s21, 16
        %s269 = ssub.s32 %s268, 1
        %p270 = scmp.gt.s32.totalorder %s269, 0
        %s271 = scalar_select %p270, %s269, 0
      $region24: #{residual_block_forward.3} parent=19 // pred_fallthru
        _
      // Predicated region
      $region25: #{residual_block_forward.3} parent=19 // pred_check
        %p272 = pneg %p83
      $region26: #{residual_block_forward.3} parent=19 // pred_check_branch
        %274 = sbr.rel (%p272) target = $region28
      $region27: #{residual_block_forward.3} parent=19 // pred_region
        %s275 = smul.u32 16, %s21
        %p276 = scmp.lt.s32.totalorder %s20, 1
        %s277 = scalar_select %p276, %s20, 1
        %p278 = scmp.lt.s32.totalorder %s275, 15
        %s279 = scalar_select %p278, %s275, 15
        %s280 = smul.addr %s279, 2
        %s281 = smul.addr %s277, 32
        %s282 = sadd.s32 %s280, %s281
        %s283 = smul.addr %s282, 8
        %s284 = scalar_lea.vmem %s1, %s283
        %s285 = smul.u32 16, %s21
      $region28: #{residual_block_forward.3} parent=19 // pred_fallthru
        _
      // Predicated region
      $region29: #{residual_block_forward.3} parent=19 // pred_check
        %p286 = pneg %p119
      $region30: #{residual_block_forward.3} parent=19 // pred_check_branch
        %288 = sbr.rel (%p286) target = $region32
      $region31: #{residual_block_forward.3} parent=19 // pred_region
        %s289 = smul.u32 %s21, 16
        %s290 = sadd.s32 %s289, 16
        %p291 = scmp.lt.s32.totalorder %s290, 15
        %s292 = scalar_select %p291, %s290, 15
        %p293 = scmp.lt.s32.totalorder %s20, 1
        %s294 = scalar_select %p293, %s20, 1
        %p295 = scmp.lt.s32.totalorder %s292, 15
        %s296 = scalar_select %p295, %s292, 15
        %s297 = smul.addr %s296, 2
        %s298 = smul.addr %s294, 32
        %s299 = sadd.s32 %s297, %s298
        %s300 = smul.addr %s299, 8
        %s301 = scalar_lea.vmem %s2, %s300
        %s302 = smul.u32 %s21, 16
        %s303 = sadd.s32 %s302, 16
        %p304 = scmp.lt.s32.totalorder %s303, 15
        %s305 = scalar_select %p304, %s303, 15
      $region32: #{residual_block_forward.3} parent=19 // pred_fallthru
        _
    $region20: #{residual_block_forward.3} parent=5 // pred_fallthru
      _
    %p306 = scmp.le.s32.totalorder 1, %s13
    %p307 = scmp.lt.s32.totalorder %s13, 3
    %p308 = pnand %p306, %p307
    %p309 = pneg %p308
    // Predicated region
    $region33: #{residual_block_forward.3} parent=5 // pred_check
      _
    $region34: #{residual_block_forward.3} parent=5 // pred_check_branch
      %311 = sbr.rel (%p308) target = $region36
    $region35: #{residual_block_forward.3} parent=5 // pred_region
      %s312 = ssub.s32 %s13, 1
      %s313 = smul.u32 %s23, 16
      %s314 = ssub.s32 %s313, 1
      %p315 = scmp.gt.s32.totalorder %s314, 0
      %s316 = scalar_select %p315, %s314, 0
      %p317 = scmp.lt.s32.totalorder %s22, 1
      %s318 = scalar_select %p317, %s22, 1
      %p319 = scmp.lt.s32.totalorder %s316, 15
      %s320 = scalar_select %p319, %s316, 15
      %s321 = smul.addr %s320, 2
      %s322 = smul.addr %s318, 32
      %s323 = sadd.s32 %s321, %s322
      %s324 = smul.addr %s323, 8
      %s325 = scalar_lea.vmem %s0, %s324
      %p326 = pneg %p61
      %p327 = pneg %p58
      %s328 = smul.u32 16, %s23
      %p329 = scmp.lt.s32.totalorder %s22, 1
      %s330 = scalar_select %p329, %s22, 1
      %p331 = scmp.lt.s32.totalorder %s328, 15
      %s332 = scalar_select %p331, %s328, 15
      %s333 = smul.addr %s332, 2
      %s334 = smul.addr %s330, 32
      %s335 = sadd.s32 %s333, %s334
      %s336 = smul.addr %s335, 8
      %s337 = scalar_lea.vmem %s1, %s336
      %p338 = pneg %p89
      %p339 = pneg %p86
      %s340 = smul.u32 %s23, 16
      %s341 = sadd.s32 %s340, 16
      %p342 = scmp.lt.s32.totalorder %s341, 15
      %s343 = scalar_select %p342, %s341, 15
      %p344 = scmp.lt.s32.totalorder %s22, 1
      %s345 = scalar_select %p344, %s22, 1
      %p346 = scmp.lt.s32.totalorder %s343, 15
      %s347 = scalar_select %p346, %s343, 15
      %s348 = smul.addr %s347, 2
      %s349 = smul.addr %s345, 32
      %s350 = sadd.s32 %s348, %s349
      %s351 = smul.addr %s350, 8
      %s352 = scalar_lea.vmem %s2, %s351
      %p353 = pneg %p125
      %p354 = pneg %p122
      %p355 = pneg %p146
      %p356 = pneg %p143
      %p357 = pneg %p174
      %p358 = pneg %p171
      %s359 = smul.u32 16, %s23
      %p360 = scmp.lt.s32.totalorder %s22, 1
      %s361 = scalar_select %p360, %s22, 1
      %p362 = scmp.lt.s32.totalorder %s359, 15
      %s363 = scalar_select %p362, %s359, 15
      %s364 = smul.addr %s363, 2
      %s365 = smul.addr %s361, 32
      %s366 = sadd.s32 %s364, %s365
      %s367 = smul.addr %s366, 4
      %s368 = scalar_lea.vmem %s4, %s367
      %p369 = pneg %p202
      %p370 = pneg %p199
      %p371 = scmp.lt.s32.totalorder %s22, 1
      %s372 = scalar_select %p371, %s22, 1
      %p373 = scmp.lt.s32.totalorder %s23, 0
      %s374 = scalar_select %p373, %s23, 0
      %s375 = sadd.s32 %s374, %s372
      %s376 = scalar_lea.vmem %s5, %s375
      %p377 = pneg %p230
      %p378 = pneg %p227
      %p379 = scmp.lt.s32.totalorder %s22, 1
      %s380 = scalar_select %p379, %s22, 1
      %p381 = scmp.lt.s32.totalorder %s23, 0
      %s382 = scalar_select %p381, %s23, 0
      %s383 = sadd.s32 %s382, %s380
      %s384 = scalar_lea.vmem %s6, %s383
      %s385 = smul.u32 %s23, 16
      %s386 = ssub.s32 %s385, 1
      %p387 = scmp.gt.s32.totalorder %s386, 0
      %s388 = scalar_select %p387, %s386, 0
      %p389 = scmp.lt.s32.totalorder %s22, 1
      %s390 = scalar_select %p389, %s22, 1
      %p391 = scmp.lt.s32.totalorder %s388, 15
      %s392 = scalar_select %p391, %s388, 15
      %s393 = smul.addr %s392, 2
      %s394 = smul.addr %s390, 32
      %s395 = sadd.s32 %s393, %s394
      %s396 = smul.addr %s395, 8
      %s397 = scalar_lea.vmem %s0, %s396
      %s398 = smul.u32 %s23, 16
      %s399 = ssub.s32 %s398, 1
      %p400 = scmp.gt.s32.totalorder %s399, 0
      %s401 = scalar_select %p400, %s399, 0
      %s402 = smul.u32 16, %s23
      %p403 = scmp.lt.s32.totalorder %s22, 1
      %s404 = scalar_select %p403, %s22, 1
      %p405 = scmp.lt.s32.totalorder %s402, 15
      %s406 = scalar_select %p405, %s402, 15
      %s407 = smul.addr %s406, 2
      %s408 = smul.addr %s404, 32
      %s409 = sadd.s32 %s407, %s408
      %s410 = smul.addr %s409, 8
      %s411 = scalar_lea.vmem %s1, %s410
      %s412 = smul.u32 16, %s23
      %s413 = smul.u32 %s23, 16
      %s414 = sadd.s32 %s413, 16
      %p415 = scmp.lt.s32.totalorder %s414, 15
      %s416 = scalar_select %p415, %s414, 15
      %p417 = scmp.lt.s32.totalorder %s22, 1
      %s418 = scalar_select %p417, %s22, 1
      %p419 = scmp.lt.s32.totalorder %s416, 15
      %s420 = scalar_select %p419, %s416, 15
      %s421 = smul.addr %s420, 2
      %s422 = smul.addr %s418, 32
      %s423 = sadd.s32 %s421, %s422
      %s424 = smul.addr %s423, 8
      %s425 = scalar_lea.vmem %s2, %s424
      %s426 = smul.u32 %s23, 16
      %s427 = sadd.s32 %s426, 16
      %p428 = scmp.lt.s32.totalorder %s427, 15
      %s429 = scalar_select %p428, %s427, 15
      %s430 = smul.u32 16, %s23
      %p431 = scmp.lt.s32.totalorder %s22, 1
      %s432 = scalar_select %p431, %s22, 1
      %p433 = scmp.lt.s32.totalorder %s430, 15
      %s434 = scalar_select %p433, %s430, 15
      %s435 = smul.addr %s434, 2
      %s436 = smul.addr %s432, 32
      %s437 = sadd.s32 %s435, %s436
      %s438 = smul.addr %s437, 4
      %s439 = scalar_lea.vmem %s4, %s438
      %s440 = smul.u32 16, %s23
      %p441 = scmp.lt.s32.totalorder %s22, 1
      %s442 = scalar_select %p441, %s22, 1
      %p443 = scmp.lt.s32.totalorder %s23, 0
      %s444 = scalar_select %p443, %s23, 0
      %s445 = sadd.s32 %s444, %s442
      %s446 = scalar_lea.vmem %s5, %s445
      %p447 = scmp.lt.s32.totalorder %s22, 1
      %s448 = scalar_select %p447, %s22, 1
      %p449 = scmp.lt.s32.totalorder %s23, 0
      %s450 = scalar_select %p449, %s23, 0
      %s451 = sadd.s32 %s450, %s448
      %s452 = scalar_lea.vmem %s6, %s451
      %s454 = smul.u32 %s23, 16
      %v455 = vld [vmem:[%s397] sm:$0xff]
      %v456 = vld [vmem:[%s397 + $0x8] sm:$0xff]
      %v457 = vld [vmem:[%s411] sm:$0xff]
      %v458 = vld [vmem:[%s411 + $0x8] sm:$0xff]
      %v459 = vld [vmem:[%s411 + $0x10] sm:$0xff]
      %v460 = vld [vmem:[%s411 + $0x18] sm:$0xff]
      %v461 = vld [vmem:[%s411 + $0x20] sm:$0xff]
      %v462 = vld [vmem:[%s411 + $0x28] sm:$0xff]
      %v463 = vld [vmem:[%s411 + $0x30] sm:$0xff]
      %v464 = vld [vmem:[%s411 + $0x38] sm:$0xff]
      %v465 = vld [vmem:[%s411 + $0x40] sm:$0xff]
      %v466 = vld [vmem:[%s411 + $0x48] sm:$0xff]
      %v467 = vld [vmem:[%s411 + $0x50] sm:$0xff]
      %v468 = vld [vmem:[%s411 + $0x58] sm:$0xff]
      %v469 = vld [vmem:[%s411 + $0x60] sm:$0xff]
      %v470 = vld [vmem:[%s411 + $0x68] sm:$0xff]
      %v471 = vld [vmem:[%s411 + $0x70] sm:$0xff]
      %v472 = vld [vmem:[%s411 + $0x78] sm:$0xff]
      %v473 = vld [vmem:[%s411 + $0x80] sm:$0xff]
      %v474 = vld [vmem:[%s411 + $0x88] sm:$0xff]
      %v475 = vld [vmem:[%s411 + $0x90] sm:$0xff]
      %v476 = vld [vmem:[%s411 + $0x98] sm:$0xff]
      %v477 = vld [vmem:[%s411 + $0xa0] sm:$0xff]
      %v478 = vld [vmem:[%s411 + $0xa8] sm:$0xff]
      %v479 = vld [vmem:[%s411 + $0xb0] sm:$0xff]
      %v480 = vld [vmem:[%s411 + $0xb8] sm:$0xff]
      %v481 = vld [vmem:[%s411 + $0xc0] sm:$0xff]
      %v482 = vld [vmem:[%s411 + $0xc8] sm:$0xff]
      %v483 = vld [vmem:[%s411 + $0xd0] sm:$0xff]
      %v484 = vld [vmem:[%s411 + $0xd8] sm:$0xff]
      %v485 = vld [vmem:[%s411 + $0xe0] sm:$0xff]
      %v486 = vld [vmem:[%s411 + $0xe8] sm:$0xff]
      %v487 = vld [vmem:[%s411 + $0xf0] sm:$0xff]
      %v488 = vld [vmem:[%s411 + $0xf8] sm:$0xff]
      %v489 = vld [vmem:[%s425] sm:$0xff]
      %v490 = vld [vmem:[%s425 + $0x8] sm:$0xff]
      %s491 = ssub.s32 %s454, 1
      %v492 = vstv %s491
      %v493 = vadd.s32 %v492, 1
      %v494 = vadd.s32 %v492, 2
      %v495 = vadd.s32 %v492, 3
      %v496 = vadd.s32 %v492, 4
      %v497 = vadd.s32 %v492, 5
      %v498 = vadd.s32 %v492, 6
      %v499 = vadd.s32 %v492, 7
      %v500 = vadd.s32 %v492, 8
      %v501 = vadd.s32 %v492, 9
      %v502 = vadd.s32 %v492, 10
      %v503 = vadd.s32 %v492, 11
      %v504 = vadd.s32 %v492, 12
      %v505 = vadd.s32 %v492, 13
      %v506 = vadd.s32 %v492, 14
      %v507 = vadd.s32 %v492, 15
      %v508 = vadd.s32 %v492, 16
      %v509 = vadd.s32 %v492, 17
      %vm510 = vcmp.ge.s32.totalorder %v492, 0
      %vm511 = vcmp.ge.s32.totalorder %v493, 0
      %vm512 = vcmp.ge.s32.totalorder %v494, 0
      %vm513 = vcmp.ge.s32.totalorder %v495, 0
      %vm514 = vcmp.ge.s32.totalorder %v496, 0
      %vm515 = vcmp.ge.s32.totalorder %v497, 0
      %vm516 = vcmp.ge.s32.totalorder %v498, 0
      %vm517 = vcmp.ge.s32.totalorder %v499, 0
      %vm518 = vcmp.ge.s32.totalorder %v500, 0
      %vm519 = vcmp.ge.s32.totalorder %v501, 0
      %vm520 = vcmp.ge.s32.totalorder %v502, 0
      %vm521 = vcmp.ge.s32.totalorder %v503, 0
      %vm522 = vcmp.ge.s32.totalorder %v504, 0
      %vm523 = vcmp.ge.s32.totalorder %v505, 0
      %vm524 = vcmp.ge.s32.totalorder %v506, 0
      %vm525 = vcmp.ge.s32.totalorder %v507, 0
      %vm526 = vcmp.ge.s32.totalorder %v508, 0
      %vm527 = vcmp.ge.s32.totalorder %v509, 0
      %vm528 = vcmp.lt.s32.totalorder %v492, 16
      %vm529 = vcmp.lt.s32.totalorder %v493, 16
      %vm530 = vcmp.lt.s32.totalorder %v494, 16
      %vm531 = vcmp.lt.s32.totalorder %v495, 16
      %vm532 = vcmp.lt.s32.totalorder %v496, 16
      %vm533 = vcmp.lt.s32.totalorder %v497, 16
      %vm534 = vcmp.lt.s32.totalorder %v498, 16
      %vm535 = vcmp.lt.s32.totalorder %v499, 16
      %vm536 = vcmp.lt.s32.totalorder %v500, 16
      %vm537 = vcmp.lt.s32.totalorder %v501, 16
      %vm538 = vcmp.lt.s32.totalorder %v502, 16
      %vm539 = vcmp.lt.s32.totalorder %v503, 16
      %vm540 = vcmp.lt.s32.totalorder %v504, 16
      %vm541 = vcmp.lt.s32.totalorder %v505, 16
      %vm542 = vcmp.lt.s32.totalorder %v506, 16
      %vm543 = vcmp.lt.s32.totalorder %v507, 16
      %vm544 = vcmp.lt.s32.totalorder %v508, 16
      %vm545 = vcmp.lt.s32.totalorder %v509, 16
      %vm546 = vmand %vm510, %vm528
      %vm547 = vmand %vm511, %vm529
      %vm548 = vmand %vm512, %vm530
      %vm549 = vmand %vm513, %vm531
      %vm550 = vmand %vm514, %vm532
      %vm551 = vmand %vm515, %vm533
      %vm552 = vmand %vm516, %vm534
      %vm553 = vmand %vm517, %vm535
      %vm554 = vmand %vm518, %vm536
      %vm555 = vmand %vm519, %vm537
      %vm556 = vmand %vm520, %vm538
      %vm557 = vmand %vm521, %vm539
      %vm558 = vmand %vm522, %vm540
      %vm559 = vmand %vm523, %vm541
      %vm560 = vmand %vm524, %vm542
      %vm561 = vmand %vm525, %vm543
      %vm562 = vmand %vm526, %vm544
      %vm563 = vmand %vm527, %vm545
      %v564 = vsel %vm546, 1, 0
      %v565 = vsel %vm547, 1, 0
      %v566 = vsel %vm548, 1, 0
      %v567 = vsel %vm549, 1, 0
      %v568 = vsel %vm550, 1, 0
      %v569 = vsel %vm551, 1, 0
      %v570 = vsel %vm552, 1, 0
      %v571 = vsel %vm553, 1, 0
      %v572 = vsel %vm554, 1, 0
      %v573 = vsel %vm555, 1, 0
      %v574 = vsel %vm556, 1, 0
      %v575 = vsel %vm557, 1, 0
      %v576 = vsel %vm558, 1, 0
      %v577 = vsel %vm559, 1, 0
      %v578 = vsel %vm560, 1, 0
      %v579 = vsel %vm561, 1, 0
      %v580 = vsel %vm562, 1, 0
      %v581 = vsel %vm563, 1, 0
      %vm582 = vcmp.eq.s32.totalorder %v564, 1
      %vm583 = vcmp.eq.s32.totalorder %v565, 1
      %vm584 = vcmp.eq.s32.totalorder %v566, 1
      %vm585 = vcmp.eq.s32.totalorder %v567, 1
      %vm586 = vcmp.eq.s32.totalorder %v568, 1
      %vm587 = vcmp.eq.s32.totalorder %v569, 1
      %vm588 = vcmp.eq.s32.totalorder %v570, 1
      %vm589 = vcmp.eq.s32.totalorder %v571, 1
      %vm590 = vcmp.eq.s32.totalorder %v572, 1
      %vm591 = vcmp.eq.s32.totalorder %v573, 1
      %vm592 = vcmp.eq.s32.totalorder %v574, 1
      %vm593 = vcmp.eq.s32.totalorder %v575, 1
      %vm594 = vcmp.eq.s32.totalorder %v576, 1
      %vm595 = vcmp.eq.s32.totalorder %v577, 1
      %vm596 = vcmp.eq.s32.totalorder %v578, 1
      %vm597 = vcmp.eq.s32.totalorder %v579, 1
      %vm598 = vcmp.eq.s32.totalorder %v580, 1
      %vm599 = vcmp.eq.s32.totalorder %v581, 1
      %v600 = vsel %vm582, %v455, 0.0
      %v601 = vsel %vm582, %v456, 0.0
      %v602 = vsel %vm583, %v457, 0.0
      %v603 = vsel %vm583, %v458, 0.0
      %v604 = vsel %vm584, %v459, 0.0
      %v605 = vsel %vm584, %v460, 0.0
      %v606 = vsel %vm585, %v461, 0.0
      %v607 = vsel %vm585, %v462, 0.0
      %v608 = vsel %vm586, %v463, 0.0
      %v609 = vsel %vm586, %v464, 0.0
      %v610 = vsel %vm587, %v465, 0.0
      %v611 = vsel %vm587, %v466, 0.0
      %v612 = vsel %vm588, %v467, 0.0
      %v613 = vsel %vm588, %v468, 0.0
      %v614 = vsel %vm589, %v469, 0.0
      %v615 = vsel %vm589, %v470, 0.0
      %v616 = vsel %vm590, %v471, 0.0
      %v617 = vsel %vm590, %v472, 0.0
      %v618 = vsel %vm591, %v473, 0.0
      %v619 = vsel %vm591, %v474, 0.0
      %v620 = vsel %vm592, %v475, 0.0
      %v621 = vsel %vm592, %v476, 0.0
      %v622 = vsel %vm593, %v477, 0.0
      %v623 = vsel %vm593, %v478, 0.0
      %v624 = vsel %vm594, %v479, 0.0
      %v625 = vsel %vm594, %v480, 0.0
      %v626 = vsel %vm595, %v481, 0.0
      %v627 = vsel %vm595, %v482, 0.0
      %v628 = vsel %vm596, %v483, 0.0
      %v629 = vsel %vm596, %v484, 0.0
      %v630 = vsel %vm597, %v485, 0.0
      %v631 = vsel %vm597, %v486, 0.0
      %v632 = vsel %vm598, %v487, 0.0
      %v633 = vsel %vm598, %v488, 0.0
      %v634 = vsel %vm599, %v489, 0.0
      %v635 = vsel %vm599, %v490, 0.0
      %v636 = vpack.c.bf16 %v601, %v600
      %v637 = vpack.c.bf16 %v603, %v602
      %v638 = vpack.c.bf16 %v605, %v604
      %v639 = vpack.c.bf16 %v607, %v606
      %v640 = vpack.c.bf16 %v609, %v608
      %v641 = vpack.c.bf16 %v611, %v610
      %v642 = vpack.c.bf16 %v613, %v612
      %v643 = vpack.c.bf16 %v615, %v614
      %v644 = vpack.c.bf16 %v617, %v616
      %v645 = vpack.c.bf16 %v619, %v618
      %v646 = vpack.c.bf16 %v621, %v620
      %v647 = vpack.c.bf16 %v623, %v622
      %v648 = vpack.c.bf16 %v625, %v624
      %v649 = vpack.c.bf16 %v627, %v626
      %v650 = vpack.c.bf16 %v629, %v628
      %v651 = vpack.c.bf16 %v631, %v630
      %v652 = vpack.c.bf16 %v633, %v632
      %v653 = vpack.c.bf16 %v635, %v634
      %v655 = vshrl.u32 %v636, 16
      %v657 = vrot.slane %v655, 7
      %v658 = vshll.u32 %v636, 16
      %v660 = vor.u32 %v657, %v658
      %v662 = vshrl.u32 %v637, 16
      %v664 = vrot.slane %v662, 7
      %v665 = vshll.u32 %v637, 16
      %v667 = vor.u32 %v664, %v665
      %v669 = vshrl.u32 %v638, 16
      %v671 = vrot.slane %v669, 7
      %v672 = vshll.u32 %v638, 16
      %v674 = vor.u32 %v671, %v672
      %v676 = vshrl.u32 %v639, 16
      %v678 = vrot.slane %v676, 7
      %v679 = vshll.u32 %v639, 16
      %v681 = vor.u32 %v678, %v679
      %v683 = vshrl.u32 %v640, 16
      %v685 = vrot.slane %v683, 7
      %v686 = vshll.u32 %v640, 16
      %v688 = vor.u32 %v685, %v686
      %v690 = vshrl.u32 %v641, 16
      %v692 = vrot.slane %v690, 7
      %v693 = vshll.u32 %v641, 16
      %v695 = vor.u32 %v692, %v693
      %v697 = vshrl.u32 %v642, 16
      %v699 = vrot.slane %v697, 7
      %v700 = vshll.u32 %v642, 16
      %v702 = vor.u32 %v699, %v700
      %v704 = vshrl.u32 %v643, 16
      %v706 = vrot.slane %v704, 7
      %v707 = vshll.u32 %v643, 16
      %v709 = vor.u32 %v706, %v707
      %v711 = vshrl.u32 %v644, 16
      %v713 = vrot.slane %v711, 7
      %v714 = vshll.u32 %v644, 16
      %v716 = vor.u32 %v713, %v714
      %v718 = vshrl.u32 %v645, 16
      %v720 = vrot.slane %v718, 7
      %v721 = vshll.u32 %v645, 16
      %v723 = vor.u32 %v720, %v721
      %v725 = vshrl.u32 %v646, 16
      %v727 = vrot.slane %v725, 7
      %v728 = vshll.u32 %v646, 16
      %v730 = vor.u32 %v727, %v728
      %v732 = vshrl.u32 %v647, 16
      %v734 = vrot.slane %v732, 7
      %v735 = vshll.u32 %v647, 16
      %v737 = vor.u32 %v734, %v735
      %v739 = vshrl.u32 %v648, 16
      %v741 = vrot.slane %v739, 7
      %v742 = vshll.u32 %v648, 16
      %v744 = vor.u32 %v741, %v742
      %v746 = vshrl.u32 %v649, 16
      %v748 = vrot.slane %v746, 7
      %v749 = vshll.u32 %v649, 16
      %v751 = vor.u32 %v748, %v749
      %v753 = vshrl.u32 %v650, 16
      %v755 = vrot.slane %v753, 7
      %v756 = vshll.u32 %v650, 16
      %v758 = vor.u32 %v755, %v756
      %v760 = vshrl.u32 %v651, 16
      %v762 = vrot.slane %v760, 7
      %v763 = vshll.u32 %v651, 16
      %v765 = vor.u32 %v762, %v763
      %v767 = vshrl.u32 %v652, 16
      %v769 = vrot.slane %v767, 7
      %v770 = vshll.u32 %v652, 16
      %v772 = vor.u32 %v769, %v770
      %v774 = vshrl.u32 %v653, 16
      %v776 = vrot.slane %v774, 7
      %v777 = vshll.u32 %v653, 16
      %v779 = vor.u32 %v776, %v777
      %vm816 = vcmask 1040384
      %vm817 = vsmask.f32 256
      %vm818 = vmand %vm816, %vm817
      %v819 = vsel %vm818, 0, %v660
      %v820 = vsel %vm818, 0, %v667
      %v821 = vsel %vm818, 0, %v674
      %v822 = vsel %vm818, 0, %v681
      %v823 = vsel %vm818, 0, %v688
      %v824 = vsel %vm818, 0, %v695
      %v825 = vsel %vm818, 0, %v702
      %v826 = vsel %vm818, 0, %v709
      %v827 = vsel %vm818, 0, %v716
      %v828 = vsel %vm818, 0, %v723
      %v829 = vsel %vm818, 0, %v730
      %v830 = vsel %vm818, 0, %v737
      %v831 = vsel %vm818, 0, %v744
      %v832 = vsel %vm818, 0, %v751
      %v833 = vsel %vm818, 0, %v758
      %v834 = vsel %vm818, 0, %v765
      %v835 = vsel %vm818, 0, %v772
      %v836 = vsel %vm818, 0, %v779
      %v837 = vsel %vm818, %v657, 0
      %v838 = vsel %vm818, %v664, 0
      %v839 = vsel %vm818, %v671, 0
      %v840 = vsel %vm818, %v678, 0
      %v841 = vsel %vm818, %v685, 0
      %v842 = vsel %vm818, %v692, 0
      %v843 = vsel %vm818, %v699, 0
      %v844 = vsel %vm818, %v706, 0
      %v845 = vsel %vm818, %v713, 0
      %v846 = vsel %vm818, %v720, 0
      %v847 = vsel %vm818, %v727, 0
      %v848 = vsel %vm818, %v734, 0
      %v849 = vsel %vm818, %v741, 0
      %v850 = vsel %vm818, %v748, 0
      %v851 = vsel %vm818, %v755, 0
      %v852 = vsel %vm818, %v762, 0
      %v853 = vsel %vm818, %v769, 0
      %v854 = vsel %vm818, %v776, 0
      %vm855 = vsmask.f32 7424
      %v857 = vshrl.u32 %v819, 16
      %v859 = vshll.u32 %v819, 16
      %v861 = vrot.slane %v859, 1
      %v862 = vor.u32 %v857, %v861
      %v864 = vshll.u32 %v837, 16
      %v866 = vrot.slane %v864, 1
      %v867 = vsel %vm855, %v862, %v866
      %v869 = vshrl.u32 %v820, 16
      %v871 = vshll.u32 %v820, 16
      %v873 = vrot.slane %v871, 1
      %v874 = vor.u32 %v869, %v873
      %v876 = vshll.u32 %v838, 16
      %v878 = vrot.slane %v876, 1
      %v879 = vsel %vm855, %v874, %v878
      %v881 = vshrl.u32 %v821, 16
      %v883 = vshll.u32 %v821, 16
      %v885 = vrot.slane %v883, 1
      %v886 = vor.u32 %v881, %v885
      %v888 = vshll.u32 %v839, 16
      %v890 = vrot.slane %v888, 1
      %v891 = vsel %vm855, %v886, %v890
      %v893 = vshrl.u32 %v822, 16
      %v895 = vshll.u32 %v822, 16
      %v897 = vrot.slane %v895, 1
      %v898 = vor.u32 %v893, %v897
      %v900 = vshll.u32 %v840, 16
      %v902 = vrot.slane %v900, 1
      %v903 = vsel %vm855, %v898, %v902
      %v905 = vshrl.u32 %v823, 16
      %v907 = vshll.u32 %v823, 16
      %v909 = vrot.slane %v907, 1
      %v910 = vor.u32 %v905, %v909
      %v912 = vshll.u32 %v841, 16
      %v914 = vrot.slane %v912, 1
      %v915 = vsel %vm855, %v910, %v914
      %v917 = vshrl.u32 %v824, 16
      %v919 = vshll.u32 %v824, 16
      %v921 = vrot.slane %v919, 1
      %v922 = vor.u32 %v917, %v921
      %v924 = vshll.u32 %v842, 16
      %v926 = vrot.slane %v924, 1
      %v927 = vsel %vm855, %v922, %v926
      %v929 = vshrl.u32 %v825, 16
      %v931 = vshll.u32 %v825, 16
      %v933 = vrot.slane %v931, 1
      %v934 = vor.u32 %v929, %v933
      %v936 = vshll.u32 %v843, 16
      %v938 = vrot.slane %v936, 1
      %v939 = vsel %vm855, %v934, %v938
      %v941 = vshrl.u32 %v826, 16
      %v943 = vshll.u32 %v826, 16
      %v945 = vrot.slane %v943, 1
      %v946 = vor.u32 %v941, %v945
      %v948 = vshll.u32 %v844, 16
      %v950 = vrot.slane %v948, 1
      %v951 = vsel %vm855, %v946, %v950
      %v953 = vshrl.u32 %v827, 16
      %v955 = vshll.u32 %v827, 16
      %v957 = vrot.slane %v955, 1
      %v958 = vor.u32 %v953, %v957
      %v960 = vshll.u32 %v845, 16
      %v962 = vrot.slane %v960, 1
      %v963 = vsel %vm855, %v958, %v962
      %v965 = vshrl.u32 %v828, 16
      %v967 = vshll.u32 %v828, 16
      %v969 = vrot.slane %v967, 1
      %v970 = vor.u32 %v965, %v969
      %v972 = vshll.u32 %v846, 16
      %v974 = vrot.slane %v972, 1
      %v975 = vsel %vm855, %v970, %v974
      %v977 = vshrl.u32 %v829, 16
      %v979 = vshll.u32 %v829, 16
      %v981 = vrot.slane %v979, 1
      %v982 = vor.u32 %v977, %v981
      %v984 = vshll.u32 %v847, 16
      %v986 = vrot.slane %v984, 1
      %v987 = vsel %vm855, %v982, %v986
      %v989 = vshrl.u32 %v830, 16
      %v991 = vshll.u32 %v830, 16
      %v993 = vrot.slane %v991, 1
      %v994 = vor.u32 %v989, %v993
      %v996 = vshll.u32 %v848, 16
      %v998 = vrot.slane %v996, 1
      %v999 = vsel %vm855, %v994, %v998
      %v1001 = vshrl.u32 %v831, 16
      %v1003 = vshll.u32 %v831, 16
      %v1005 = vrot.slane %v1003, 1
      %v1006 = vor.u32 %v1001, %v1005
      %v1008 = vshll.u32 %v849, 16
      %v1010 = vrot.slane %v1008, 1
      %v1011 = vsel %vm855, %v1006, %v1010
      %v1013 = vshrl.u32 %v832, 16
      %v1015 = vshll.u32 %v832, 16
      %v1017 = vrot.slane %v1015, 1
      %v1018 = vor.u32 %v1013, %v1017
      %v1020 = vshll.u32 %v850, 16
      %v1022 = vrot.slane %v1020, 1
      %v1023 = vsel %vm855, %v1018, %v1022
      %v1025 = vshrl.u32 %v833, 16
      %v1027 = vshll.u32 %v833, 16
      %v1029 = vrot.slane %v1027, 1
      %v1030 = vor.u32 %v1025, %v1029
      %v1032 = vshll.u32 %v851, 16
      %v1034 = vrot.slane %v1032, 1
      %v1035 = vsel %vm855, %v1030, %v1034
      %v1037 = vshrl.u32 %v834, 16
      %v1039 = vshll.u32 %v834, 16
      %v1041 = vrot.slane %v1039, 1
      %v1042 = vor.u32 %v1037, %v1041
      %v1044 = vshll.u32 %v852, 16
      %v1046 = vrot.slane %v1044, 1
      %v1047 = vsel %vm855, %v1042, %v1046
      %vm1096 = vcmask 1046528
      %v1097 = vrot.slane %v819, 1
      %v1098 = vrot.slane %v837, 1
      %v1099 = vsel %vm1096, %v1097, %v1098
      %v1100 = vrot.slane %v820, 1
      %v1101 = vrot.slane %v838, 1
      %v1102 = vsel %vm1096, %v1100, %v1101
      %v1103 = vrot.slane %v821, 1
      %v1104 = vrot.slane %v839, 1
      %v1105 = vsel %vm1096, %v1103, %v1104
      %v1106 = vrot.slane %v822, 1
      %v1107 = vrot.slane %v840, 1
      %v1108 = vsel %vm1096, %v1106, %v1107
      %v1109 = vrot.slane %v823, 1
      %v1110 = vrot.slane %v841, 1
      %v1111 = vsel %vm1096, %v1109, %v1110
      %v1112 = vrot.slane %v824, 1
      %v1113 = vrot.slane %v842, 1
      %v1114 = vsel %vm1096, %v1112, %v1113
      %v1115 = vrot.slane %v825, 1
      %v1116 = vrot.slane %v843, 1
      %v1117 = vsel %vm1096, %v1115, %v1116
      %v1118 = vrot.slane %v826, 1
      %v1119 = vrot.slane %v844, 1
      %v1120 = vsel %vm1096, %v1118, %v1119
      %v1121 = vrot.slane %v827, 1
      %v1122 = vrot.slane %v845, 1
      %v1123 = vsel %vm1096, %v1121, %v1122
      %v1124 = vrot.slane %v828, 1
      %v1125 = vrot.slane %v846, 1
      %v1126 = vsel %vm1096, %v1124, %v1125
      %v1127 = vrot.slane %v829, 1
      %v1128 = vrot.slane %v847, 1
      %v1129 = vsel %vm1096, %v1127, %v1128
      %v1130 = vrot.slane %v830, 1
      %v1131 = vrot.slane %v848, 1
      %v1132 = vsel %vm1096, %v1130, %v1131
      %v1133 = vrot.slane %v831, 1
      %v1134 = vrot.slane %v849, 1
      %v1135 = vsel %vm1096, %v1133, %v1134
      %v1136 = vrot.slane %v832, 1
      %v1137 = vrot.slane %v850, 1
      %v1138 = vsel %vm1096, %v1136, %v1137
      %v1139 = vrot.slane %v833, 1
      %v1140 = vrot.slane %v851, 1
      %v1141 = vsel %vm1096, %v1139, %v1140
      %v1142 = vrot.slane %v834, 1
      %v1143 = vrot.slane %v852, 1
      %v1144 = vsel %vm1096, %v1142, %v1143
      %v1162 = vshrl.u32 %v835, 16
      %v1164 = vshll.u32 %v835, 16
      %v1166 = vrot.slane %v1164, 1
      %v1167 = vor.u32 %v1162, %v1166
      %v1169 = vshll.u32 %v853, 16
      %v1171 = vrot.slane %v1169, 1
      %v1172 = vsel %vm855, %v1167, %v1171
      %v1176 = vrot.slane %v835, 1
      %v1177 = vrot.slane %v853, 1
      %v1178 = vsel %vm1096, %v1176, %v1177
      %v1181 = vshrl.u32 %v836, 16
      %v1183 = vshll.u32 %v836, 16
      %v1185 = vrot.slane %v1183, 1
      %v1186 = vor.u32 %v1181, %v1185
      %v1188 = vshll.u32 %v854, 16
      %v1190 = vrot.slane %v1188, 1
      %v1191 = vsel %vm855, %v1186, %v1190
      %v1195 = vrot.slane %v836, 1
      %v1196 = vrot.slane %v854, 1
      %v1197 = vsel %vm1096, %v1195, %v1196
      %v1199 = vld [vmem:[%s3] sm:$0xf]
      %v1200 = vld [vmem:[%s3 + $0x4] sm:$0xf]
      %v1201 = vld [vmem:[%s3 + $0x8] sm:$0xf]
      %v1202 = vld [vmem:[%s3 + $0xc] sm:$0xf]
      %v1203 = vld [vmem:[%s3 + $0x10] sm:$0xf]
      %v1204 = vld [vmem:[%s3 + $0x14] sm:$0xf]
      %v1205 = vld [vmem:[%s3 + $0x18] sm:$0xf]
      %v1206 = vld [vmem:[%s3 + $0x1c] sm:$0xf]
      %v1207 = vld [vmem:[%s3 + $0x20] sm:$0xf]
      %v1208 = vld [vmem:[%s3 + $0x24] sm:$0xf]
      %v1209 = vld [vmem:[%s3 + $0x28] sm:$0xf]
      %v1210 = vld [vmem:[%s3 + $0x2c] sm:$0xf]
      %v1211 = vld [vmem:[%s3 + $0x30] sm:$0xf]
      %v1212 = vld [vmem:[%s3 + $0x34] sm:$0xf]
      %v1213 = vld [vmem:[%s3 + $0x38] sm:$0xf]
      %v1214 = vld [vmem:[%s3 + $0x3c] sm:$0xf]
      %v1215 = vld [vmem:[%s3 + $0x40] sm:$0xf]
      %v1216 = vld [vmem:[%s3 + $0x44] sm:$0xf]
      %v1217 = vld [vmem:[%s3 + $0x48] sm:$0xf]
      %v1218 = vld [vmem:[%s3 + $0x4c] sm:$0xf]
      %v1219 = vld [vmem:[%s3 + $0x50] sm:$0xf]
      %v1220 = vld [vmem:[%s3 + $0x54] sm:$0xf]
      %v1221 = vld [vmem:[%s3 + $0x58] sm:$0xf]
      %v1222 = vld [vmem:[%s3 + $0x5c] sm:$0xf]
      %v1223 = vld [vmem:[%s3 + $0x60] sm:$0xf]
      %v1224 = vld [vmem:[%s3 + $0x64] sm:$0xf]
      %v1225 = vld [vmem:[%s3 + $0x68] sm:$0xf]
      %v1226 = vld [vmem:[%s3 + $0x6c] sm:$0xf]
      %v1227 = vld [vmem:[%s3 + $0x70] sm:$0xf]
      %v1228 = vld [vmem:[%s3 + $0x74] sm:$0xf]
      %v1229 = vld [vmem:[%s3 + $0x78] sm:$0xf]
      %v1230 = vld [vmem:[%s3 + $0x7c] sm:$0xf]
      %v1231 = vld [vmem:[%s3 + $0x80] sm:$0xf]
      %v1232 = vld [vmem:[%s3 + $0x84] sm:$0xf]
      %v1233 = vld [vmem:[%s3 + $0x88] sm:$0xf]
      %v1234 = vld [vmem:[%s3 + $0x8c] sm:$0xf]
      %v1235 = vld [vmem:[%s3 + $0x90] sm:$0xf]
      %v1236 = vld [vmem:[%s3 + $0x94] sm:$0xf]
      %v1237 = vld [vmem:[%s3 + $0x98] sm:$0xf]
      %v1238 = vld [vmem:[%s3 + $0x9c] sm:$0xf]
      %v1239 = vld [vmem:[%s3 + $0xa0] sm:$0xf]
      %v1240 = vld [vmem:[%s3 + $0xa4] sm:$0xf]
      %v1241 = vld [vmem:[%s3 + $0xa8] sm:$0xf]
      %v1242 = vld [vmem:[%s3 + $0xac] sm:$0xf]
      %v1243 = vld [vmem:[%s3 + $0xb0] sm:$0xf]
      %v1244 = vld [vmem:[%s3 + $0xb4] sm:$0xf]
      %v1245 = vld [vmem:[%s3 + $0xb8] sm:$0xf]
      %v1246 = vld [vmem:[%s3 + $0xbc] sm:$0xf]
      %v1247 = vld [vmem:[%s3 + $0xc0] sm:$0xf]
      %v1248 = vld [vmem:[%s3 + $0xc4] sm:$0xf]
      %v1249 = vld [vmem:[%s3 + $0xc8] sm:$0xf]
      %v1250 = vld [vmem:[%s3 + $0xcc] sm:$0xf]
      %v1251 = vld [vmem:[%s3 + $0xd0] sm:$0xf]
      %v1252 = vld [vmem:[%s3 + $0xd4] sm:$0xf]
      %v1253 = vld [vmem:[%s3 + $0xd8] sm:$0xf]
      %v1254 = vld [vmem:[%s3 + $0xdc] sm:$0xf]
      %v1255 = vld [vmem:[%s3 + $0xe0] sm:$0xf]
      %v1256 = vld [vmem:[%s3 + $0xe4] sm:$0xf]
      %v1257 = vld [vmem:[%s3 + $0xe8] sm:$0xf]
      %v1258 = vld [vmem:[%s3 + $0xec] sm:$0xf]
      %v1259 = vld [vmem:[%s3 + $0xf0] sm:$0xf]
      %v1260 = vld [vmem:[%s3 + $0xf4] sm:$0xf]
      %v1261 = vld [vmem:[%s3 + $0xf8] sm:$0xf]
      %v1262 = vld [vmem:[%s3 + $0xfc] sm:$0xf]
      %v1263 = vld [vmem:[%s3 + $0x100] sm:$0xf]
      %v1264 = vld [vmem:[%s3 + $0x104] sm:$0xf]
      %v1265 = vld [vmem:[%s3 + $0x108] sm:$0xf]
      %v1266 = vld [vmem:[%s3 + $0x10c] sm:$0xf]
      %v1267 = vld [vmem:[%s3 + $0x110] sm:$0xf]
      %v1268 = vld [vmem:[%s3 + $0x114] sm:$0xf]
      %v1269 = vld [vmem:[%s3 + $0x118] sm:$0xf]
      %v1270 = vld [vmem:[%s3 + $0x11c] sm:$0xf]
      %v1271 = vld [vmem:[%s3 + $0x120] sm:$0xf]
      %v1272 = vld [vmem:[%s3 + $0x124] sm:$0xf]
      %v1273 = vld [vmem:[%s3 + $0x128] sm:$0xf]
      %v1274 = vld [vmem:[%s3 + $0x12c] sm:$0xf]
      %v1275 = vld [vmem:[%s3 + $0x130] sm:$0xf]
      %v1276 = vld [vmem:[%s3 + $0x134] sm:$0xf]
      %v1277 = vld [vmem:[%s3 + $0x138] sm:$0xf]
      %v1278 = vld [vmem:[%s3 + $0x13c] sm:$0xf]
      %v1279 = vld [vmem:[%s3 + $0x140] sm:$0xf]
      %v1280 = vld [vmem:[%s3 + $0x144] sm:$0xf]
      %v1281 = vld [vmem:[%s3 + $0x148] sm:$0xf]
      %v1282 = vld [vmem:[%s3 + $0x14c] sm:$0xf]
      %v1283 = vld [vmem:[%s3 + $0x150] sm:$0xf]
      %v1284 = vld [vmem:[%s3 + $0x154] sm:$0xf]
      %v1285 = vld [vmem:[%s3 + $0x158] sm:$0xf]
      %v1286 = vld [vmem:[%s3 + $0x15c] sm:$0xf]
      %v1287 = vld [vmem:[%s3 + $0x160] sm:$0xf]
      %v1288 = vld [vmem:[%s3 + $0x164] sm:$0xf]
      %v1289 = vld [vmem:[%s3 + $0x168] sm:$0xf]
      %v1290 = vld [vmem:[%s3 + $0x16c] sm:$0xf]
      %v1291 = vld [vmem:[%s3 + $0x170] sm:$0xf]
      %v1292 = vld [vmem:[%s3 + $0x174] sm:$0xf]
      %v1293 = vld [vmem:[%s3 + $0x178] sm:$0xf]
      %v1294 = vld [vmem:[%s3 + $0x17c] sm:$0xf]
      %v1295 = vld [vmem:[%s3 + $0x180] sm:$0xf]
      %v1296 = vld [vmem:[%s3 + $0x184] sm:$0xf]
      %v1297 = vld [vmem:[%s3 + $0x188] sm:$0xf]
      %v1298 = vld [vmem:[%s3 + $0x18c] sm:$0xf]
      %v1299 = vld [vmem:[%s3 + $0x190] sm:$0xf]
      %v1300 = vld [vmem:[%s3 + $0x194] sm:$0xf]
      %v1301 = vld [vmem:[%s3 + $0x198] sm:$0xf]
      %v1302 = vld [vmem:[%s3 + $0x19c] sm:$0xf]
      %v1303 = vld [vmem:[%s3 + $0x1a0] sm:$0xf]
      %v1304 = vld [vmem:[%s3 + $0x1a4] sm:$0xf]
      %v1305 = vld [vmem:[%s3 + $0x1a8] sm:$0xf]
      %v1306 = vld [vmem:[%s3 + $0x1ac] sm:$0xf]
      %v1307 = vld [vmem:[%s3 + $0x1b0] sm:$0xf]
      %v1308 = vld [vmem:[%s3 + $0x1b4] sm:$0xf]
      %v1309 = vld [vmem:[%s3 + $0x1b8] sm:$0xf]
      %v1310 = vld [vmem:[%s3 + $0x1bc] sm:$0xf]
      %v1311 = vld [vmem:[%s3 + $0x1c0] sm:$0xf]
      %v1312 = vld [vmem:[%s3 + $0x1c4] sm:$0xf]
      %v1313 = vld [vmem:[%s3 + $0x1c8] sm:$0xf]
      %v1314 = vld [vmem:[%s3 + $0x1cc] sm:$0xf]
      %v1315 = vld [vmem:[%s3 + $0x1d0] sm:$0xf]
      %v1316 = vld [vmem:[%s3 + $0x1d4] sm:$0xf]
      %v1317 = vld [vmem:[%s3 + $0x1d8] sm:$0xf]
      %v1318 = vld [vmem:[%s3 + $0x1dc] sm:$0xf]
      %v1319 = vld [vmem:[%s3 + $0x1e0] sm:$0xf]
      %v1320 = vld [vmem:[%s3 + $0x1e4] sm:$0xf]
      %v1321 = vld [vmem:[%s3 + $0x1e8] sm:$0xf]
      %v1322 = vld [vmem:[%s3 + $0x1ec] sm:$0xf]
      %v1323 = vld [vmem:[%s3 + $0x1f0] sm:$0xf]
      %v1324 = vld [vmem:[%s3 + $0x1f4] sm:$0xf]
      %v1325 = vld [vmem:[%s3 + $0x1f8] sm:$0xf]
      %v1326 = vld [vmem:[%s3 + $0x1fc] sm:$0xf]
      %v1327 = vld [vmem:[%s3 + $0x200] sm:$0xf]
      %v1328 = vld [vmem:[%s3 + $0x204] sm:$0xf]
      %v1329 = vld [vmem:[%s3 + $0x208] sm:$0xf]
      %v1330 = vld [vmem:[%s3 + $0x20c] sm:$0xf]
      %v1331 = vld [vmem:[%s3 + $0x210] sm:$0xf]
      %v1332 = vld [vmem:[%s3 + $0x214] sm:$0xf]
      %v1333 = vld [vmem:[%s3 + $0x218] sm:$0xf]
      %v1334 = vld [vmem:[%s3 + $0x21c] sm:$0xf]
      %v1335 = vld [vmem:[%s3 + $0x220] sm:$0xf]
      %v1336 = vld [vmem:[%s3 + $0x224] sm:$0xf]
      %v1337 = vld [vmem:[%s3 + $0x228] sm:$0xf]
      %v1338 = vld [vmem:[%s3 + $0x22c] sm:$0xf]
      %v1339 = vld [vmem:[%s3 + $0x230] sm:$0xf]
      %v1340 = vld [vmem:[%s3 + $0x234] sm:$0xf]
      %v1341 = vld [vmem:[%s3 + $0x238] sm:$0xf]
      %v1342 = vld [vmem:[%s3 + $0x23c] sm:$0xf]
      %v1487 = vunpack.c.l.b16 %v1199
      %v1488 = vunpack.c.l.b16 %v1200
      %v1489 = vunpack.c.l.b16 %v1201
      %v1490 = vunpack.c.l.b16 %v1202
      %v1491 = vunpack.c.l.b16 %v1203
      %v1492 = vunpack.c.l.b16 %v1204
      %v1493 = vunpack.c.l.b16 %v1205
      %v1494 = vunpack.c.l.b16 %v1206
      %v1495 = vunpack.c.l.b16 %v1207
      %v1496 = vunpack.c.l.b16 %v1208
      %v1497 = vunpack.c.l.b16 %v1209
      %v1498 = vunpack.c.l.b16 %v1210
      %v1499 = vunpack.c.l.b16 %v1211
      %v1500 = vunpack.c.l.b16 %v1212
      %v1501 = vunpack.c.l.b16 %v1213
      %v1502 = vunpack.c.l.b16 %v1214
      %v1503 = vunpack.c.l.b16 %v1215
      %v1504 = vunpack.c.l.b16 %v1216
      %v1505 = vunpack.c.l.b16 %v1217
      %v1506 = vunpack.c.l.b16 %v1218
      %v1507 = vunpack.c.l.b16 %v1219
      %v1508 = vunpack.c.l.b16 %v1220
      %v1509 = vunpack.c.l.b16 %v1221
      %v1510 = vunpack.c.l.b16 %v1222
      %v1511 = vunpack.c.l.b16 %v1223
      %v1512 = vunpack.c.l.b16 %v1224
      %v1513 = vunpack.c.l.b16 %v1225
      %v1514 = vunpack.c.l.b16 %v1226
      %v1515 = vunpack.c.l.b16 %v1227
      %v1516 = vunpack.c.l.b16 %v1228
      %v1517 = vunpack.c.l.b16 %v1229
      %v1518 = vunpack.c.l.b16 %v1230
      %v1519 = vunpack.c.l.b16 %v1231
      %v1520 = vunpack.c.l.b16 %v1232
      %v1521 = vunpack.c.l.b16 %v1233
      %v1522 = vunpack.c.l.b16 %v1234
      %v1523 = vunpack.c.l.b16 %v1235
      %v1524 = vunpack.c.l.b16 %v1236
      %v1525 = vunpack.c.l.b16 %v1237
      %v1526 = vunpack.c.l.b16 %v1238
      %v1527 = vunpack.c.l.b16 %v1239
      %v1528 = vunpack.c.l.b16 %v1240
      %v1529 = vunpack.c.l.b16 %v1241
      %v1530 = vunpack.c.l.b16 %v1242
      %v1531 = vunpack.c.l.b16 %v1243
      %v1532 = vunpack.c.l.b16 %v1244
      %v1533 = vunpack.c.l.b16 %v1245
      %v1534 = vunpack.c.l.b16 %v1246
      %v1535 = vunpack.c.l.b16 %v1247
      %v1536 = vunpack.c.l.b16 %v1248
      %v1537 = vunpack.c.l.b16 %v1249
      %v1538 = vunpack.c.l.b16 %v1250
      %v1539 = vunpack.c.l.b16 %v1251
      %v1540 = vunpack.c.l.b16 %v1252
      %v1541 = vunpack.c.l.b16 %v1253
      %v1542 = vunpack.c.l.b16 %v1254
      %v1543 = vunpack.c.l.b16 %v1255
      %v1544 = vunpack.c.l.b16 %v1256
      %v1545 = vunpack.c.l.b16 %v1257
      %v1546 = vunpack.c.l.b16 %v1258
      %v1547 = vunpack.c.l.b16 %v1259
      %v1548 = vunpack.c.l.b16 %v1260
      %v1549 = vunpack.c.l.b16 %v1261
      %v1550 = vunpack.c.l.b16 %v1262
      %v1551 = vunpack.c.l.b16 %v1263
      %v1552 = vunpack.c.l.b16 %v1264
      %v1553 = vunpack.c.l.b16 %v1265
      %v1554 = vunpack.c.l.b16 %v1266
      %v1555 = vunpack.c.l.b16 %v1267
      %v1556 = vunpack.c.l.b16 %v1268
      %v1557 = vunpack.c.l.b16 %v1269
      %v1558 = vunpack.c.l.b16 %v1270
      %v1559 = vunpack.c.l.b16 %v1271
      %v1560 = vunpack.c.l.b16 %v1272
      %v1561 = vunpack.c.l.b16 %v1273
      %v1562 = vunpack.c.l.b16 %v1274
      %v1563 = vunpack.c.l.b16 %v1275
      %v1564 = vunpack.c.l.b16 %v1276
      %v1565 = vunpack.c.l.b16 %v1277
      %v1566 = vunpack.c.l.b16 %v1278
      %v1567 = vunpack.c.l.b16 %v1279
      %v1568 = vunpack.c.l.b16 %v1280
      %v1569 = vunpack.c.l.b16 %v1281
      %v1570 = vunpack.c.l.b16 %v1282
      %v1571 = vunpack.c.l.b16 %v1283
      %v1572 = vunpack.c.l.b16 %v1284
      %v1573 = vunpack.c.l.b16 %v1285
      %v1574 = vunpack.c.l.b16 %v1286
      %v1575 = vunpack.c.l.b16 %v1287
      %v1576 = vunpack.c.l.b16 %v1288
      %v1577 = vunpack.c.l.b16 %v1289
      %v1578 = vunpack.c.l.b16 %v1290
      %v1579 = vunpack.c.l.b16 %v1291
      %v1580 = vunpack.c.l.b16 %v1292
      %v1581 = vunpack.c.l.b16 %v1293
      %v1582 = vunpack.c.l.b16 %v1294
      %v1583 = vunpack.c.l.b16 %v1295
      %v1584 = vunpack.c.l.b16 %v1296
      %v1585 = vunpack.c.l.b16 %v1297
      %v1586 = vunpack.c.l.b16 %v1298
      %v1587 = vunpack.c.l.b16 %v1299
      %v1588 = vunpack.c.l.b16 %v1300
      %v1589 = vunpack.c.l.b16 %v1301
      %v1590 = vunpack.c.l.b16 %v1302
      %v1591 = vunpack.c.l.b16 %v1303
      %v1592 = vunpack.c.l.b16 %v1304
      %v1593 = vunpack.c.l.b16 %v1305
      %v1594 = vunpack.c.l.b16 %v1306
      %v1595 = vunpack.c.l.b16 %v1307
      %v1596 = vunpack.c.l.b16 %v1308
      %v1597 = vunpack.c.l.b16 %v1309
      %v1598 = vunpack.c.l.b16 %v1310
      %v1599 = vunpack.c.l.b16 %v1311
      %v1600 = vunpack.c.l.b16 %v1312
      %v1601 = vunpack.c.l.b16 %v1313
      %v1602 = vunpack.c.l.b16 %v1314
      %v1603 = vunpack.c.l.b16 %v1315
      %v1604 = vunpack.c.l.b16 %v1316
      %v1605 = vunpack.c.l.b16 %v1317
      %v1606 = vunpack.c.l.b16 %v1318
      %v1607 = vunpack.c.l.b16 %v1319
      %v1608 = vunpack.c.l.b16 %v1320
      %v1609 = vunpack.c.l.b16 %v1321
      %v1610 = vunpack.c.l.b16 %v1322
      %v1611 = vunpack.c.l.b16 %v1323
      %v1612 = vunpack.c.l.b16 %v1324
      %v1613 = vunpack.c.l.b16 %v1325
      %v1614 = vunpack.c.l.b16 %v1326
      %v1615 = vunpack.c.l.b16 %v1327
      %v1616 = vunpack.c.l.b16 %v1328
      %v1617 = vunpack.c.l.b16 %v1329
      %v1618 = vunpack.c.l.b16 %v1330
      %v1619 = vunpack.c.l.b16 %v1331
      %v1620 = vunpack.c.l.b16 %v1332
      %v1621 = vunpack.c.l.b16 %v1333
      %v1622 = vunpack.c.l.b16 %v1334
      %v1623 = vunpack.c.l.b16 %v1335
      %v1624 = vunpack.c.l.b16 %v1336
      %v1625 = vunpack.c.l.b16 %v1337
      %v1626 = vunpack.c.l.b16 %v1338
      %v1627 = vunpack.c.l.b16 %v1339
      %v1628 = vunpack.c.l.b16 %v1340
      %v1629 = vunpack.c.l.b16 %v1341
      %v1630 = vunpack.c.l.b16 %v1342
      %v1631 = vpack.c.b16 %v1488, %v1487
      %v1632 = vpack.c.b16 %v1490, %v1489
      %v1633 = vpack.c.b16 %v1492, %v1491
      %v1634 = vpack.c.b16 %v1494, %v1493
      %v1635 = vpack.c.b16 %v1496, %v1495
      %v1636 = vpack.c.b16 %v1498, %v1497
      %v1637 = vpack.c.b16 %v1500, %v1499
      %v1638 = vpack.c.b16 %v1502, %v1501
      %v1639 = vpack.c.b16 %v1504, %v1503
      %v1640 = vpack.c.b16 %v1506, %v1505
      %v1641 = vpack.c.b16 %v1508, %v1507
      %v1642 = vpack.c.b16 %v1510, %v1509
      %v1643 = vpack.c.b16 %v1512, %v1511
      %v1644 = vpack.c.b16 %v1514, %v1513
      %v1645 = vpack.c.b16 %v1516, %v1515
      %v1646 = vpack.c.b16 %v1518, %v1517
      %v1647 = vpack.c.b16 %v1520, %v1519
      %v1648 = vpack.c.b16 %v1522, %v1521
      %v1649 = vpack.c.b16 %v1524, %v1523
      %v1650 = vpack.c.b16 %v1526, %v1525
      %v1651 = vpack.c.b16 %v1528, %v1527
      %v1652 = vpack.c.b16 %v1530, %v1529
      %v1653 = vpack.c.b16 %v1532, %v1531
      %v1654 = vpack.c.b16 %v1534, %v1533
      %v1655 = vpack.c.b16 %v1536, %v1535
      %v1656 = vpack.c.b16 %v1538, %v1537
      %v1657 = vpack.c.b16 %v1540, %v1539
      %v1658 = vpack.c.b16 %v1542, %v1541
      %v1659 = vpack.c.b16 %v1544, %v1543
      %v1660 = vpack.c.b16 %v1546, %v1545
      %v1661 = vpack.c.b16 %v1548, %v1547
      %v1662 = vpack.c.b16 %v1550, %v1549
      %v1663 = vpack.c.b16 %v1552, %v1551
      %v1664 = vpack.c.b16 %v1554, %v1553
      %v1665 = vpack.c.b16 %v1556, %v1555
      %v1666 = vpack.c.b16 %v1558, %v1557
      %v1667 = vpack.c.b16 %v1560, %v1559
      %v1668 = vpack.c.b16 %v1562, %v1561
      %v1669 = vpack.c.b16 %v1564, %v1563
      %v1670 = vpack.c.b16 %v1566, %v1565
      %v1671 = vpack.c.b16 %v1568, %v1567
      %v1672 = vpack.c.b16 %v1570, %v1569
      %v1673 = vpack.c.b16 %v1572, %v1571
      %v1674 = vpack.c.b16 %v1574, %v1573
      %v1675 = vpack.c.b16 %v1576, %v1575
      %v1676 = vpack.c.b16 %v1578, %v1577
      %v1677 = vpack.c.b16 %v1580, %v1579
      %v1678 = vpack.c.b16 %v1582, %v1581
      %v1679 = vpack.c.b16 %v1584, %v1583
      %v1680 = vpack.c.b16 %v1586, %v1585
      %v1681 = vpack.c.b16 %v1588, %v1587
      %v1682 = vpack.c.b16 %v1590, %v1589
      %v1683 = vpack.c.b16 %v1592, %v1591
      %v1684 = vpack.c.b16 %v1594, %v1593
      %v1685 = vpack.c.b16 %v1596, %v1595
      %v1686 = vpack.c.b16 %v1598, %v1597
      %v1687 = vpack.c.b16 %v1600, %v1599
      %v1688 = vpack.c.b16 %v1602, %v1601
      %v1689 = vpack.c.b16 %v1604, %v1603
      %v1690 = vpack.c.b16 %v1606, %v1605
      %v1691 = vpack.c.b16 %v1608, %v1607
      %v1692 = vpack.c.b16 %v1610, %v1609
      %v1693 = vpack.c.b16 %v1612, %v1611
      %v1694 = vpack.c.b16 %v1614, %v1613
      %v1695 = vpack.c.b16 %v1616, %v1615
      %v1696 = vpack.c.b16 %v1618, %v1617
      %v1697 = vpack.c.b16 %v1620, %v1619
      %v1698 = vpack.c.b16 %v1622, %v1621
      %v1699 = vpack.c.b16 %v1624, %v1623
      %v1700 = vpack.c.b16 %v1626, %v1625
      %v1701 = vpack.c.b16 %v1628, %v1627
      %v1702 = vpack.c.b16 %v1630, %v1629
      %1775 = vmatprep.subr.bf16.mxu0 0
      %1776 = vmatpush1.bf16.msra.mxu0 %v1638
      %1777 = vmatprep.subr.bf16.mxu0 0
      %1778 = vmatpush1.bf16.msra.mxu0 %v1637
      %1779 = vmatprep.subr.bf16.mxu0 0
      %1780 = vmatpush1.bf16.msra.mxu0 %v1636
      %1781 = vmatprep.subr.bf16.mxu0 0
      %1782 = vmatpush1.bf16.msra.mxu0 %v1635
      %1783 = vmatprep.subr.bf16.mxu0 0
      %1784 = vmatpush1.bf16.msra.mxu0 %v1634
      %1785 = vmatprep.subr.bf16.mxu0 0
      %1786 = vmatpush1.bf16.msra.mxu0 %v1633
      %1787 = vmatprep.subr.bf16.mxu0 0
      %1788 = vmatpush1.bf16.msra.mxu0 %v1632
      %1789 = vmatprep.subr.bf16.mxu0 0
      %1790 = vmatpush1.bf16.msra.mxu0 %v1631
      %1791 = vmatprep.subr.bf16.mxu0 0
      %1792 = vmatpush2.bf16.msra.mxu0 %v1646
      %1793 = vmatprep.subr.bf16.mxu0 0
      %1794 = vmatpush2.bf16.msra.mxu0 %v1645
      %1795 = vmatprep.subr.bf16.mxu0 0
      %1796 = vmatpush2.bf16.msra.mxu0 %v1644
      %1797 = vmatprep.subr.bf16.mxu0 0
      %1798 = vmatpush2.bf16.msra.mxu0 %v1643
      %1799 = vmatprep.subr.bf16.mxu0 0
      %1800 = vmatpush2.bf16.msra.mxu0 %v1642
      %1801 = vmatprep.subr.bf16.mxu0 0
      %1802 = vmatpush2.bf16.msra.mxu0 %v1641
      %1803 = vmatprep.subr.bf16.mxu0 0
      %1804 = vmatpush2.bf16.msra.mxu0 %v1640
      %1805 = vmatprep.subr.bf16.mxu0 0
      %1806 = vmatpush2.bf16.msra.mxu0 %v1639
      %1807 = vmatprep.mubr.bf16.mxu0 %v867
      %1808 = vmatmul.mubr.bf16.gmra.mxu0 %v819
      %v1809 = vpop.f32.mrf.mxu0
      %v1810 = vadd.f32 0.0, %v1809
      %v1811 = vpop.f32.mrf.mxu0
      %v1812 = vpop.f32.mrf.mxu0
      %v1813 = vadd.f32 0.0, %v1812
      %v1814 = vpop.f32.mrf.mxu0
      %1815 = vmatprep.mubr.bf16.mxu0 %v879
      %1816 = vmatmul.mubr.bf16.gmra.mxu0 %v820
      %v1817 = vpop.f32.mrf.mxu0
      %v1818 = vadd.f32 0.0, %v1817
      %v1819 = vpop.f32.mrf.mxu0
      %v1820 = vpop.f32.mrf.mxu0
      %v1821 = vadd.f32 0.0, %v1820
      %v1822 = vpop.f32.mrf.mxu0
      %1823 = vmatprep.mubr.bf16.mxu0 %v891
      %1824 = vmatmul.mubr.bf16.gmra.mxu0 %v821
      %v1825 = vpop.f32.mrf.mxu0
      %v1826 = vadd.f32 0.0, %v1825
      %v1827 = vpop.f32.mrf.mxu0
      %v1828 = vpop.f32.mrf.mxu0
      %v1829 = vadd.f32 0.0, %v1828
      %v1830 = vpop.f32.mrf.mxu0
      %1831 = vmatprep.mubr.bf16.mxu0 %v903
      %1832 = vmatmul.mubr.bf16.gmra.mxu0 %v822
      %v1833 = vpop.f32.mrf.mxu0
      %v1834 = vadd.f32 0.0, %v1833
      %v1835 = vpop.f32.mrf.mxu0
      %v1836 = vpop.f32.mrf.mxu0
      %v1837 = vadd.f32 0.0, %v1836
      %v1838 = vpop.f32.mrf.mxu0
      %1839 = vmatprep.mubr.bf16.mxu0 %v915
      %1840 = vmatmul.mubr.bf16.gmra.mxu0 %v823
      %v1841 = vpop.f32.mrf.mxu0
      %v1842 = vadd.f32 0.0, %v1841
      %v1843 = vpop.f32.mrf.mxu0
      %v1844 = vpop.f32.mrf.mxu0
      %v1845 = vadd.f32 0.0, %v1844
      %v1846 = vpop.f32.mrf.mxu0
      %1847 = vmatprep.mubr.bf16.mxu0 %v927
      %1848 = vmatmul.mubr.bf16.gmra.mxu0 %v824
      %v1849 = vpop.f32.mrf.mxu0
      %v1850 = vadd.f32 0.0, %v1849
      %v1851 = vpop.f32.mrf.mxu0
      %v1852 = vpop.f32.mrf.mxu0
      %v1853 = vadd.f32 0.0, %v1852
      %v1854 = vpop.f32.mrf.mxu0
      %1855 = vmatprep.mubr.bf16.mxu0 %v939
      %1856 = vmatmul.mubr.bf16.gmra.mxu0 %v825
      %v1857 = vpop.f32.mrf.mxu0
      %v1858 = vadd.f32 0.0, %v1857
      %v1859 = vpop.f32.mrf.mxu0
      %v1860 = vpop.f32.mrf.mxu0
      %v1861 = vadd.f32 0.0, %v1860
      %v1862 = vpop.f32.mrf.mxu0
      %1863 = vmatprep.mubr.bf16.mxu0 %v951
      %1864 = vmatmul.mubr.bf16.gmra.mxu0 %v826
      %v1865 = vpop.f32.mrf.mxu0
      %v1866 = vadd.f32 0.0, %v1865
      %v1867 = vpop.f32.mrf.mxu0
      %v1868 = vpop.f32.mrf.mxu0
      %v1869 = vadd.f32 0.0, %v1868
      %v1870 = vpop.f32.mrf.mxu0
      %1871 = vmatprep.mubr.bf16.mxu0 %v963
      %1872 = vmatmul.mubr.bf16.gmra.mxu0 %v827
      %v1873 = vpop.f32.mrf.mxu0
      %v1874 = vadd.f32 0.0, %v1873
      %v1875 = vpop.f32.mrf.mxu0
      %v1876 = vpop.f32.mrf.mxu0
      %v1877 = vadd.f32 0.0, %v1876
      %v1878 = vpop.f32.mrf.mxu0
      %1879 = vmatprep.mubr.bf16.mxu0 %v975
      %1880 = vmatmul.mubr.bf16.gmra.mxu0 %v828
      %v1881 = vpop.f32.mrf.mxu0
      %v1882 = vadd.f32 0.0, %v1881
      %v1883 = vpop.f32.mrf.mxu0
      %v1884 = vpop.f32.mrf.mxu0
      %v1885 = vadd.f32 0.0, %v1884
      %v1886 = vpop.f32.mrf.mxu0
      %1887 = vmatprep.mubr.bf16.mxu0 %v987
      %1888 = vmatmul.mubr.bf16.gmra.mxu0 %v829
      %v1889 = vpop.f32.mrf.mxu0
      %v1890 = vadd.f32 0.0, %v1889
      %v1891 = vpop.f32.mrf.mxu0
      %v1892 = vpop.f32.mrf.mxu0
      %v1893 = vadd.f32 0.0, %v1892
      %v1894 = vpop.f32.mrf.mxu0
      %1895 = vmatprep.mubr.bf16.mxu0 %v999
      %1896 = vmatmul.mubr.bf16.gmra.mxu0 %v830
      %v1897 = vpop.f32.mrf.mxu0
      %v1898 = vadd.f32 0.0, %v1897
      %v1899 = vpop.f32.mrf.mxu0
      %v1900 = vpop.f32.mrf.mxu0
      %v1901 = vadd.f32 0.0, %v1900
      %v1902 = vpop.f32.mrf.mxu0
      %1903 = vmatprep.mubr.bf16.mxu0 %v1011
      %1904 = vmatmul.mubr.bf16.gmra.mxu0 %v831
      %v1905 = vpop.f32.mrf.mxu0
      %v1906 = vadd.f32 0.0, %v1905
      %v1907 = vpop.f32.mrf.mxu0
      %v1908 = vpop.f32.mrf.mxu0
      %v1909 = vadd.f32 0.0, %v1908
      %v1910 = vpop.f32.mrf.mxu0
      %1911 = vmatprep.mubr.bf16.mxu0 %v1023
      %1912 = vmatmul.mubr.bf16.gmra.mxu0 %v832
      %v1913 = vpop.f32.mrf.mxu0
      %v1914 = vadd.f32 0.0, %v1913
      %v1915 = vpop.f32.mrf.mxu0
      %v1916 = vpop.f32.mrf.mxu0
      %v1917 = vadd.f32 0.0, %v1916
      %v1918 = vpop.f32.mrf.mxu0
      %1919 = vmatprep.mubr.bf16.mxu0 %v1035
      %1920 = vmatmul.mubr.bf16.gmra.mxu0 %v833
      %v1921 = vpop.f32.mrf.mxu0
      %v1922 = vadd.f32 0.0, %v1921
      %v1923 = vpop.f32.mrf.mxu0
      %v1924 = vpop.f32.mrf.mxu0
      %v1925 = vadd.f32 0.0, %v1924
      %v1926 = vpop.f32.mrf.mxu0
      %1927 = vmatprep.mubr.bf16.mxu0 %v1047
      %1928 = vmatmul.mubr.bf16.gmra.mxu0 %v834
      %v1929 = vpop.f32.mrf.mxu0
      %v1930 = vadd.f32 0.0, %v1929
      %v1931 = vpop.f32.mrf.mxu0
      %v1932 = vpop.f32.mrf.mxu0
      %v1933 = vadd.f32 0.0, %v1932
      %v1934 = vpop.f32.mrf.mxu0
      %1935 = vdwg.mxu0
      %1936 = vmatprep.subr.bf16.mxu0 0
      %1937 = vmatpush1.bf16.msra.mxu0 %v1654
      %1938 = vmatprep.subr.bf16.mxu0 0
      %1939 = vmatpush1.bf16.msra.mxu0 %v1653
      %1940 = vmatprep.subr.bf16.mxu0 0
      %1941 = vmatpush1.bf16.msra.mxu0 %v1652
      %1942 = vmatprep.subr.bf16.mxu0 0
      %1943 = vmatpush1.bf16.msra.mxu0 %v1651
      %1944 = vmatprep.subr.bf16.mxu0 0
      %1945 = vmatpush1.bf16.msra.mxu0 %v1650
      %1946 = vmatprep.subr.bf16.mxu0 0
      %1947 = vmatpush1.bf16.msra.mxu0 %v1649
      %1948 = vmatprep.subr.bf16.mxu0 0
      %1949 = vmatpush1.bf16.msra.mxu0 %v1648
      %1950 = vmatprep.subr.bf16.mxu0 0
      %1951 = vmatpush1.bf16.msra.mxu0 %v1647
      %1952 = vmatprep.subr.bf16.mxu0 0
      %1953 = vmatpush2.bf16.msra.mxu0 %v1662
      %1954 = vmatprep.subr.bf16.mxu0 0
      %1955 = vmatpush2.bf16.msra.mxu0 %v1661
      %1956 = vmatprep.subr.bf16.mxu0 0
      %1957 = vmatpush2.bf16.msra.mxu0 %v1660
      %1958 = vmatprep.subr.bf16.mxu0 0
      %1959 = vmatpush2.bf16.msra.mxu0 %v1659
      %1960 = vmatprep.subr.bf16.mxu0 0
      %1961 = vmatpush2.bf16.msra.mxu0 %v1658
      %1962 = vmatprep.subr.bf16.mxu0 0
      %1963 = vmatpush2.bf16.msra.mxu0 %v1657
      %1964 = vmatprep.subr.bf16.mxu0 0
      %1965 = vmatpush2.bf16.msra.mxu0 %v1656
      %1966 = vmatprep.subr.bf16.mxu0 0
      %1967 = vmatpush2.bf16.msra.mxu0 %v1655
      %1968 = vmatprep.mubr.bf16.mxu0 %v820
      %1969 = vmatmul.mubr.bf16.gmra.mxu0 %v1099
      %v1970 = vpop.f32.mrf.mxu0
      %v1971 = vadd.f32 %v1810, %v1970
      %v1972 = vpop.f32.mrf.mxu0
      %v1973 = vpop.f32.mrf.mxu0
      %v1974 = vadd.f32 %v1813, %v1973
      %v1975 = vpop.f32.mrf.mxu0
      %1976 = vmatprep.mubr.bf16.mxu0 %v821
      %1977 = vmatmul.mubr.bf16.gmra.mxu0 %v1102
      %v1978 = vpop.f32.mrf.mxu0
      %v1979 = vadd.f32 %v1818, %v1978
      %v1980 = vpop.f32.mrf.mxu0
      %v1981 = vpop.f32.mrf.mxu0
      %v1982 = vadd.f32 %v1821, %v1981
      %v1983 = vpop.f32.mrf.mxu0
      %1984 = vmatprep.mubr.bf16.mxu0 %v822
      %1985 = vmatmul.mubr.bf16.gmra.mxu0 %v1105
      %v1986 = vpop.f32.mrf.mxu0
      %v1987 = vadd.f32 %v1826, %v1986
      %v1988 = vpop.f32.mrf.mxu0
      %v1989 = vpop.f32.mrf.mxu0
      %v1990 = vadd.f32 %v1829, %v1989
      %v1991 = vpop.f32.mrf.mxu0
      %1992 = vmatprep.mubr.bf16.mxu0 %v823
      %1993 = vmatmul.mubr.bf16.gmra.mxu0 %v1108
      %v1994 = vpop.f32.mrf.mxu0
      %v1995 = vadd.f32 %v1834, %v1994
      %v1996 = vpop.f32.mrf.mxu0
      %v1997 = vpop.f32.mrf.mxu0
      %v1998 = vadd.f32 %v1837, %v1997
      %v1999 = vpop.f32.mrf.mxu0
      %2000 = vmatprep.mubr.bf16.mxu0 %v824
      %2001 = vmatmul.mubr.bf16.gmra.mxu0 %v1111
      %v2002 = vpop.f32.mrf.mxu0
      %v2003 = vadd.f32 %v1842, %v2002
      %v2004 = vpop.f32.mrf.mxu0
      %v2005 = vpop.f32.mrf.mxu0
      %v2006 = vadd.f32 %v1845, %v2005
      %v2007 = vpop.f32.mrf.mxu0
      %2008 = vmatprep.mubr.bf16.mxu0 %v825
      %2009 = vmatmul.mubr.bf16.gmra.mxu0 %v1114
      %v2010 = vpop.f32.mrf.mxu0
      %v2011 = vadd.f32 %v1850, %v2010
      %v2012 = vpop.f32.mrf.mxu0
      %v2013 = vpop.f32.mrf.mxu0
      %v2014 = vadd.f32 %v1853, %v2013
      %v2015 = vpop.f32.mrf.mxu0
      %2016 = vmatprep.mubr.bf16.mxu0 %v826
      %2017 = vmatmul.mubr.bf16.gmra.mxu0 %v1117
      %v2018 = vpop.f32.mrf.mxu0
      %v2019 = vadd.f32 %v1858, %v2018
      %v2020 = vpop.f32.mrf.mxu0
      %v2021 = vpop.f32.mrf.mxu0
      %v2022 = vadd.f32 %v1861, %v2021
      %v2023 = vpop.f32.mrf.mxu0
      %2024 = vmatprep.mubr.bf16.mxu0 %v827
      %2025 = vmatmul.mubr.bf16.gmra.mxu0 %v1120
      %v2026 = vpop.f32.mrf.mxu0
      %v2027 = vadd.f32 %v1866, %v2026
      %v2028 = vpop.f32.mrf.mxu0
      %v2029 = vpop.f32.mrf.mxu0
      %v2030 = vadd.f32 %v1869, %v2029
      %v2031 = vpop.f32.mrf.mxu0
      %2032 = vmatprep.mubr.bf16.mxu0 %v828
      %2033 = vmatmul.mubr.bf16.gmra.mxu0 %v1123
      %v2034 = vpop.f32.mrf.mxu0
      %v2035 = vadd.f32 %v1874, %v2034
      %v2036 = vpop.f32.mrf.mxu0
      %v2037 = vpop.f32.mrf.mxu0
      %v2038 = vadd.f32 %v1877, %v2037
      %v2039 = vpop.f32.mrf.mxu0
      %2040 = vmatprep.mubr.bf16.mxu0 %v829
      %2041 = vmatmul.mubr.bf16.gmra.mxu0 %v1126
      %v2042 = vpop.f32.mrf.mxu0
      %v2043 = vadd.f32 %v1882, %v2042
      %v2044 = vpop.f32.mrf.mxu0
      %v2045 = vpop.f32.mrf.mxu0
      %v2046 = vadd.f32 %v1885, %v2045
      %v2047 = vpop.f32.mrf.mxu0
      %2048 = vmatprep.mubr.bf16.mxu0 %v830
      %2049 = vmatmul.mubr.bf16.gmra.mxu0 %v1129
      %v2050 = vpop.f32.mrf.mxu0
      %v2051 = vadd.f32 %v1890, %v2050
      %v2052 = vpop.f32.mrf.mxu0
      %v2053 = vpop.f32.mrf.mxu0
      %v2054 = vadd.f32 %v1893, %v2053
      %v2055 = vpop.f32.mrf.mxu0
      %2056 = vmatprep.mubr.bf16.mxu0 %v831
      %2057 = vmatmul.mubr.bf16.gmra.mxu0 %v1132
      %v2058 = vpop.f32.mrf.mxu0
      %v2059 = vadd.f32 %v1898, %v2058
      %v2060 = vpop.f32.mrf.mxu0
      %v2061 = vpop.f32.mrf.mxu0
      %v2062 = vadd.f32 %v1901, %v2061
      %v2063 = vpop.f32.mrf.mxu0
      %2064 = vmatprep.mubr.bf16.mxu0 %v832
      %2065 = vmatmul.mubr.bf16.gmra.mxu0 %v1135
      %v2066 = vpop.f32.mrf.mxu0
      %v2067 = vadd.f32 %v1906, %v2066
      %v2068 = vpop.f32.mrf.mxu0
      %v2069 = vpop.f32.mrf.mxu0
      %v2070 = vadd.f32 %v1909, %v2069
      %v2071 = vpop.f32.mrf.mxu0
      %2072 = vmatprep.mubr.bf16.mxu0 %v833
      %2073 = vmatmul.mubr.bf16.gmra.mxu0 %v1138
      %v2074 = vpop.f32.mrf.mxu0
      %v2075 = vadd.f32 %v1914, %v2074
      %v2076 = vpop.f32.mrf.mxu0
      %v2077 = vpop.f32.mrf.mxu0
      %v2078 = vadd.f32 %v1917, %v2077
      %v2079 = vpop.f32.mrf.mxu0
      %2080 = vmatprep.mubr.bf16.mxu0 %v834
      %2081 = vmatmul.mubr.bf16.gmra.mxu0 %v1141
      %v2082 = vpop.f32.mrf.mxu0
      %v2083 = vadd.f32 %v1922, %v2082
      %v2084 = vpop.f32.mrf.mxu0
      %v2085 = vpop.f32.mrf.mxu0
      %v2086 = vadd.f32 %v1925, %v2085
      %v2087 = vpop.f32.mrf.mxu0
      %2088 = vmatprep.mubr.bf16.mxu0 %v835
      %2089 = vmatmul.mubr.bf16.gmra.mxu0 %v1144
      %v2090 = vpop.f32.mrf.mxu0
      %v2091 = vadd.f32 %v1930, %v2090
      %v2092 = vpop.f32.mrf.mxu0
      %v2093 = vpop.f32.mrf.mxu0
      %v2094 = vadd.f32 %v1933, %v2093
      %v2095 = vpop.f32.mrf.mxu0
      %2096 = vdwg.mxu0
      %2097 = vmatprep.subr.bf16.mxu0 0
      %2098 = vmatpush1.bf16.msra.mxu0 %v1670
      %2099 = vmatprep.subr.bf16.mxu0 0
      %2100 = vmatpush1.bf16.msra.mxu0 %v1669
      %2101 = vmatprep.subr.bf16.mxu0 0
      %2102 = vmatpush1.bf16.msra.mxu0 %v1668
      %2103 = vmatprep.subr.bf16.mxu0 0
      %2104 = vmatpush1.bf16.msra.mxu0 %v1667
      %2105 = vmatprep.subr.bf16.mxu0 0
      %2106 = vmatpush1.bf16.msra.mxu0 %v1666
      %2107 = vmatprep.subr.bf16.mxu0 0
      %2108 = vmatpush1.bf16.msra.mxu0 %v1665
      %2109 = vmatprep.subr.bf16.mxu0 0
      %2110 = vmatpush1.bf16.msra.mxu0 %v1664
      %2111 = vmatprep.subr.bf16.mxu0 0
      %2112 = vmatpush1.bf16.msra.mxu0 %v1663
      %2113 = vmatprep.subr.bf16.mxu0 0
      %2114 = vmatpush2.bf16.msra.mxu0 %v1678
      %2115 = vmatprep.subr.bf16.mxu0 0
      %2116 = vmatpush2.bf16.msra.mxu0 %v1677
      %2117 = vmatprep.subr.bf16.mxu0 0
      %2118 = vmatpush2.bf16.msra.mxu0 %v1676
      %2119 = vmatprep.subr.bf16.mxu0 0
      %2120 = vmatpush2.bf16.msra.mxu0 %v1675
      %2121 = vmatprep.subr.bf16.mxu0 0
      %2122 = vmatpush2.bf16.msra.mxu0 %v1674
      %2123 = vmatprep.subr.bf16.mxu0 0
      %2124 = vmatpush2.bf16.msra.mxu0 %v1673
      %2125 = vmatprep.subr.bf16.mxu0 0
      %2126 = vmatpush2.bf16.msra.mxu0 %v1672
      %2127 = vmatprep.subr.bf16.mxu0 0
      %2128 = vmatpush2.bf16.msra.mxu0 %v1671
      %2129 = vmatprep.mubr.bf16.mxu0 %v1102
      %2130 = vmatmul.mubr.bf16.gmra.mxu0 %v879
      %v2131 = vpop.f32.mrf.mxu0
      %v2132 = vadd.f32 %v1971, %v2131
      %v2133 = vpop.f32.mrf.mxu0
      %v2134 = vpop.f32.mrf.mxu0
      %v2135 = vadd.f32 %v1974, %v2134
      %v2136 = vpop.f32.mrf.mxu0
      %2137 = vmatprep.mubr.bf16.mxu0 %v1105
      %2138 = vmatmul.mubr.bf16.gmra.mxu0 %v891
      %v2139 = vpop.f32.mrf.mxu0
      %v2140 = vadd.f32 %v1979, %v2139
      %v2141 = vpop.f32.mrf.mxu0
      %v2142 = vpop.f32.mrf.mxu0
      %v2143 = vadd.f32 %v1982, %v2142
      %v2144 = vpop.f32.mrf.mxu0
      %2145 = vmatprep.mubr.bf16.mxu0 %v1108
      %2146 = vmatmul.mubr.bf16.gmra.mxu0 %v903
      %v2147 = vpop.f32.mrf.mxu0
      %v2148 = vadd.f32 %v1987, %v2147
      %v2149 = vpop.f32.mrf.mxu0
      %v2150 = vpop.f32.mrf.mxu0
      %v2151 = vadd.f32 %v1990, %v2150
      %v2152 = vpop.f32.mrf.mxu0
      %2153 = vmatprep.mubr.bf16.mxu0 %v1111
      %2154 = vmatmul.mubr.bf16.gmra.mxu0 %v915
      %v2155 = vpop.f32.mrf.mxu0
      %v2156 = vadd.f32 %v1995, %v2155
      %v2157 = vpop.f32.mrf.mxu0
      %v2158 = vpop.f32.mrf.mxu0
      %v2159 = vadd.f32 %v1998, %v2158
      %v2160 = vpop.f32.mrf.mxu0
      %2161 = vmatprep.mubr.bf16.mxu0 %v1114
      %2162 = vmatmul.mubr.bf16.gmra.mxu0 %v927
      %v2163 = vpop.f32.mrf.mxu0
      %v2164 = vadd.f32 %v2003, %v2163
      %v2165 = vpop.f32.mrf.mxu0
      %v2166 = vpop.f32.mrf.mxu0
      %v2167 = vadd.f32 %v2006, %v2166
      %v2168 = vpop.f32.mrf.mxu0
      %2169 = vmatprep.mubr.bf16.mxu0 %v1117
      %2170 = vmatmul.mubr.bf16.gmra.mxu0 %v939
      %v2171 = vpop.f32.mrf.mxu0
      %v2172 = vadd.f32 %v2011, %v2171
      %v2173 = vpop.f32.mrf.mxu0
      %v2174 = vpop.f32.mrf.mxu0
      %v2175 = vadd.f32 %v2014, %v2174
      %v2176 = vpop.f32.mrf.mxu0
      %2177 = vmatprep.mubr.bf16.mxu0 %v1120
      %2178 = vmatmul.mubr.bf16.gmra.mxu0 %v951
      %v2179 = vpop.f32.mrf.mxu0
      %v2180 = vadd.f32 %v2019, %v2179
      %v2181 = vpop.f32.mrf.mxu0
      %v2182 = vpop.f32.mrf.mxu0
      %v2183 = vadd.f32 %v2022, %v2182
      %v2184 = vpop.f32.mrf.mxu0
      %2185 = vmatprep.mubr.bf16.mxu0 %v1123
      %2186 = vmatmul.mubr.bf16.gmra.mxu0 %v963
      %v2187 = vpop.f32.mrf.mxu0
      %v2188 = vadd.f32 %v2027, %v2187
      %v2189 = vpop.f32.mrf.mxu0
      %v2190 = vpop.f32.mrf.mxu0
      %v2191 = vadd.f32 %v2030, %v2190
      %v2192 = vpop.f32.mrf.mxu0
      %2193 = vmatprep.mubr.bf16.mxu0 %v1126
      %2194 = vmatmul.mubr.bf16.gmra.mxu0 %v975
      %v2195 = vpop.f32.mrf.mxu0
      %v2196 = vadd.f32 %v2035, %v2195
      %v2197 = vpop.f32.mrf.mxu0
      %v2198 = vpop.f32.mrf.mxu0
      %v2199 = vadd.f32 %v2038, %v2198
      %v2200 = vpop.f32.mrf.mxu0
      %2201 = vmatprep.mubr.bf16.mxu0 %v1129
      %2202 = vmatmul.mubr.bf16.gmra.mxu0 %v987
      %v2203 = vpop.f32.mrf.mxu0
      %v2204 = vadd.f32 %v2043, %v2203
      %v2205 = vpop.f32.mrf.mxu0
      %v2206 = vpop.f32.mrf.mxu0
      %v2207 = vadd.f32 %v2046, %v2206
      %v2208 = vpop.f32.mrf.mxu0
      %2209 = vmatprep.mubr.bf16.mxu0 %v1132
      %2210 = vmatmul.mubr.bf16.gmra.mxu0 %v999
      %v2211 = vpop.f32.mrf.mxu0
      %v2212 = vadd.f32 %v2051, %v2211
      %v2213 = vpop.f32.mrf.mxu0
      %v2214 = vpop.f32.mrf.mxu0
      %v2215 = vadd.f32 %v2054, %v2214
      %v2216 = vpop.f32.mrf.mxu0
      %2217 = vmatprep.mubr.bf16.mxu0 %v1135
      %2218 = vmatmul.mubr.bf16.gmra.mxu0 %v1011
      %v2219 = vpop.f32.mrf.mxu0
      %v2220 = vadd.f32 %v2059, %v2219
      %v2221 = vpop.f32.mrf.mxu0
      %v2222 = vpop.f32.mrf.mxu0
      %v2223 = vadd.f32 %v2062, %v2222
      %v2224 = vpop.f32.mrf.mxu0
      %2225 = vmatprep.mubr.bf16.mxu0 %v1138
      %2226 = vmatmul.mubr.bf16.gmra.mxu0 %v1023
      %v2227 = vpop.f32.mrf.mxu0
      %v2228 = vadd.f32 %v2067, %v2227
      %v2229 = vpop.f32.mrf.mxu0
      %v2230 = vpop.f32.mrf.mxu0
      %v2231 = vadd.f32 %v2070, %v2230
      %v2232 = vpop.f32.mrf.mxu0
      %2233 = vmatprep.mubr.bf16.mxu0 %v1141
      %2234 = vmatmul.mubr.bf16.gmra.mxu0 %v1035
      %v2235 = vpop.f32.mrf.mxu0
      %v2236 = vadd.f32 %v2075, %v2235
      %v2237 = vpop.f32.mrf.mxu0
      %v2238 = vpop.f32.mrf.mxu0
      %v2239 = vadd.f32 %v2078, %v2238
      %v2240 = vpop.f32.mrf.mxu0
      %2241 = vmatprep.mubr.bf16.mxu0 %v1144
      %2242 = vmatmul.mubr.bf16.gmra.mxu0 %v1047
      %v2243 = vpop.f32.mrf.mxu0
      %v2244 = vadd.f32 %v2083, %v2243
      %v2245 = vpop.f32.mrf.mxu0
      %v2246 = vpop.f32.mrf.mxu0
      %v2247 = vadd.f32 %v2086, %v2246
      %v2248 = vpop.f32.mrf.mxu0
      %2249 = vmatprep.mubr.bf16.mxu0 %v1178
      %2250 = vmatmul.mubr.bf16.gmra.mxu0 %v1172
      %v2251 = vpop.f32.mrf.mxu0
      %v2252 = vadd.f32 %v2091, %v2251
      %v2253 = vpop.f32.mrf.mxu0
      %v2254 = vpop.f32.mrf.mxu0
      %v2255 = vadd.f32 %v2094, %v2254
      %v2256 = vpop.f32.mrf.mxu0
      %2257 = vdwg.mxu0
      %2258 = vmatprep.subr.bf16.mxu0 0
      %2259 = vmatpush1.bf16.msra.mxu0 %v1686
      %2260 = vmatprep.subr.bf16.mxu0 0
      %2261 = vmatpush1.bf16.msra.mxu0 %v1685
      %2262 = vmatprep.subr.bf16.mxu0 0
      %2263 = vmatpush1.bf16.msra.mxu0 %v1684
      %2264 = vmatprep.subr.bf16.mxu0 0
      %2265 = vmatpush1.bf16.msra.mxu0 %v1683
      %2266 = vmatprep.subr.bf16.mxu0 0
      %2267 = vmatpush1.bf16.msra.mxu0 %v1682
      %2268 = vmatprep.subr.bf16.mxu0 0
      %2269 = vmatpush1.bf16.msra.mxu0 %v1681
      %2270 = vmatprep.subr.bf16.mxu0 0
      %2271 = vmatpush1.bf16.msra.mxu0 %v1680
      %2272 = vmatprep.subr.bf16.mxu0 0
      %2273 = vmatpush1.bf16.msra.mxu0 %v1679
      %2274 = vmatprep.subr.bf16.mxu0 0
      %2275 = vmatpush2.bf16.msra.mxu0 %v1694
      %2276 = vmatprep.subr.bf16.mxu0 0
      %2277 = vmatpush2.bf16.msra.mxu0 %v1693
      %2278 = vmatprep.subr.bf16.mxu0 0
      %2279 = vmatpush2.bf16.msra.mxu0 %v1692
      %2280 = vmatprep.subr.bf16.mxu0 0
      %2281 = vmatpush2.bf16.msra.mxu0 %v1691
      %2282 = vmatprep.subr.bf16.mxu0 0
      %2283 = vmatpush2.bf16.msra.mxu0 %v1690
      %2284 = vmatprep.subr.bf16.mxu0 0
      %2285 = vmatpush2.bf16.msra.mxu0 %v1689
      %2286 = vmatprep.subr.bf16.mxu0 0
      %2287 = vmatpush2.bf16.msra.mxu0 %v1688
      %2288 = vmatprep.subr.bf16.mxu0 0
      %2289 = vmatpush2.bf16.msra.mxu0 %v1687
      %2290 = vmatprep.mubr.bf16.mxu0 %v891
      %2291 = vmatmul.mubr.bf16.gmra.mxu0 %v821
      %v2292 = vpop.f32.mrf.mxu0
      %v2293 = vadd.f32 %v2132, %v2292
      %v2294 = vpop.f32.mrf.mxu0
      %v2295 = vpop.f32.mrf.mxu0
      %v2296 = vadd.f32 %v2135, %v2295
      %v2297 = vpop.f32.mrf.mxu0
      %2298 = vmatprep.mubr.bf16.mxu0 %v903
      %2299 = vmatmul.mubr.bf16.gmra.mxu0 %v822
      %v2300 = vpop.f32.mrf.mxu0
      %v2301 = vadd.f32 %v2140, %v2300
      %v2302 = vpop.f32.mrf.mxu0
      %v2303 = vpop.f32.mrf.mxu0
      %v2304 = vadd.f32 %v2143, %v2303
      %v2305 = vpop.f32.mrf.mxu0
      %2306 = vmatprep.mubr.bf16.mxu0 %v915
      %2307 = vmatmul.mubr.bf16.gmra.mxu0 %v823
      %v2308 = vpop.f32.mrf.mxu0
      %v2309 = vadd.f32 %v2148, %v2308
      %v2310 = vpop.f32.mrf.mxu0
      %v2311 = vpop.f32.mrf.mxu0
      %v2312 = vadd.f32 %v2151, %v2311
      %v2313 = vpop.f32.mrf.mxu0
      %2314 = vmatprep.mubr.bf16.mxu0 %v927
      %2315 = vmatmul.mubr.bf16.gmra.mxu0 %v824
      %v2316 = vpop.f32.mrf.mxu0
      %v2317 = vadd.f32 %v2156, %v2316
      %v2318 = vpop.f32.mrf.mxu0
      %v2319 = vpop.f32.mrf.mxu0
      %v2320 = vadd.f32 %v2159, %v2319
      %v2321 = vpop.f32.mrf.mxu0
      %2322 = vmatprep.mubr.bf16.mxu0 %v939
      %2323 = vmatmul.mubr.bf16.gmra.mxu0 %v825
      %v2324 = vpop.f32.mrf.mxu0
      %v2325 = vadd.f32 %v2164, %v2324
      %v2326 = vpop.f32.mrf.mxu0
      %v2327 = vpop.f32.mrf.mxu0
      %v2328 = vadd.f32 %v2167, %v2327
      %v2329 = vpop.f32.mrf.mxu0
      %2330 = vmatprep.mubr.bf16.mxu0 %v951
      %2331 = vmatmul.mubr.bf16.gmra.mxu0 %v826
      %v2332 = vpop.f32.mrf.mxu0
      %v2333 = vadd.f32 %v2172, %v2332
      %v2334 = vpop.f32.mrf.mxu0
      %v2335 = vpop.f32.mrf.mxu0
      %v2336 = vadd.f32 %v2175, %v2335
      %v2337 = vpop.f32.mrf.mxu0
      %2338 = vmatprep.mubr.bf16.mxu0 %v963
      %2339 = vmatmul.mubr.bf16.gmra.mxu0 %v827
      %v2340 = vpop.f32.mrf.mxu0
      %v2341 = vadd.f32 %v2180, %v2340
      %v2342 = vpop.f32.mrf.mxu0
      %v2343 = vpop.f32.mrf.mxu0
      %v2344 = vadd.f32 %v2183, %v2343
      %v2345 = vpop.f32.mrf.mxu0
      %2346 = vmatprep.mubr.bf16.mxu0 %v975
      %2347 = vmatmul.mubr.bf16.gmra.mxu0 %v828
      %v2348 = vpop.f32.mrf.mxu0
      %v2349 = vadd.f32 %v2188, %v2348
      %v2350 = vpop.f32.mrf.mxu0
      %v2351 = vpop.f32.mrf.mxu0
      %v2352 = vadd.f32 %v2191, %v2351
      %v2353 = vpop.f32.mrf.mxu0
      %2354 = vmatprep.mubr.bf16.mxu0 %v987
      %2355 = vmatmul.mubr.bf16.gmra.mxu0 %v829
      %v2356 = vpop.f32.mrf.mxu0
      %v2357 = vadd.f32 %v2196, %v2356
      %v2358 = vpop.f32.mrf.mxu0
      %v2359 = vpop.f32.mrf.mxu0
      %v2360 = vadd.f32 %v2199, %v2359
      %v2361 = vpop.f32.mrf.mxu0
      %2362 = vmatprep.mubr.bf16.mxu0 %v999
      %2363 = vmatmul.mubr.bf16.gmra.mxu0 %v830
      %v2364 = vpop.f32.mrf.mxu0
      %v2365 = vadd.f32 %v2204, %v2364
      %v2366 = vpop.f32.mrf.mxu0
      %v2367 = vpop.f32.mrf.mxu0
      %v2368 = vadd.f32 %v2207, %v2367
      %v2369 = vpop.f32.mrf.mxu0
      %2370 = vmatprep.mubr.bf16.mxu0 %v1011
      %2371 = vmatmul.mubr.bf16.gmra.mxu0 %v831
      %v2372 = vpop.f32.mrf.mxu0
      %v2373 = vadd.f32 %v2212, %v2372
      %v2374 = vpop.f32.mrf.mxu0
      %v2375 = vpop.f32.mrf.mxu0
      %v2376 = vadd.f32 %v2215, %v2375
      %v2377 = vpop.f32.mrf.mxu0
      %2378 = vmatprep.mubr.bf16.mxu0 %v1023
      %2379 = vmatmul.mubr.bf16.gmra.mxu0 %v832
      %v2380 = vpop.f32.mrf.mxu0
      %v2381 = vadd.f32 %v2220, %v2380
      %v2382 = vpop.f32.mrf.mxu0
      %v2383 = vpop.f32.mrf.mxu0
      %v2384 = vadd.f32 %v2223, %v2383
      %v2385 = vpop.f32.mrf.mxu0
      %2386 = vmatprep.mubr.bf16.mxu0 %v1035
      %2387 = vmatmul.mubr.bf16.gmra.mxu0 %v833
      %v2388 = vpop.f32.mrf.mxu0
      %v2389 = vadd.f32 %v2228, %v2388
      %v2390 = vpop.f32.mrf.mxu0
      %v2391 = vpop.f32.mrf.mxu0
      %v2392 = vadd.f32 %v2231, %v2391
      %v2393 = vpop.f32.mrf.mxu0
      %2394 = vmatprep.mubr.bf16.mxu0 %v1047
      %2395 = vmatmul.mubr.bf16.gmra.mxu0 %v834
      %v2396 = vpop.f32.mrf.mxu0
      %v2397 = vadd.f32 %v2236, %v2396
      %v2398 = vpop.f32.mrf.mxu0
      %v2399 = vpop.f32.mrf.mxu0
      %v2400 = vadd.f32 %v2239, %v2399
      %v2401 = vpop.f32.mrf.mxu0
      %2402 = vmatprep.mubr.bf16.mxu0 %v1172
      %2403 = vmatmul.mubr.bf16.gmra.mxu0 %v835
      %v2404 = vpop.f32.mrf.mxu0
      %v2405 = vadd.f32 %v2244, %v2404
      %v2406 = vpop.f32.mrf.mxu0
      %v2407 = vpop.f32.mrf.mxu0
      %v2408 = vadd.f32 %v2247, %v2407
      %v2409 = vpop.f32.mrf.mxu0
      %2410 = vmatprep.mubr.bf16.mxu0 %v1191
      %2411 = vmatmul.mubr.bf16.gmra.mxu0 %v836
      %v2412 = vpop.f32.mrf.mxu0
      %v2413 = vadd.f32 %v2252, %v2412
      %v2414 = vpop.f32.mrf.mxu0
      %v2415 = vpop.f32.mrf.mxu0
      %v2416 = vadd.f32 %v2255, %v2415
      %v2417 = vpop.f32.mrf.mxu0
      %2418 = vdwg.mxu0
      %2419 = vmatprep.subr.bf16.mxu0 0
      %2420 = vmatpush1.bf16.msra.mxu0 %v1702
      %2421 = vmatprep.subr.bf16.mxu0 0
      %2422 = vmatpush1.bf16.msra.mxu0 %v1701
      %2423 = vmatprep.subr.bf16.mxu0 0
      %2424 = vmatpush1.bf16.msra.mxu0 %v1700
      %2425 = vmatprep.subr.bf16.mxu0 0
      %2426 = vmatpush1.bf16.msra.mxu0 %v1699
      %2427 = vmatprep.subr.bf16.mxu0 0
      %2428 = vmatpush1.bf16.msra.mxu0 %v1698
      %2429 = vmatprep.subr.bf16.mxu0 0
      %2430 = vmatpush1.bf16.msra.mxu0 %v1697
      %2431 = vmatprep.subr.bf16.mxu0 0
      %2432 = vmatpush1.bf16.msra.mxu0 %v1696
      %2433 = vmatprep.subr.bf16.mxu0 0
      %2434 = vmatpush1.bf16.msra.mxu0 %v1695
      %2435 = vmatprep.subr.bf16.mxu0 0
      %2436 = vmatpush2.bf16.msra.mxu0 0
      %2437 = vmatprep.subr.bf16.mxu0 0
      %2438 = vmatpush2.bf16.msra.mxu0 0
      %2439 = vmatprep.subr.bf16.mxu0 0
      %2440 = vmatpush2.bf16.msra.mxu0 0
      %2441 = vmatprep.subr.bf16.mxu0 0
      %2442 = vmatpush2.bf16.msra.mxu0 0
      %2443 = vmatprep.subr.bf16.mxu0 0
      %2444 = vmatpush2.bf16.msra.mxu0 0
      %2445 = vmatprep.subr.bf16.mxu0 0
      %2446 = vmatpush2.bf16.msra.mxu0 0
      %2447 = vmatprep.subr.bf16.mxu0 0
      %2448 = vmatpush2.bf16.msra.mxu0 0
      %2449 = vmatprep.subr.bf16.mxu0 0
      %2450 = vmatpush2.bf16.msra.mxu0 0
      %2451 = vmatprep.mubr.bf16.mxu0 0
      %2452 = vmatmul.mubr.bf16.gmra.mxu0 %v1105
      %v2453 = vpop.f32.mrf.mxu0
      %v2454 = vadd.f32 %v2293, %v2453
      %v2455 = vpop.f32.mrf.mxu0
      %v2456 = vpop.f32.mrf.mxu0
      %v2457 = vadd.f32 %v2296, %v2456
      %v2458 = vpop.f32.mrf.mxu0
      %2459 = vmatprep.mubr.bf16.mxu0 0
      %2460 = vmatmul.mubr.bf16.gmra.mxu0 %v1108
      %v2461 = vpop.f32.mrf.mxu0
      %v2462 = vadd.f32 %v2301, %v2461
      %v2463 = vpop.f32.mrf.mxu0
      %v2464 = vpop.f32.mrf.mxu0
      %v2465 = vadd.f32 %v2304, %v2464
      %v2466 = vpop.f32.mrf.mxu0
      %2467 = vmatprep.mubr.bf16.mxu0 0
      %2468 = vmatmul.mubr.bf16.gmra.mxu0 %v1111
      %v2469 = vpop.f32.mrf.mxu0
      %v2470 = vadd.f32 %v2309, %v2469
      %v2471 = vpop.f32.mrf.mxu0
      %v2472 = vpop.f32.mrf.mxu0
      %v2473 = vadd.f32 %v2312, %v2472
      %v2474 = vpop.f32.mrf.mxu0
      %2475 = vmatprep.mubr.bf16.mxu0 0
      %2476 = vmatmul.mubr.bf16.gmra.mxu0 %v1114
      %v2477 = vpop.f32.mrf.mxu0
      %v2478 = vadd.f32 %v2317, %v2477
      %v2479 = vpop.f32.mrf.mxu0
      %v2480 = vpop.f32.mrf.mxu0
      %v2481 = vadd.f32 %v2320, %v2480
      %v2482 = vpop.f32.mrf.mxu0
      %2483 = vmatprep.mubr.bf16.mxu0 0
      %2484 = vmatmul.mubr.bf16.gmra.mxu0 %v1117
      %v2485 = vpop.f32.mrf.mxu0
      %v2486 = vadd.f32 %v2325, %v2485
      %v2487 = vpop.f32.mrf.mxu0
      %v2488 = vpop.f32.mrf.mxu0
      %v2489 = vadd.f32 %v2328, %v2488
      %v2490 = vpop.f32.mrf.mxu0
      %2491 = vmatprep.mubr.bf16.mxu0 0
      %2492 = vmatmul.mubr.bf16.gmra.mxu0 %v1120
      %v2493 = vpop.f32.mrf.mxu0
      %v2494 = vadd.f32 %v2333, %v2493
      %v2495 = vpop.f32.mrf.mxu0
      %v2496 = vpop.f32.mrf.mxu0
      %v2497 = vadd.f32 %v2336, %v2496
      %v2498 = vpop.f32.mrf.mxu0
      %2499 = vmatprep.mubr.bf16.mxu0 0
      %2500 = vmatmul.mubr.bf16.gmra.mxu0 %v1123
      %v2501 = vpop.f32.mrf.mxu0
      %v2502 = vadd.f32 %v2341, %v2501
      %v2503 = vpop.f32.mrf.mxu0
      %v2504 = vpop.f32.mrf.mxu0
      %v2505 = vadd.f32 %v2344, %v2504
      %v2506 = vpop.f32.mrf.mxu0
      %2507 = vmatprep.mubr.bf16.mxu0 0
      %2508 = vmatmul.mubr.bf16.gmra.mxu0 %v1126
      %v2509 = vpop.f32.mrf.mxu0
      %v2510 = vadd.f32 %v2349, %v2509
      %v2511 = vpop.f32.mrf.mxu0
      %v2512 = vpop.f32.mrf.mxu0
      %v2513 = vadd.f32 %v2352, %v2512
      %v2514 = vpop.f32.mrf.mxu0
      %2515 = vmatprep.mubr.bf16.mxu0 0
      %2516 = vmatmul.mubr.bf16.gmra.mxu0 %v1129
      %v2517 = vpop.f32.mrf.mxu0
      %v2518 = vadd.f32 %v2357, %v2517
      %v2519 = vpop.f32.mrf.mxu0
      %v2520 = vpop.f32.mrf.mxu0
      %v2521 = vadd.f32 %v2360, %v2520
      %v2522 = vpop.f32.mrf.mxu0
      %2523 = vmatprep.mubr.bf16.mxu0 0
      %2524 = vmatmul.mubr.bf16.gmra.mxu0 %v1132
      %v2525 = vpop.f32.mrf.mxu0
      %v2526 = vadd.f32 %v2365, %v2525
      %v2527 = vpop.f32.mrf.mxu0
      %v2528 = vpop.f32.mrf.mxu0
      %v2529 = vadd.f32 %v2368, %v2528
      %v2530 = vpop.f32.mrf.mxu0
      %2531 = vmatprep.mubr.bf16.mxu0 0
      %2532 = vmatmul.mubr.bf16.gmra.mxu0 %v1135
      %v2533 = vpop.f32.mrf.mxu0
      %v2534 = vadd.f32 %v2373, %v2533
      %v2535 = vpop.f32.mrf.mxu0
      %v2536 = vpop.f32.mrf.mxu0
      %v2537 = vadd.f32 %v2376, %v2536
      %v2538 = vpop.f32.mrf.mxu0
      %2539 = vmatprep.mubr.bf16.mxu0 0
      %2540 = vmatmul.mubr.bf16.gmra.mxu0 %v1138
      %v2541 = vpop.f32.mrf.mxu0
      %v2542 = vadd.f32 %v2381, %v2541
      %v2543 = vpop.f32.mrf.mxu0
      %v2544 = vpop.f32.mrf.mxu0
      %v2545 = vadd.f32 %v2384, %v2544
      %v2546 = vpop.f32.mrf.mxu0
      %2547 = vmatprep.mubr.bf16.mxu0 0
      %2548 = vmatmul.mubr.bf16.gmra.mxu0 %v1141
      %v2549 = vpop.f32.mrf.mxu0
      %v2550 = vadd.f32 %v2389, %v2549
      %v2551 = vpop.f32.mrf.mxu0
      %v2552 = vpop.f32.mrf.mxu0
      %v2553 = vadd.f32 %v2392, %v2552
      %v2554 = vpop.f32.mrf.mxu0
      %2555 = vmatprep.mubr.bf16.mxu0 0
      %2556 = vmatmul.mubr.bf16.gmra.mxu0 %v1144
      %v2557 = vpop.f32.mrf.mxu0
      %v2558 = vadd.f32 %v2397, %v2557
      %v2559 = vpop.f32.mrf.mxu0
      %v2560 = vpop.f32.mrf.mxu0
      %v2561 = vadd.f32 %v2400, %v2560
      %v2562 = vpop.f32.mrf.mxu0
      %2563 = vmatprep.mubr.bf16.mxu0 0
      %2564 = vmatmul.mubr.bf16.gmra.mxu0 %v1178
      %v2565 = vpop.f32.mrf.mxu0
      %v2566 = vadd.f32 %v2405, %v2565
      %v2567 = vpop.f32.mrf.mxu0
      %v2568 = vpop.f32.mrf.mxu0
      %v2569 = vadd.f32 %v2408, %v2568
      %v2570 = vpop.f32.mrf.mxu0
      %2571 = vmatprep.mubr.bf16.mxu0 0
      %2572 = vmatmul.mubr.bf16.gmra.mxu0 %v1197
      %v2573 = vpop.f32.mrf.mxu0
      %v2574 = vadd.f32 %v2413, %v2573
      %v2575 = vpop.f32.mrf.mxu0
      %v2576 = vpop.f32.mrf.mxu0
      %v2577 = vadd.f32 %v2416, %v2576
      %v2578 = vpop.f32.mrf.mxu0
      %2579 = vdwg.mxu0
      %v2580 = vpack.c.bf16 %v2457, %v2454
      %v2581 = vpack.c.bf16 %v2465, %v2462
      %v2582 = vpack.c.bf16 %v2473, %v2470
      %v2583 = vpack.c.bf16 %v2481, %v2478
      %v2584 = vpack.c.bf16 %v2489, %v2486
      %v2585 = vpack.c.bf16 %v2497, %v2494
      %v2586 = vpack.c.bf16 %v2505, %v2502
      %v2587 = vpack.c.bf16 %v2513, %v2510
      %v2588 = vpack.c.bf16 %v2521, %v2518
      %v2589 = vpack.c.bf16 %v2529, %v2526
      %v2590 = vpack.c.bf16 %v2537, %v2534
      %v2591 = vpack.c.bf16 %v2545, %v2542
      %v2592 = vpack.c.bf16 %v2553, %v2550
      %v2593 = vpack.c.bf16 %v2561, %v2558
      %v2594 = vpack.c.bf16 %v2569, %v2566
      %v2595 = vpack.c.bf16 %v2577, %v2574
      %v2612 = vunpack.c.l.b16 %v2580
      %v2613 = vunpack.c.h.b16 %v2580
      %v2614 = vunpack.c.l.b16 %v2581
      %v2615 = vunpack.c.h.b16 %v2581
      %v2616 = vunpack.c.l.b16 %v2582
      %v2617 = vunpack.c.h.b16 %v2582
      %v2618 = vunpack.c.l.b16 %v2583
      %v2619 = vunpack.c.h.b16 %v2583
      %v2620 = vunpack.c.l.b16 %v2584
      %v2621 = vunpack.c.h.b16 %v2584
      %v2622 = vunpack.c.l.b16 %v2585
      %v2623 = vunpack.c.h.b16 %v2585
      %v2624 = vunpack.c.l.b16 %v2586
      %v2625 = vunpack.c.h.b16 %v2586
      %v2626 = vunpack.c.l.b16 %v2587
      %v2627 = vunpack.c.h.b16 %v2587
      %v2628 = vunpack.c.l.b16 %v2588
      %v2629 = vunpack.c.h.b16 %v2588
      %v2630 = vunpack.c.l.b16 %v2589
      %v2631 = vunpack.c.h.b16 %v2589
      %v2632 = vunpack.c.l.b16 %v2590
      %v2633 = vunpack.c.h.b16 %v2590
      %v2634 = vunpack.c.l.b16 %v2591
      %v2635 = vunpack.c.h.b16 %v2591
      %v2636 = vunpack.c.l.b16 %v2592
      %v2637 = vunpack.c.h.b16 %v2592
      %v2638 = vunpack.c.l.b16 %v2593
      %v2639 = vunpack.c.h.b16 %v2593
      %v2640 = vunpack.c.l.b16 %v2594
      %v2641 = vunpack.c.h.b16 %v2594
      %v2642 = vunpack.c.l.b16 %v2595
      %v2643 = vunpack.c.h.b16 %v2595
      %v2644 = vpack.c.b16 %v2612, %v2612
      %v2645 = vpack.c.b16 %v2613, %v2613
      %v2646 = vpack.c.b16 %v2614, %v2614
      %v2647 = vpack.c.b16 %v2615, %v2615
      %v2648 = vpack.c.b16 %v2616, %v2616
      %v2649 = vpack.c.b16 %v2617, %v2617
      %v2650 = vpack.c.b16 %v2618, %v2618
      %v2651 = vpack.c.b16 %v2619, %v2619
      %v2652 = vpack.c.b16 %v2620, %v2620
      %v2653 = vpack.c.b16 %v2621, %v2621
      %v2654 = vpack.c.b16 %v2622, %v2622
      %v2655 = vpack.c.b16 %v2623, %v2623
      %v2656 = vpack.c.b16 %v2624, %v2624
      %v2657 = vpack.c.b16 %v2625, %v2625
      %v2658 = vpack.c.b16 %v2626, %v2626
      %v2659 = vpack.c.b16 %v2627, %v2627
      %v2660 = vpack.c.b16 %v2628, %v2628
      %v2661 = vpack.c.b16 %v2629, %v2629
      %v2662 = vpack.c.b16 %v2630, %v2630
      %v2663 = vpack.c.b16 %v2631, %v2631
      %v2664 = vpack.c.b16 %v2632, %v2632
      %v2665 = vpack.c.b16 %v2633, %v2633
      %v2666 = vpack.c.b16 %v2634, %v2634
      %v2667 = vpack.c.b16 %v2635, %v2635
      %v2668 = vpack.c.b16 %v2636, %v2636
      %v2669 = vpack.c.b16 %v2637, %v2637
      %v2670 = vpack.c.b16 %v2638, %v2638
      %v2671 = vpack.c.b16 %v2639, %v2639
      %v2672 = vpack.c.b16 %v2640, %v2640
      %v2673 = vpack.c.b16 %v2641, %v2641
      %v2674 = vpack.c.b16 %v2642, %v2642
      %v2675 = vpack.c.b16 %v2643, %v2643
      %2708 = vst [vmem:[%s439] sm:$0xf] %v2644
      %2709 = vst [vmem:[%s439 + $0x4] sm:$0xf] %v2645
      %2710 = vst [vmem:[%s439 + $0x8] sm:$0xf] %v2646
      %2711 = vst [vmem:[%s439 + $0xc] sm:$0xf] %v2647
      %2712 = vst [vmem:[%s439 + $0x10] sm:$0xf] %v2648
      %2713 = vst [vmem:[%s439 + $0x14] sm:$0xf] %v2649
      %2714 = vst [vmem:[%s439 + $0x18] sm:$0xf] %v2650
      %2715 = vst [vmem:[%s439 + $0x1c] sm:$0xf] %v2651
      %2716 = vst [vmem:[%s439 + $0x20] sm:$0xf] %v2652
      %2717 = vst [vmem:[%s439 + $0x24] sm:$0xf] %v2653
      %2718 = vst [vmem:[%s439 + $0x28] sm:$0xf] %v2654
      %2719 = vst [vmem:[%s439 + $0x2c] sm:$0xf] %v2655
      %2720 = vst [vmem:[%s439 + $0x30] sm:$0xf] %v2656
      %2721 = vst [vmem:[%s439 + $0x34] sm:$0xf] %v2657
      %2722 = vst [vmem:[%s439 + $0x38] sm:$0xf] %v2658
      %2723 = vst [vmem:[%s439 + $0x3c] sm:$0xf] %v2659
      %2724 = vst [vmem:[%s439 + $0x40] sm:$0xf] %v2660
      %2725 = vst [vmem:[%s439 + $0x44] sm:$0xf] %v2661
      %2726 = vst [vmem:[%s439 + $0x48] sm:$0xf] %v2662
      %2727 = vst [vmem:[%s439 + $0x4c] sm:$0xf] %v2663
      %2728 = vst [vmem:[%s439 + $0x50] sm:$0xf] %v2664
      %2729 = vst [vmem:[%s439 + $0x54] sm:$0xf] %v2665
      %2730 = vst [vmem:[%s439 + $0x58] sm:$0xf] %v2666
      %2731 = vst [vmem:[%s439 + $0x5c] sm:$0xf] %v2667
      %2732 = vst [vmem:[%s439 + $0x60] sm:$0xf] %v2668
      %2733 = vst [vmem:[%s439 + $0x64] sm:$0xf] %v2669
      %2734 = vst [vmem:[%s439 + $0x68] sm:$0xf] %v2670
      %2735 = vst [vmem:[%s439 + $0x6c] sm:$0xf] %v2671
      %2736 = vst [vmem:[%s439 + $0x70] sm:$0xf] %v2672
      %2737 = vst [vmem:[%s439 + $0x74] sm:$0xf] %v2673
      %2738 = vst [vmem:[%s439 + $0x78] sm:$0xf] %v2674
      %2739 = vst [vmem:[%s439 + $0x7c] sm:$0xf] %v2675
      %v2740 = vadd.f32 %v2454, %v2457
      %v2741 = vadd.f32 %v2740, %v2462
      %v2742 = vadd.f32 %v2741, %v2465
      %v2743 = vadd.f32 %v2742, %v2470
      %v2744 = vadd.f32 %v2743, %v2473
      %v2745 = vadd.f32 %v2744, %v2478
      %v2746 = vadd.f32 %v2745, %v2481
      %v2747 = vadd.f32 %v2746, %v2486
      %v2748 = vadd.f32 %v2747, %v2489
      %v2749 = vadd.f32 %v2748, %v2494
      %v2750 = vadd.f32 %v2749, %v2497
      %v2751 = vadd.f32 %v2750, %v2502
      %v2752 = vadd.f32 %v2751, %v2505
      %v2753 = vadd.f32 %v2752, %v2510
      %v2754 = vadd.f32 %v2753, %v2513
      %v2755 = vadd.f32 %v2754, %v2518
      %v2756 = vadd.f32 %v2755, %v2521
      %v2757 = vadd.f32 %v2756, %v2526
      %v2758 = vadd.f32 %v2757, %v2529
      %v2759 = vadd.f32 %v2758, %v2534
      %v2760 = vadd.f32 %v2759, %v2537
      %v2761 = vadd.f32 %v2760, %v2542
      %v2762 = vadd.f32 %v2761, %v2545
      %v2763 = vadd.f32 %v2762, %v2550
      %v2764 = vadd.f32 %v2763, %v2553
      %v2765 = vadd.f32 %v2764, %v2558
      %v2766 = vadd.f32 %v2765, %v2561
      %v2767 = vadd.f32 %v2766, %v2566
      %v2768 = vadd.f32 %v2767, %v2569
      %v2769 = vadd.f32 %v2768, %v2574
      %v2770 = vadd.f32 %v2769, %v2577
      %v2771 = vrot.slane %v2770, 4
      %v2772 = vadd.f32 %v2770, %v2771
      %v2773 = vrot.slane %v2772, 2
      %v2774 = vadd.f32 %v2772, %v2773
      %v2775 = vrot.slane %v2774, 1
      %v2776 = vadd.f32 %v2774, %v2775
      %2777 = vst [vmem:[%s446] sm:$0x1] %v2776
      %v2778 = vmul.f32 %v2454, %v2454
      %v2779 = vmul.f32 %v2457, %v2457
      %v2780 = vmul.f32 %v2462, %v2462
      %v2781 = vmul.f32 %v2465, %v2465
      %v2782 = vmul.f32 %v2470, %v2470
      %v2783 = vmul.f32 %v2473, %v2473
      %v2784 = vmul.f32 %v2478, %v2478
      %v2785 = vmul.f32 %v2481, %v2481
      %v2786 = vmul.f32 %v2486, %v2486
      %v2787 = vmul.f32 %v2489, %v2489
      %v2788 = vmul.f32 %v2494, %v2494
      %v2789 = vmul.f32 %v2497, %v2497
      %v2790 = vmul.f32 %v2502, %v2502
      %v2791 = vmul.f32 %v2505, %v2505
      %v2792 = vmul.f32 %v2510, %v2510
      %v2793 = vmul.f32 %v2513, %v2513
      %v2794 = vmul.f32 %v2518, %v2518
      %v2795 = vmul.f32 %v2521, %v2521
      %v2796 = vmul.f32 %v2526, %v2526
      %v2797 = vmul.f32 %v2529, %v2529
      %v2798 = vmul.f32 %v2534, %v2534
      %v2799 = vmul.f32 %v2537, %v2537
      %v2800 = vmul.f32 %v2542, %v2542
      %v2801 = vmul.f32 %v2545, %v2545
      %v2802 = vmul.f32 %v2550, %v2550
      %v2803 = vmul.f32 %v2553, %v2553
      %v2804 = vmul.f32 %v2558, %v2558
      %v2805 = vmul.f32 %v2561, %v2561
      %v2806 = vmul.f32 %v2566, %v2566
      %v2807 = vmul.f32 %v2569, %v2569
      %v2808 = vmul.f32 %v2574, %v2574
      %v2809 = vmul.f32 %v2577, %v2577
      %v2810 = vadd.f32 %v2778, %v2779
      %v2811 = vadd.f32 %v2810, %v2780
      %v2812 = vadd.f32 %v2811, %v2781
      %v2813 = vadd.f32 %v2812, %v2782
      %v2814 = vadd.f32 %v2813, %v2783
      %v2815 = vadd.f32 %v2814, %v2784
      %v2816 = vadd.f32 %v2815, %v2785
      %v2817 = vadd.f32 %v2816, %v2786
      %v2818 = vadd.f32 %v2817, %v2787
      %v2819 = vadd.f32 %v2818, %v2788
      %v2820 = vadd.f32 %v2819, %v2789
      %v2821 = vadd.f32 %v2820, %v2790
      %v2822 = vadd.f32 %v2821, %v2791
      %v2823 = vadd.f32 %v2822, %v2792
      %v2824 = vadd.f32 %v2823, %v2793
      %v2825 = vadd.f32 %v2824, %v2794
      %v2826 = vadd.f32 %v2825, %v2795
      %v2827 = vadd.f32 %v2826, %v2796
      %v2828 = vadd.f32 %v2827, %v2797
      %v2829 = vadd.f32 %v2828, %v2798
      %v2830 = vadd.f32 %v2829, %v2799
      %v2831 = vadd.f32 %v2830, %v2800
      %v2832 = vadd.f32 %v2831, %v2801
      %v2833 = vadd.f32 %v2832, %v2802
      %v2834 = vadd.f32 %v2833, %v2803
      %v2835 = vadd.f32 %v2834, %v2804
      %v2836 = vadd.f32 %v2835, %v2805
      %v2837 = vadd.f32 %v2836, %v2806
      %v2838 = vadd.f32 %v2837, %v2807
      %v2839 = vadd.f32 %v2838, %v2808
      %v2840 = vadd.f32 %v2839, %v2809
      %v2841 = vrot.slane %v2840, 4
      %v2842 = vadd.f32 %v2840, %v2841
      %v2843 = vrot.slane %v2842, 2
      %v2844 = vadd.f32 %v2842, %v2843
      %v2845 = vrot.slane %v2844, 1
      %v2846 = vadd.f32 %v2844, %v2845
      %2847 = vst [vmem:[%s452] sm:$0x1] %v2846
      %s2848 = smul.u32 16, %s23
      %p2849 = scmp.lt.s32.totalorder %s22, 1
      %s2850 = scalar_select %p2849, %s22, 1
      %p2851 = scmp.lt.s32.totalorder %s2848, 15
      %s2852 = scalar_select %p2851, %s2848, 15
      %s2853 = smul.addr %s2852, 2
      %s2854 = smul.addr %s2850, 32
      %s2855 = sadd.s32 %s2853, %s2854
      %s2856 = smul.addr %s2855, 4
      %s2857 = scalar_lea.vmem %s4, %s2856
      %p2858 = scmp.lt.s32.totalorder %s22, 1
      %s2859 = scalar_select %p2858, %s22, 1
      %p2860 = scmp.lt.s32.totalorder %s23, 0
      %s2861 = scalar_select %p2860, %s23, 0
      %s2862 = sadd.s32 %s2861, %s2859
      %s2863 = scalar_lea.vmem %s5, %s2862
      %p2864 = scmp.lt.s32.totalorder %s22, 1
      %s2865 = scalar_select %p2864, %s22, 1
      %p2866 = scmp.lt.s32.totalorder %s23, 0
      %s2867 = scalar_select %p2866, %s23, 0
      %s2868 = sadd.s32 %s2867, %s2865
      %s2869 = scalar_lea.vmem %s6, %s2868
      // Predicated region
      $region37: #{residual_block_forward.3} parent=35 // pred_check
        %p2870 = pneg %p171
      $region38: #{residual_block_forward.3} parent=35 // pred_check_branch
        %2872 = sbr.rel (%p2870) target = $region40
      $region39: #{residual_block_forward.3} parent=35 // pred_region
        %s2873 = smul.u32 16, %s23
      $region40: #{residual_block_forward.3} parent=35 // pred_fallthru
        _
      // Predicated region
      $region41: #{residual_block_forward.3} parent=35 // pred_check
        %p2874 = pneg %p199
      $region42: #{residual_block_forward.3} parent=35 // pred_check_branch
        %2876 = sbr.rel (%p2874) target = $region44
      $region43: #{residual_block_forward.3} parent=35 // pred_region
        _
      $region44: #{residual_block_forward.3} parent=35 // pred_fallthru
        _
      // Predicated region
      $region45: #{residual_block_forward.3} parent=35 // pred_check
        %p2877 = pneg %p227
      $region46: #{residual_block_forward.3} parent=35 // pred_check_branch
        %2879 = sbr.rel (%p2877) target = $region48
      $region47: #{residual_block_forward.3} parent=35 // pred_region
        _
      $region48: #{residual_block_forward.3} parent=35 // pred_fallthru
        _
    $region36: #{residual_block_forward.3} parent=5 // pred_fallthru
      _
    %p2880 = scmp.le.s32.totalorder 2, %s13
    // Predicated region
    $region49: #{residual_block_forward.3} parent=5 // pred_check
      %p2881 = pneg %p2880
    $region50: #{residual_block_forward.3} parent=5 // pred_check_branch
      %2883 = sbr.rel (%p2881) target = $region52
    $region51: #{residual_block_forward.3} parent=5 // pred_region
      %s2884 = ssub.s32 %s13, 2
      // Predicated region
      $region53: #{residual_block_forward.3} parent=51 // pred_check
        %p2885 = pneg %p177
      $region54: #{residual_block_forward.3} parent=51 // pred_check_branch
        %2887 = sbr.rel (%p2885) target = $region56
      $region55: #{residual_block_forward.3} parent=51 // pred_region
        %s2888 = smul.u32 16, %s25
        %p2889 = scmp.lt.s32.totalorder %s24, 1
        %s2890 = scalar_select %p2889, %s24, 1
        %p2891 = scmp.lt.s32.totalorder %s2888, 15
        %s2892 = scalar_select %p2891, %s2888, 15
        %s2893 = smul.addr %s2892, 2
        %s2894 = smul.addr %s2890, 32
        %s2895 = sadd.s32 %s2893, %s2894
        %s2896 = smul.addr %s2895, 4
        %s2897 = scalar_lea.vmem %s4, %s2896
      $region56: #{residual_block_forward.3} parent=51 // pred_fallthru
        _
      // Predicated region
      $region57: #{residual_block_forward.3} parent=51 // pred_check
        %p2898 = pneg %p205
      $region58: #{residual_block_forward.3} parent=51 // pred_check_branch
        %2900 = sbr.rel (%p2898) target = $region60
      $region59: #{residual_block_forward.3} parent=51 // pred_region
        %p2901 = scmp.lt.s32.totalorder %s24, 1
        %s2902 = scalar_select %p2901, %s24, 1
        %p2903 = scmp.lt.s32.totalorder %s25, 0
        %s2904 = scalar_select %p2903, %s25, 0
        %s2905 = sadd.s32 %s2904, %s2902
        %s2906 = scalar_lea.vmem %s5, %s2905
      $region60: #{residual_block_forward.3} parent=51 // pred_fallthru
        _
      // Predicated region
      $region61: #{residual_block_forward.3} parent=51 // pred_check
        %p2907 = pneg %p233
      $region62: #{residual_block_forward.3} parent=51 // pred_check_branch
        %2909 = sbr.rel (%p2907) target = $region64
      $region63: #{residual_block_forward.3} parent=51 // pred_region
        %p2910 = scmp.lt.s32.totalorder %s24, 1
        %s2911 = scalar_select %p2910, %s24, 1
        %p2912 = scmp.lt.s32.totalorder %s25, 0
        %s2913 = scalar_select %p2912, %s25, 0
        %s2914 = sadd.s32 %s2913, %s2911
        %s2915 = scalar_lea.vmem %s6, %s2914
      $region64: #{residual_block_forward.3} parent=51 // pred_fallthru
        _
    $region52: #{residual_block_forward.3} parent=5 // pred_fallthru
      _
  $region6: #{residual_block_forward.3} parent=0 // loop_footer
    %s17 = sadd.s32 1, %s13
  $region7: #{residual_block_forward.3} parent=0 // loop_footer_branch
    %12 = sbr.rel target = $region3
  $region8: #{residual_block_forward.3} parent=0 // loop_exit
    _

// kernel: residual_block_forward.4
$region0: #{residual_block_forward.4}
  #allocation0 [shape = 'u32[]', space=smem, size = 0x4, offset = 0x4, fixed_abs, tag = 'smem constant byte address 0x4 - core index']
  #allocation1 [shape = 'u32[144,128]{1,0:T(1,128)}', space=vmem, size = 0x12000, scoped, tag = 'internal scratch']
  #allocation2 [shape = 'f32[1,1]{1,0:T(1,128)S(6)}', space=smem, size = 0x200, scoped, tag = 'scoped memory for residual_block_forward.4']
  %s0 = inlined_call_operand.vmem [shape: bf16[2,16,16,128], index: 0, kind: input, shape index: {}, may-alias: {0,1,2}]
  %s1 = inlined_call_operand.vmem [shape: bf16[2,16,16,128], index: 1, kind: input, shape index: {}, may-alias: {0,1,2}]
  %s2 = inlined_call_operand.vmem [shape: bf16[2,16,16,128], index: 2, kind: input, shape index: {}, may-alias: {0,1,2}]
  %s3 = inlined_call_operand.vmem [shape: bf16[1152,128], index: 3, kind: input, shape index: {}]
  %s4 = inlined_call_operand.vmem [shape: f32[1,128], index: 4, kind: input, shape index: {}]
  %s5 = inlined_call_operand.vmem [shape: f32[1,128], index: 5, kind: input, shape index: {}]
  %s6 = inlined_call_operand.<no memory space> [shape: f32[1,1], index: 6, kind: input, shape index: {}]
  %s7 = inlined_call_operand.vmem [shape: f32[2,16,16,128], index: 7, kind: output, shape index: {0}]
  %s8 = inlined_call_operand.vmem [shape: f32[2,1,1,128], index: 8, kind: output, shape index: {1}]
  %s9 = inlined_call_operand.vmem [shape: f32[2,1,1,128], index: 9, kind: output, shape index: {2}]
  %10 = xla_tuple %s7, %s8, %s9
  %s11 = sld [smem:[#allocation0]]
  $region77: #{residual_block_forward.4} parent=0
    _
  %s13 = ssub.s32 1, %s11
  %s14 = scalar_select 0, %s13, %s11
  %15 = sst [smem:[#allocation2]] %s6
  loop: start=0, step=1, limit=4
  $region2: #{residual_block_forward.4} parent=0 // loop_pre_header
    _
  $region3: #{residual_block_forward.4} parent=0 // loop_header
    %s17 = sphi 0, %s21
    %p18 = scmp.ge.s32.totalorder %s17, 4
    %s24 = sphi 0, %s36
    %s25 = sphi 0, %s32
    %s26 = sphi 0, %s24
    %s27 = sphi 0, %s25
    %s28 = sphi 0, %s26
    %s29 = sphi 0, %s27
    %s49 = sphi 0, %s51
    %s52 = sphi 0, %s49
    %s53 = sphi 0, %s52
    %s69 = sphi 0, %s53
    %s77 = sphi 0, %s79
    %s80 = sphi 0, %s77
    %s81 = sphi 0, %s80
    %s97 = sphi 0, %s81
    %s113 = sphi 0, %s115
    %s116 = sphi 0, %s113
    %s117 = sphi 0, %s116
    %s133 = sphi 0, %s117
    %s137 = sphi 0, %s137
    %s139 = sphi 0, %s137
    %s140 = sphi 0, %s139
    %s154 = sphi 0, %s140
    %s158 = sphi 0, %s158
    %s160 = sphi 0, %s158
    %s161 = sphi 0, %s160
    %s175 = sphi 0, %s161
    %s179 = sphi 0, %s179
    %s181 = sphi 0, %s179
    %s182 = sphi 0, %s181
    %s196 = sphi 0, %s182
    %s200 = sphi 0, %s200
    %s202 = sphi 0, %s200
    %s203 = sphi 0, %s202
    %s217 = sphi 0, %s203
    %s225 = sphi 0, %s227
    %s228 = sphi 0, %s225
    %s229 = sphi 0, %s228
    %s245 = sphi 0, %s229
    %s253 = sphi 0, %s255
    %s256 = sphi 0, %s253
    %s257 = sphi 0, %s256
    %s273 = sphi 0, %s257
    %s281 = sphi 0, %s283
    %s284 = sphi 0, %s281
    %s285 = sphi 0, %s284
    %s301 = sphi 0, %s285
  $region4: #{residual_block_forward.4} parent=0 // loop_header_branch
    %20 = sbr.rel (%p18) target = $region8
  $region5: #{residual_block_forward.4} parent=0 // loop_body
    %s22 = ssub.s32 %s17, 1
    %s23 = ssub.s32 %s17, 2
    %s30 = sadd.s32 1, %s25
    %p31 = scmp.ge.s32.totalorder %s30, 1
    %s32 = scalar_select %p31, 0, %s30
    %s33 = sadd.s32 1, %s24
    %s34 = scalar_select %p31, %s33, %s24
    %p35 = scmp.ge.s32.totalorder %s34, 2
    %s36 = scalar_select %p35, 0, %s34
    %s37 = smul.u32 %s25, 16
    %s38 = ssub.s32 %s37, 1
    %p39 = scmp.gt.s32.totalorder %s38, 0
    %s40 = scalar_select %p39, %s38, 0
    %s41 = smul.u32 %s32, 16
    %s42 = ssub.s32 %s41, 1
    %p43 = scmp.gt.s32.totalorder %s42, 0
    %s44 = scalar_select %p43, %s42, 0
    %s45 = ssub.s32 %s24, %s36
    %s46 = ssub.s32 %s40, %s44
    %s47 = sor.u32 %s45, %s46
    %p48 = scmp.eq.s32.totalorder %s47, 0
    %s50 = sadd.s32 %s49, 1
    %s51 = scalar_select %p48, %s49, %s50
    %p54 = pneg %p48
    %p55 = scmp.eq.s32.totalorder %s17, 1
    %p56 = por %p54, %p55
    %p57 = scmp.ne.s32.totalorder %s49, %s52
    %p58 = scmp.eq.s32.totalorder %s17, 0
    %p59 = por %p57, %p58
    %p60 = scmp.ne.s32.totalorder %s49, %s52
    %p61 = scmp.eq.s32.totalorder %s22, 1
    %p62 = por %p60, %p61
    %p63 = scmp.ne.s32.totalorder %s52, %s53
    %p64 = scmp.eq.s32.totalorder %s22, 0
    %p65 = por %p63, %p64
    %p66 = scmp.ne.s32.totalorder %s52, %s53
    %p67 = scmp.eq.s32.totalorder %s23, 1
    %p68 = por %p66, %p67
    %p70 = scmp.ne.s32.totalorder %s53, %s69
    %p71 = scmp.eq.s32.totalorder %s23, 0
    %p72 = por %p70, %p71
    %s73 = ssub.s32 %s24, %s36
    %s74 = ssub.s32 %s25, %s32
    %s75 = sor.u32 %s73, %s74
    %p76 = scmp.eq.s32.totalorder %s75, 0
    %s78 = sadd.s32 %s77, 1
    %s79 = scalar_select %p76, %s77, %s78
    %p82 = pneg %p76
    %p83 = scmp.eq.s32.totalorder %s17, 1
    %p84 = por %p82, %p83
    %p85 = scmp.ne.s32.totalorder %s77, %s80
    %p86 = scmp.eq.s32.totalorder %s17, 0
    %p87 = por %p85, %p86
    %p88 = scmp.ne.s32.totalorder %s77, %s80
    %p89 = scmp.eq.s32.totalorder %s22, 1
    %p90 = por %p88, %p89
    %p91 = scmp.ne.s32.totalorder %s80, %s81
    %p92 = scmp.eq.s32.totalorder %s22, 0
    %p93 = por %p91, %p92
    %p94 = scmp.ne.s32.totalorder %s80, %s81
    %p95 = scmp.eq.s32.totalorder %s23, 1
    %p96 = por %p94, %p95
    %p98 = scmp.ne.s32.totalorder %s81, %s97
    %p99 = scmp.eq.s32.totalorder %s23, 0
    %p100 = por %p98, %p99
    %s101 = smul.u32 %s25, 16
    %s102 = sadd.s32 %s101, 16
    %p103 = scmp.lt.s32.totalorder %s102, 15
    %s104 = scalar_select %p103, %s102, 15
    %s105 = smul.u32 %s32, 16
    %s106 = sadd.s32 %s105, 16
    %p107 = scmp.lt.s32.totalorder %s106, 15
    %s108 = scalar_select %p107, %s106, 15
    %s109 = ssub.s32 %s24, %s36
    %s110 = ssub.s32 %s104, %s108
    %s111 = sor.u32 %s109, %s110
    %p112 = scmp.eq.s32.totalorder %s111, 0
    %s114 = sadd.s32 %s113, 1
    %s115 = scalar_select %p112, %s113, %s114
    %p118 = pneg %p112
    %p119 = scmp.eq.s32.totalorder %s17, 1
    %p120 = por %p118, %p119
    %p121 = scmp.ne.s32.totalorder %s113, %s116
    %p122 = scmp.eq.s32.totalorder %s17, 0
    %p123 = por %p121, %p122
    %p124 = scmp.ne.s32.totalorder %s113, %s116
    %p125 = scmp.eq.s32.totalorder %s22, 1
    %p126 = por %p124, %p125
    %p127 = scmp.ne.s32.totalorder %s116, %s117
    %p128 = scmp.eq.s32.totalorder %s22, 0
    %p129 = por %p127, %p128
    %p130 = scmp.ne.s32.totalorder %s116, %s117
    %p131 = scmp.eq.s32.totalorder %s23, 1
    %p132 = por %p130, %p131
    %p134 = scmp.ne.s32.totalorder %s117, %s133
    %p135 = scmp.eq.s32.totalorder %s23, 0
    %p136 = por %p134, %p135
    %s138 = sadd.s32 %s137, 1
    %p141 = scmp.eq.s32.totalorder %s17, 1
    %p142 = scmp.ne.s32.totalorder %s137, %s139
    %p143 = scmp.eq.s32.totalorder %s17, 0
    %p144 = por %p142, %p143
    %p145 = scmp.ne.s32.totalorder %s137, %s139
    %p146 = scmp.eq.s32.totalorder %s22, 1
    %p147 = por %p145, %p146
    %p148 = scmp.ne.s32.totalorder %s139, %s140
    %p149 = scmp.eq.s32.totalorder %s22, 0
    %p150 = por %p148, %p149
    %p151 = scmp.ne.s32.totalorder %s139, %s140
    %p152 = scmp.eq.s32.totalorder %s23, 1
    %p153 = por %p151, %p152
    %p155 = scmp.ne.s32.totalorder %s140, %s154
    %p156 = scmp.eq.s32.totalorder %s23, 0
    %p157 = por %p155, %p156
    %s159 = sadd.s32 %s158, 1
    %p162 = scmp.eq.s32.totalorder %s17, 1
    %p163 = scmp.ne.s32.totalorder %s158, %s160
    %p164 = scmp.eq.s32.totalorder %s17, 0
    %p165 = por %p163, %p164
    %p166 = scmp.ne.s32.totalorder %s158, %s160
    %p167 = scmp.eq.s32.totalorder %s22, 1
    %p168 = por %p166, %p167
    %p169 = scmp.ne.s32.totalorder %s160, %s161
    %p170 = scmp.eq.s32.totalorder %s22, 0
    %p171 = por %p169, %p170
    %p172 = scmp.ne.s32.totalorder %s160, %s161
    %p173 = scmp.eq.s32.totalorder %s23, 1
    %p174 = por %p172, %p173
    %p176 = scmp.ne.s32.totalorder %s161, %s175
    %p177 = scmp.eq.s32.totalorder %s23, 0
    %p178 = por %p176, %p177
    %s180 = sadd.s32 %s179, 1
    %p183 = scmp.eq.s32.totalorder %s17, 1
    %p184 = scmp.ne.s32.totalorder %s179, %s181
    %p185 = scmp.eq.s32.totalorder %s17, 0
    %p186 = por %p184, %p185
    %p187 = scmp.ne.s32.totalorder %s179, %s181
    %p188 = scmp.eq.s32.totalorder %s22, 1
    %p189 = por %p187, %p188
    %p190 = scmp.ne.s32.totalorder %s181, %s182
    %p191 = scmp.eq.s32.totalorder %s22, 0
    %p192 = por %p190, %p191
    %p193 = scmp.ne.s32.totalorder %s181, %s182
    %p194 = scmp.eq.s32.totalorder %s23, 1
    %p195 = por %p193, %p194
    %p197 = scmp.ne.s32.totalorder %s182, %s196
    %p198 = scmp.eq.s32.totalorder %s23, 0
    %p199 = por %p197, %p198
    %s201 = sadd.s32 %s200, 1
    %p204 = scmp.eq.s32.totalorder %s17, 1
    %p205 = scmp.ne.s32.totalorder %s200, %s202
    %p206 = scmp.eq.s32.totalorder %s17, 0
    %p207 = por %p205, %p206
    %p208 = scmp.ne.s32.totalorder %s200, %s202
    %p209 = scmp.eq.s32.totalorder %s22, 1
    %p210 = por %p208, %p209
    %p211 = scmp.ne.s32.totalorder %s202, %s203
    %p212 = scmp.eq.s32.totalorder %s22, 0
    %p213 = por %p211, %p212
    %p214 = scmp.ne.s32.totalorder %s202, %s203
    %p215 = scmp.eq.s32.totalorder %s23, 1
    %p216 = por %p214, %p215
    %p218 = scmp.ne.s32.totalorder %s203, %s217
    %p219 = scmp.eq.s32.totalorder %s23, 0
    %p220 = por %p218, %p219
    %s221 = ssub.s32 %s24, %s36
    %s222 = ssub.s32 %s25, %s32
    %s223 = sor.u32 %s221, %s222
    %p224 = scmp.eq.s32.totalorder %s223, 0
    %s226 = sadd.s32 %s225, 1
    %s227 = scalar_select %p224, %s225, %s226
    %p230 = pneg %p224
    %p231 = scmp.eq.s32.totalorder %s17, 1
    %p232 = por %p230, %p231
    %p233 = scmp.ne.s32.totalorder %s225, %s228
    %p234 = scmp.eq.s32.totalorder %s17, 0
    %p235 = por %p233, %p234
    %p236 = scmp.ne.s32.totalorder %s225, %s228
    %p237 = scmp.eq.s32.totalorder %s22, 1
    %p238 = por %p236, %p237
    %p239 = scmp.ne.s32.totalorder %s228, %s229
    %p240 = scmp.eq.s32.totalorder %s22, 0
    %p241 = por %p239, %p240
    %p242 = scmp.ne.s32.totalorder %s228, %s229
    %p243 = scmp.eq.s32.totalorder %s23, 1
    %p244 = por %p242, %p243
    %p246 = scmp.ne.s32.totalorder %s229, %s245
    %p247 = scmp.eq.s32.totalorder %s23, 0
    %p248 = por %p246, %p247
    %s249 = ssub.s32 %s24, %s36
    %s250 = ssub.s32 %s25, %s32
    %s251 = sor.u32 %s249, %s250
    %p252 = scmp.eq.s32.totalorder %s251, 0
    %s254 = sadd.s32 %s253, 1
    %s255 = scalar_select %p252, %s253, %s254
    %p258 = pneg %p252
    %p259 = scmp.eq.s32.totalorder %s17, 1
    %p260 = por %p258, %p259
    %p261 = scmp.ne.s32.totalorder %s253, %s256
    %p262 = scmp.eq.s32.totalorder %s17, 0
    %p263 = por %p261, %p262
    %p264 = scmp.ne.s32.totalorder %s253, %s256
    %p265 = scmp.eq.s32.totalorder %s22, 1
    %p266 = por %p264, %p265
    %p267 = scmp.ne.s32.totalorder %s256, %s257
    %p268 = scmp.eq.s32.totalorder %s22, 0
    %p269 = por %p267, %p268
    %p270 = scmp.ne.s32.totalorder %s256, %s257
    %p271 = scmp.eq.s32.totalorder %s23, 1
    %p272 = por %p270, %p271
    %p274 = scmp.ne.s32.totalorder %s257, %s273
    %p275 = scmp.eq.s32.totalorder %s23, 0
    %p276 = por %p274, %p275
    %s277 = ssub.s32 %s24, %s36
    %s278 = ssub.s32 %s25, %s32
    %s279 = sor.u32 %s277, %s278
    %p280 = scmp.eq.s32.totalorder %s279, 0
    %s282 = sadd.s32 %s281, 1
    %s283 = scalar_select %p280, %s281, %s282
    %p286 = pneg %p280
    %p287 = scmp.eq.s32.totalorder %s17, 1
    %p288 = por %p286, %p287
    %p289 = scmp.ne.s32.totalorder %s281, %s284
    %p290 = scmp.eq.s32.totalorder %s17, 0
    %p291 = por %p289, %p290
    %p292 = scmp.ne.s32.totalorder %s281, %s284
    %p293 = scmp.eq.s32.totalorder %s22, 1
    %p294 = por %p292, %p293
    %p295 = scmp.ne.s32.totalorder %s284, %s285
    %p296 = scmp.eq.s32.totalorder %s22, 0
    %p297 = por %p295, %p296
    %p298 = scmp.ne.s32.totalorder %s284, %s285
    %p299 = scmp.eq.s32.totalorder %s23, 1
    %p300 = por %p298, %p299
    %p302 = scmp.ne.s32.totalorder %s285, %s301
    %p303 = scmp.eq.s32.totalorder %s23, 0
    %p304 = por %p302, %p303
    %p305 = scmp.le.s32.totalorder 1, %s17
    %p306 = scmp.lt.s32.totalorder %s17, 3
    %p307 = pnand %p305, %p306
    %p308 = pneg %p307
    // Predicated region
    $region9: #{residual_block_forward.4} parent=5 // pred_check
      _
    $region10: #{residual_block_forward.4} parent=5 // pred_check_branch
      %310 = sbr.rel (%p307) target = $region12
    $region11: #{residual_block_forward.4} parent=5 // pred_region
      %s311 = ssub.s32 %s17, 1
      // Predicated region
      $region13: #{residual_block_forward.4} parent=11 // pred_check
        %p312 = pneg %p150
      $region14: #{residual_block_forward.4} parent=11 // pred_check_branch
        %314 = sbr.rel (%p312) target = $region16
      $region15: #{residual_block_forward.4} parent=11 // pred_region
        _
      $region16: #{residual_block_forward.4} parent=11 // pred_fallthru
        _
      // Predicated region
      $region17: #{residual_block_forward.4} parent=11 // pred_check
        %p315 = pneg %p171
      $region18: #{residual_block_forward.4} parent=11 // pred_check_branch
        %317 = sbr.rel (%p315) target = $region20
      $region19: #{residual_block_forward.4} parent=11 // pred_region
        _
      $region20: #{residual_block_forward.4} parent=11 // pred_fallthru
        _
      // Predicated region
      $region21: #{residual_block_forward.4} parent=11 // pred_check
        %p318 = pneg %p192
      $region22: #{residual_block_forward.4} parent=11 // pred_check_branch
        %320 = sbr.rel (%p318) target = $region24
      $region23: #{residual_block_forward.4} parent=11 // pred_region
        _
      $region24: #{residual_block_forward.4} parent=11 // pred_fallthru
        _
      // Predicated region
      $region25: #{residual_block_forward.4} parent=11 // pred_check
        %p321 = pneg %p213
      $region26: #{residual_block_forward.4} parent=11 // pred_check_branch
        %323 = sbr.rel (%p321) target = $region28
      $region27: #{residual_block_forward.4} parent=11 // pred_region
        _
      $region28: #{residual_block_forward.4} parent=11 // pred_fallthru
        _
    $region12: #{residual_block_forward.4} parent=5 // pred_fallthru
      _
    %p324 = scmp.lt.s32.totalorder %s17, 2
    // Predicated region
    $region29: #{residual_block_forward.4} parent=5 // pred_check
      %p325 = pneg %p324
    $region30: #{residual_block_forward.4} parent=5 // pred_check_branch
      %327 = sbr.rel (%p325) target = $region32
    $region31: #{residual_block_forward.4} parent=5 // pred_region
      // Predicated region
      $region33: #{residual_block_forward.4} parent=31 // pred_check
        %p328 = pneg %p59
      $region34: #{residual_block_forward.4} parent=31 // pred_check_branch
        %330 = sbr.rel (%p328) target = $region36
      $region35: #{residual_block_forward.4} parent=31 // pred_region
        %s331 = smul.u32 %s25, 16
        %s332 = ssub.s32 %s331, 1
        %p333 = scmp.gt.s32.totalorder %s332, 0
        %s334 = scalar_select %p333, %s332, 0
        %p335 = scmp.lt.s32.totalorder %s24, 1
        %s336 = scalar_select %p335, %s24, 1
        %p337 = scmp.lt.s32.totalorder %s334, 15
        %s338 = scalar_select %p337, %s334, 15
        %s339 = smul.addr %s338, 2
        %s340 = smul.addr %s336, 32
        %s341 = sadd.s32 %s339, %s340
        %s342 = smul.addr %s341, 4
        %s343 = scalar_lea.vmem %s0, %s342
        %s344 = smul.u32 %s25, 16
        %s345 = ssub.s32 %s344, 1
        %p346 = scmp.gt.s32.totalorder %s345, 0
        %s347 = scalar_select %p346, %s345, 0
      $region36: #{residual_block_forward.4} parent=31 // pred_fallthru
        _
      // Predicated region
      $region37: #{residual_block_forward.4} parent=31 // pred_check
        %p348 = pneg %p87
      $region38: #{residual_block_forward.4} parent=31 // pred_check_branch
        %350 = sbr.rel (%p348) target = $region40
      $region39: #{residual_block_forward.4} parent=31 // pred_region
        %s351 = smul.u32 16, %s25
        %p352 = scmp.lt.s32.totalorder %s24, 1
        %s353 = scalar_select %p352, %s24, 1
        %p354 = scmp.lt.s32.totalorder %s351, 15
        %s355 = scalar_select %p354, %s351, 15
        %s356 = smul.addr %s355, 2
        %s357 = smul.addr %s353, 32
        %s358 = sadd.s32 %s356, %s357
        %s359 = smul.addr %s358, 4
        %s360 = scalar_lea.vmem %s1, %s359
        %s361 = smul.u32 16, %s25
      $region40: #{residual_block_forward.4} parent=31 // pred_fallthru
        _
      // Predicated region
      $region41: #{residual_block_forward.4} parent=31 // pred_check
        %p362 = pneg %p123
      $region42: #{residual_block_forward.4} parent=31 // pred_check_branch
        %364 = sbr.rel (%p362) target = $region44
      $region43: #{residual_block_forward.4} parent=31 // pred_region
        %s365 = smul.u32 %s25, 16
        %s366 = sadd.s32 %s365, 16
        %p367 = scmp.lt.s32.totalorder %s366, 15
        %s368 = scalar_select %p367, %s366, 15
        %p369 = scmp.lt.s32.totalorder %s24, 1
        %s370 = scalar_select %p369, %s24, 1
        %p371 = scmp.lt.s32.totalorder %s368, 15
        %s372 = scalar_select %p371, %s368, 15
        %s373 = smul.addr %s372, 2
        %s374 = smul.addr %s370, 32
        %s375 = sadd.s32 %s373, %s374
        %s376 = smul.addr %s375, 4
        %s377 = scalar_lea.vmem %s2, %s376
        %s378 = smul.u32 %s25, 16
        %s379 = sadd.s32 %s378, 16
        %p380 = scmp.lt.s32.totalorder %s379, 15
        %s381 = scalar_select %p380, %s379, 15
      $region44: #{residual_block_forward.4} parent=31 // pred_fallthru
        _
    $region32: #{residual_block_forward.4} parent=5 // pred_fallthru
      _
    %p382 = scmp.le.s32.totalorder 1, %s17
    %p383 = scmp.lt.s32.totalorder %s17, 3
    %p384 = pnand %p382, %p383
    %p385 = pneg %p384
    // Predicated region
    $region45: #{residual_block_forward.4} parent=5 // pred_check
      _
    $region46: #{residual_block_forward.4} parent=5 // pred_check_branch
      %387 = sbr.rel (%p384) target = $region48
    $region47: #{residual_block_forward.4} parent=5 // pred_region
      %s388 = ssub.s32 %s17, 1
      %s389 = smul.u32 %s27, 16
      %s390 = ssub.s32 %s389, 1
      %p391 = scmp.gt.s32.totalorder %s390, 0
      %s392 = scalar_select %p391, %s390, 0
      %p393 = scmp.lt.s32.totalorder %s26, 1
      %s394 = scalar_select %p393, %s26, 1
      %p395 = scmp.lt.s32.totalorder %s392, 15
      %s396 = scalar_select %p395, %s392, 15
      %s397 = smul.addr %s396, 2
      %s398 = smul.addr %s394, 32
      %s399 = sadd.s32 %s397, %s398
      %s400 = smul.addr %s399, 4
      %s401 = scalar_lea.vmem %s0, %s400
      %p402 = pneg %p65
      %p403 = pneg %p62
      %s404 = smul.u32 16, %s27
      %p405 = scmp.lt.s32.totalorder %s26, 1
      %s406 = scalar_select %p405, %s26, 1
      %p407 = scmp.lt.s32.totalorder %s404, 15
      %s408 = scalar_select %p407, %s404, 15
      %s409 = smul.addr %s408, 2
      %s410 = smul.addr %s406, 32
      %s411 = sadd.s32 %s409, %s410
      %s412 = smul.addr %s411, 4
      %s413 = scalar_lea.vmem %s1, %s412
      %p414 = pneg %p93
      %p415 = pneg %p90
      %s416 = smul.u32 %s27, 16
      %s417 = sadd.s32 %s416, 16
      %p418 = scmp.lt.s32.totalorder %s417, 15
      %s419 = scalar_select %p418, %s417, 15
      %p420 = scmp.lt.s32.totalorder %s26, 1
      %s421 = scalar_select %p420, %s26, 1
      %p422 = scmp.lt.s32.totalorder %s419, 15
      %s423 = scalar_select %p422, %s419, 15
      %s424 = smul.addr %s423, 2
      %s425 = smul.addr %s421, 32
      %s426 = sadd.s32 %s424, %s425
      %s427 = smul.addr %s426, 4
      %s428 = scalar_lea.vmem %s2, %s427
      %p429 = pneg %p129
      %p430 = pneg %p126
      %p431 = pneg %p150
      %p432 = pneg %p147
      %p433 = pneg %p171
      %p434 = pneg %p168
      %p435 = pneg %p192
      %p436 = pneg %p189
      %p437 = pneg %p213
      %p438 = pneg %p210
      %p439 = pneg %p241
      %p440 = pneg %p238
      %s441 = smul.u32 16, %s27
      %p442 = scmp.lt.s32.totalorder %s26, 1
      %s443 = scalar_select %p442, %s26, 1
      %p444 = scmp.lt.s32.totalorder %s441, 15
      %s445 = scalar_select %p444, %s441, 15
      %s446 = smul.addr %s445, 2
      %s447 = smul.addr %s443, 32
      %s448 = sadd.s32 %s446, %s447
      %s449 = smul.addr %s448, 8
      %s450 = scalar_lea.vmem %s7, %s449
      %p451 = pneg %p269
      %p452 = pneg %p266
      %p453 = scmp.lt.s32.totalorder %s26, 1
      %s454 = scalar_select %p453, %s26, 1
      %p455 = scmp.lt.s32.totalorder %s27, 0
      %s456 = scalar_select %p455, %s27, 0
      %s457 = sadd.s32 %s456, %s454
      %s458 = scalar_lea.vmem %s8, %s457
      %p459 = pneg %p297
      %p460 = pneg %p294
      %p461 = scmp.lt.s32.totalorder %s26, 1
      %s462 = scalar_select %p461, %s26, 1
      %p463 = scmp.lt.s32.totalorder %s27, 0
      %s464 = scalar_select %p463, %s27, 0
      %s465 = sadd.s32 %s464, %s462
      %s466 = scalar_lea.vmem %s9, %s465
      %s467 = smul.u32 %s27, 16
      %s468 = ssub.s32 %s467, 1
      %p469 = scmp.gt.s32.totalorder %s468, 0
      %s470 = scalar_select %p469, %s468, 0
      %p471 = scmp.lt.s32.totalorder %s26, 1
      %s472 = scalar_select %p471, %s26, 1
      %p473 = scmp.lt.s32.totalorder %s470, 15
      %s474 = scalar_select %p473, %s470, 15
      %s475 = smul.addr %s474, 2
      %s476 = smul.addr %s472, 32
      %s477 = sadd.s32 %s475, %s476
      %s478 = smul.addr %s477, 4
      %s479 = scalar_lea.vmem %s0, %s478
      %s480 = smul.u32 %s27, 16
      %s481 = ssub.s32 %s480, 1
      %p482 = scmp.gt.s32.totalorder %s481, 0
      %s483 = scalar_select %p482, %s481, 0
      %s484 = smul.u32 16, %s27
      %p485 = scmp.lt.s32.totalorder %s26, 1
      %s486 = scalar_select %p485, %s26, 1
      %p487 = scmp.lt.s32.totalorder %s484, 15
      %s488 = scalar_select %p487, %s484, 15
      %s489 = smul.addr %s488, 2
      %s490 = smul.addr %s486, 32
      %s491 = sadd.s32 %s489, %s490
      %s492 = smul.addr %s491, 4
      %s493 = scalar_lea.vmem %s1, %s492
      %s494 = smul.u32 16, %s27
      %s495 = smul.u32 %s27, 16
      %s496 = sadd.s32 %s495, 16
      %p497 = scmp.lt.s32.totalorder %s496, 15
      %s498 = scalar_select %p497, %s496, 15
      %p499 = scmp.lt.s32.totalorder %s26, 1
      %s500 = scalar_select %p499, %s26, 1
      %p501 = scmp.lt.s32.totalorder %s498, 15
      %s502 = scalar_select %p501, %s498, 15
      %s503 = smul.addr %s502, 2
      %s504 = smul.addr %s500, 32
      %s505 = sadd.s32 %s503, %s504
      %s506 = smul.addr %s505, 4
      %s507 = scalar_lea.vmem %s2, %s506
      %s508 = smul.u32 %s27, 16
      %s509 = sadd.s32 %s508, 16
      %p510 = scmp.lt.s32.totalorder %s509, 15
      %s511 = scalar_select %p510, %s509, 15
      %s512 = smul.u32 16, %s27
      %p513 = scmp.lt.s32.totalorder %s26, 1
      %s514 = scalar_select %p513, %s26, 1
      %p515 = scmp.lt.s32.totalorder %s512, 15
      %s516 = scalar_select %p515, %s512, 15
      %s517 = smul.addr %s516, 2
      %s518 = smul.addr %s514, 32
      %s519 = sadd.s32 %s517, %s518
      %s520 = smul.addr %s519, 8
      %s521 = scalar_lea.vmem %s7, %s520
      %s522 = smul.u32 16, %s27
      %p523 = scmp.lt.s32.totalorder %s26, 1
      %s524 = scalar_select %p523, %s26, 1
      %p525 = scmp.lt.s32.totalorder %s27, 0
      %s526 = scalar_select %p525, %s27, 0
      %s527 = sadd.s32 %s526, %s524
      %s528 = scalar_lea.vmem %s8, %s527
      %p529 = scmp.lt.s32.totalorder %s26, 1
      %s530 = scalar_select %p529, %s26, 1
      %p531 = scmp.lt.s32.totalorder %s27, 0
      %s532 = scalar_select %p531, %s27, 0
      %s533 = sadd.s32 %s532, %s530
      %s534 = scalar_lea.vmem %s9, %s533
      %s536 = smul.u32 %s27, 16
      %v537 = vld [vmem:[%s479] sm:$0xf]
      %v538 = vld [vmem:[%s479 + $0x4] sm:$0xf]
      %v539 = vld [vmem:[%s493] sm:$0xf]
      %v540 = vld [vmem:[%s493 + $0x4] sm:$0xf]
      %v541 = vld [vmem:[%s493 + $0x8] sm:$0xf]
      %v542 = vld [vmem:[%s493 + $0xc] sm:$0xf]
      %v543 = vld [vmem:[%s493 + $0x10] sm:$0xf]
      %v544 = vld [vmem:[%s493 + $0x14] sm:$0xf]
      %v545 = vld [vmem:[%s493 + $0x18] sm:$0xf]
      %v546 = vld [vmem:[%s493 + $0x1c] sm:$0xf]
      %v547 = vld [vmem:[%s493 + $0x20] sm:$0xf]
      %v548 = vld [vmem:[%s493 + $0x24] sm:$0xf]
      %v549 = vld [vmem:[%s493 + $0x28] sm:$0xf]
      %v550 = vld [vmem:[%s493 + $0x2c] sm:$0xf]
      %v551 = vld [vmem:[%s493 + $0x30] sm:$0xf]
      %v552 = vld [vmem:[%s493 + $0x34] sm:$0xf]
      %v553 = vld [vmem:[%s493 + $0x38] sm:$0xf]
      %v554 = vld [vmem:[%s493 + $0x3c] sm:$0xf]
      %v555 = vld [vmem:[%s493 + $0x40] sm:$0xf]
      %v556 = vld [vmem:[%s493 + $0x44] sm:$0xf]
      %v557 = vld [vmem:[%s493 + $0x48] sm:$0xf]
      %v558 = vld [vmem:[%s493 + $0x4c] sm:$0xf]
      %v559 = vld [vmem:[%s493 + $0x50] sm:$0xf]
      %v560 = vld [vmem:[%s493 + $0x54] sm:$0xf]
      %v561 = vld [vmem:[%s493 + $0x58] sm:$0xf]
      %v562 = vld [vmem:[%s493 + $0x5c] sm:$0xf]
      %v563 = vld [vmem:[%s493 + $0x60] sm:$0xf]
      %v564 = vld [vmem:[%s493 + $0x64] sm:$0xf]
      %v565 = vld [vmem:[%s493 + $0x68] sm:$0xf]
      %v566 = vld [vmem:[%s493 + $0x6c] sm:$0xf]
      %v567 = vld [vmem:[%s493 + $0x70] sm:$0xf]
      %v568 = vld [vmem:[%s493 + $0x74] sm:$0xf]
      %v569 = vld [vmem:[%s493 + $0x78] sm:$0xf]
      %v570 = vld [vmem:[%s493 + $0x7c] sm:$0xf]
      %v571 = vld [vmem:[%s507] sm:$0xf]
      %v572 = vld [vmem:[%s507 + $0x4] sm:$0xf]
      %v573 = vunpack.c.l.bf16 %v537
      %v574 = vunpack.c.l.bf16 %v538
      %v575 = vunpack.c.l.bf16 %v539
      %v576 = vunpack.c.l.bf16 %v540
      %v577 = vunpack.c.l.bf16 %v541
      %v578 = vunpack.c.l.bf16 %v542
      %v579 = vunpack.c.l.bf16 %v543
      %v580 = vunpack.c.l.bf16 %v544
      %v581 = vunpack.c.l.bf16 %v545
      %v582 = vunpack.c.l.bf16 %v546
      %v583 = vunpack.c.l.bf16 %v547
      %v584 = vunpack.c.l.bf16 %v548
      %v585 = vunpack.c.l.bf16 %v549
      %v586 = vunpack.c.l.bf16 %v550
      %v587 = vunpack.c.l.bf16 %v551
      %v588 = vunpack.c.l.bf16 %v552
      %v589 = vunpack.c.l.bf16 %v553
      %v590 = vunpack.c.l.bf16 %v554
      %v591 = vunpack.c.l.bf16 %v555
      %v592 = vunpack.c.l.bf16 %v556
      %v593 = vunpack.c.l.bf16 %v557
      %v594 = vunpack.c.l.bf16 %v558
      %v595 = vunpack.c.l.bf16 %v559
      %v596 = vunpack.c.l.bf16 %v560
      %v597 = vunpack.c.l.bf16 %v561
      %v598 = vunpack.c.l.bf16 %v562
      %v599 = vunpack.c.l.bf16 %v563
      %v600 = vunpack.c.l.bf16 %v564
      %v601 = vunpack.c.l.bf16 %v565
      %v602 = vunpack.c.l.bf16 %v566
      %v603 = vunpack.c.l.bf16 %v567
      %v604 = vunpack.c.l.bf16 %v568
      %v605 = vunpack.c.l.bf16 %v569
      %v606 = vunpack.c.l.bf16 %v570
      %v607 = vunpack.c.l.bf16 %v571
      %v608 = vunpack.c.l.bf16 %v572
      %v609 = vld [vmem:[%s4] sm:$0x1]
      %v611 = vlaneseq
      %v612 = vshrl.u32 %v611, 7
      %v613 = vsub.s32 0, %v612
      %v614 = vrot.slane %v609, %v613
      %v616 = vmul.f32 %v573, %v614
      %v617 = vmul.f32 %v574, %v614
      %v618 = vmul.f32 %v575, %v614
      %v619 = vmul.f32 %v576, %v614
      %v620 = vmul.f32 %v577, %v614
      %v621 = vmul.f32 %v578, %v614
      %v622 = vmul.f32 %v579, %v614
      %v623 = vmul.f32 %v580, %v614
      %v624 = vmul.f32 %v581, %v614
      %v625 = vmul.f32 %v582, %v614
      %v626 = vmul.f32 %v583, %v614
      %v627 = vmul.f32 %v584, %v614
      %v628 = vmul.f32 %v585, %v614
      %v629 = vmul.f32 %v586, %v614
      %v630 = vmul.f32 %v587, %v614
      %v631 = vmul.f32 %v588, %v614
      %v632 = vmul.f32 %v589, %v614
      %v633 = vmul.f32 %v590, %v614
      %v634 = vmul.f32 %v591, %v614
      %v635 = vmul.f32 %v592, %v614
      %v636 = vmul.f32 %v593, %v614
      %v637 = vmul.f32 %v594, %v614
      %v638 = vmul.f32 %v595, %v614
      %v639 = vmul.f32 %v596, %v614
      %v640 = vmul.f32 %v597, %v614
      %v641 = vmul.f32 %v598, %v614
      %v642 = vmul.f32 %v599, %v614
      %v643 = vmul.f32 %v600, %v614
      %v644 = vmul.f32 %v601, %v614
      %v645 = vmul.f32 %v602, %v614
      %v646 = vmul.f32 %v603, %v614
      %v647 = vmul.f32 %v604, %v614
      %v648 = vmul.f32 %v605, %v614
      %v649 = vmul.f32 %v606, %v614
      %v650 = vmul.f32 %v607, %v614
      %v651 = vmul.f32 %v608, %v614
      %v652 = vld [vmem:[%s5] sm:$0x1]
      %v654 = vlaneseq
      %v655 = vshrl.u32 %v654, 7
      %v656 = vsub.s32 0, %v655
      %v657 = vrot.slane %v652, %v656
      %v659 = vadd.f32 %v616, %v657
      %v660 = vadd.f32 %v617, %v657
      %v661 = vadd.f32 %v618, %v657
      %v662 = vadd.f32 %v619, %v657
      %v663 = vadd.f32 %v620, %v657
      %v664 = vadd.f32 %v621, %v657
      %v665 = vadd.f32 %v622, %v657
      %v666 = vadd.f32 %v623, %v657
      %v667 = vadd.f32 %v624, %v657
      %v668 = vadd.f32 %v625, %v657
      %v669 = vadd.f32 %v626, %v657
      %v670 = vadd.f32 %v627, %v657
      %v671 = vadd.f32 %v628, %v657
      %v672 = vadd.f32 %v629, %v657
      %v673 = vadd.f32 %v630, %v657
      %v674 = vadd.f32 %v631, %v657
      %v675 = vadd.f32 %v632, %v657
      %v676 = vadd.f32 %v633, %v657
      %v677 = vadd.f32 %v634, %v657
      %v678 = vadd.f32 %v635, %v657
      %v679 = vadd.f32 %v636, %v657
      %v680 = vadd.f32 %v637, %v657
      %v681 = vadd.f32 %v638, %v657
      %v682 = vadd.f32 %v639, %v657
      %v683 = vadd.f32 %v640, %v657
      %v684 = vadd.f32 %v641, %v657
      %v685 = vadd.f32 %v642, %v657
      %v686 = vadd.f32 %v643, %v657
      %v687 = vadd.f32 %v644, %v657
      %v688 = vadd.f32 %v645, %v657
      %v689 = vadd.f32 %v646, %v657
      %v690 = vadd.f32 %v647, %v657
      %v691 = vadd.f32 %v648, %v657
      %v692 = vadd.f32 %v649, %v657
      %v693 = vadd.f32 %v650, %v657
      %v694 = vadd.f32 %v651, %v657
      %vm695 = vcmp.gt.f32.partialorder %v659, 0.0
      %vm696 = vcmp.gt.f32.partialorder %v660, 0.0
      %vm697 = vcmp.gt.f32.partialorder %v661, 0.0
      %vm698 = vcmp.gt.f32.partialorder %v662, 0.0
      %vm699 = vcmp.gt.f32.partialorder %v663, 0.0
      %vm700 = vcmp.gt.f32.partialorder %v664, 0.0
      %vm701 = vcmp.gt.f32.partialorder %v665, 0.0
      %vm702 = vcmp.gt.f32.partialorder %v666, 0.0
      %vm703 = vcmp.gt.f32.partialorder %v667, 0.0
      %vm704 = vcmp.gt.f32.partialorder %v668, 0.0
      %vm705 = vcmp.gt.f32.partialorder %v669, 0.0
      %vm706 = vcmp.gt.f32.partialorder %v670, 0.0
      %vm707 = vcmp.gt.f32.partialorder %v671, 0.0
      %vm708 = vcmp.gt.f32.partialorder %v672, 0.0
      %vm709 = vcmp.gt.f32.partialorder %v673, 0.0
      %vm710 = vcmp.gt.f32.partialorder %v674, 0.0
      %vm711 = vcmp.gt.f32.partialorder %v675, 0.0
      %vm712 = vcmp.gt.f32.partialorder %v676, 0.0
      %vm713 = vcmp.gt.f32.partialorder %v677, 0.0
      %vm714 = vcmp.gt.f32.partialorder %v678, 0.0
      %vm715 = vcmp.gt.f32.partialorder %v679, 0.0
      %vm716 = vcmp.gt.f32.partialorder %v680, 0.0
      %vm717 = vcmp.gt.f32.partialorder %v681, 0.0
      %vm718 = vcmp.gt.f32.partialorder %v682, 0.0
      %vm719 = vcmp.gt.f32.partialorder %v683, 0.0
      %vm720 = vcmp.gt.f32.partialorder %v684, 0.0
      %vm721 = vcmp.gt.f32.partialorder %v685, 0.0
      %vm722 = vcmp.gt.f32.partialorder %v686, 0.0
      %vm723 = vcmp.gt.f32.partialorder %v687, 0.0
      %vm724 = vcmp.gt.f32.partialorder %v688, 0.0
      %vm725 = vcmp.gt.f32.partialorder %v689, 0.0
      %vm726 = vcmp.gt.f32.partialorder %v690, 0.0
      %vm727 = vcmp.gt.f32.partialorder %v691, 0.0
      %vm728 = vcmp.gt.f32.partialorder %v692, 0.0
      %vm729 = vcmp.gt.f32.partialorder %v693, 0.0
      %vm730 = vcmp.gt.f32.partialorder %v694, 0.0
      %s731 = sld [smem:[#allocation2]]
      %v732 = vstv %s731
      %v733 = vmul.f32 %v732, %v659
      %v734 = vmul.f32 %v732, %v660
      %v735 = vmul.f32 %v732, %v661
      %v736 = vmul.f32 %v732, %v662
      %v737 = vmul.f32 %v732, %v663
      %v738 = vmul.f32 %v732, %v664
      %v739 = vmul.f32 %v732, %v665
      %v740 = vmul.f32 %v732, %v666
      %v741 = vmul.f32 %v732, %v667
      %v742 = vmul.f32 %v732, %v668
      %v743 = vmul.f32 %v732, %v669
      %v744 = vmul.f32 %v732, %v670
      %v745 = vmul.f32 %v732, %v671
      %v746 = vmul.f32 %v732, %v672
      %v747 = vmul.f32 %v732, %v673
      %v748 = vmul.f32 %v732, %v674
      %v749 = vmul.f32 %v732, %v675
      %v750 = vmul.f32 %v732, %v676
      %v751 = vmul.f32 %v732, %v677
      %v752 = vmul.f32 %v732, %v678
      %v753 = vmul.f32 %v732, %v679
      %v754 = vmul.f32 %v732, %v680
      %v755 = vmul.f32 %v732, %v681
      %v756 = vmul.f32 %v732, %v682
      %v757 = vmul.f32 %v732, %v683
      %v758 = vmul.f32 %v732, %v684
      %v759 = vmul.f32 %v732, %v685
      %v760 = vmul.f32 %v732, %v686
      %v761 = vmul.f32 %v732, %v687
      %v762 = vmul.f32 %v732, %v688
      %v763 = vmul.f32 %v732, %v689
      %v764 = vmul.f32 %v732, %v690
      %v765 = vmul.f32 %v732, %v691
      %v766 = vmul.f32 %v732, %v692
      %v767 = vmul.f32 %v732, %v693
      %v768 = vmul.f32 %v732, %v694
      %v769 = vsel %vm695, %v659, %v733
      %v770 = vsel %vm696, %v660, %v734
      %v771 = vsel %vm697, %v661, %v735
      %v772 = vsel %vm698, %v662, %v736
      %v773 = vsel %vm699, %v663, %v737
      %v774 = vsel %vm700, %v664, %v738
      %v775 = vsel %vm701, %v665, %v739
      %v776 = vsel %vm702, %v666, %v740
      %v777 = vsel %vm703, %v667, %v741
      %v778 = vsel %vm704, %v668, %v742
      %v779 = vsel %vm705, %v669, %v743
      %v780 = vsel %vm706, %v670, %v744
      %v781 = vsel %vm707, %v671, %v745
      %v782 = vsel %vm708, %v672, %v746
      %v783 = vsel %vm709, %v673, %v747
      %v784 = vsel %vm710, %v674, %v748
      %v785 = vsel %vm711, %v675, %v749
      %v786 = vsel %vm712, %v676, %v750
      %v787 = vsel %vm713, %v677, %v751
      %v788 = vsel %vm714, %v678, %v752
      %v789 = vsel %vm715, %v679, %v753
      %v790 = vsel %vm716, %v680, %v754
      %v791 = vsel %vm717, %v681, %v755
      %v792 = vsel %vm718, %v682, %v756
      %v793 = vsel %vm719, %v683, %v757
      %v794 = vsel %vm720, %v684, %v758
      %v795 = vsel %vm721, %v685, %v759
      %v796 = vsel %vm722, %v686, %v760
      %v797 = vsel %vm723, %v687, %v761
      %v798 = vsel %vm724, %v688, %v762
      %v799 = vsel %vm725, %v689, %v763
      %v800 = vsel %vm726, %v690, %v764
      %v801 = vsel %vm727, %v691, %v765
      %v802 = vsel %vm728, %v692, %v766
      %v803 = vsel %vm729, %v693, %v767
      %v804 = vsel %vm730, %v694, %v768
      %s805 = ssub.s32 %s536, 1
      %v806 = vstv %s805
      %v807 = vadd.s32 %v806, 1
      %v808 = vadd.s32 %v806, 2
      %v809 = vadd.s32 %v806, 3
      %v810 = vadd.s32 %v806, 4
      %v811 = vadd.s32 %v806, 5
      %v812 = vadd.s32 %v806, 6
      %v813 = vadd.s32 %v806, 7
      %v814 = vadd.s32 %v806, 8
      %v815 = vadd.s32 %v806, 9
      %v816 = vadd.s32 %v806, 10
      %v817 = vadd.s32 %v806, 11
      %v818 = vadd.s32 %v806, 12
      %v819 = vadd.s32 %v806, 13
      %v820 = vadd.s32 %v806, 14
      %v821 = vadd.s32 %v806, 15
      %v822 = vadd.s32 %v806, 16
      %v823 = vadd.s32 %v806, 17
      %vm824 = vcmp.ge.s32.totalorder %v806, 0
      %vm825 = vcmp.ge.s32.totalorder %v807, 0
      %vm826 = vcmp.ge.s32.totalorder %v808, 0
      %vm827 = vcmp.ge.s32.totalorder %v809, 0
      %vm828 = vcmp.ge.s32.totalorder %v810, 0
      %vm829 = vcmp.ge.s32.totalorder %v811, 0
      %vm830 = vcmp.ge.s32.totalorder %v812, 0
      %vm831 = vcmp.ge.s32.totalorder %v813, 0
      %vm832 = vcmp.ge.s32.totalorder %v814, 0
      %vm833 = vcmp.ge.s32.totalorder %v815, 0
      %vm834 = vcmp.ge.s32.totalorder %v816, 0
      %vm835 = vcmp.ge.s32.totalorder %v817, 0
      %vm836 = vcmp.ge.s32.totalorder %v818, 0
      %vm837 = vcmp.ge.s32.totalorder %v819, 0
      %vm838 = vcmp.ge.s32.totalorder %v820, 0
      %vm839 = vcmp.ge.s32.totalorder %v821, 0
      %vm840 = vcmp.ge.s32.totalorder %v822, 0
      %vm841 = vcmp.ge.s32.totalorder %v823, 0
      %vm842 = vcmp.lt.s32.totalorder %v806, 16
      %vm843 = vcmp.lt.s32.totalorder %v807, 16
      %vm844 = vcmp.lt.s32.totalorder %v808, 16
      %vm845 = vcmp.lt.s32.totalorder %v809, 16
      %vm846 = vcmp.lt.s32.totalorder %v810, 16
      %vm847 = vcmp.lt.s32.totalorder %v811, 16
      %vm848 = vcmp.lt.s32.totalorder %v812, 16
      %vm849 = vcmp.lt.s32.totalorder %v813, 16
      %vm850 = vcmp.lt.s32.totalorder %v814, 16
      %vm851 = vcmp.lt.s32.totalorder %v815, 16
      %vm852 = vcmp.lt.s32.totalorder %v816, 16
      %vm853 = vcmp.lt.s32.totalorder %v817, 16
      %vm854 = vcmp.lt.s32.totalorder %v818, 16
      %vm855 = vcmp.lt.s32.totalorder %v819, 16
      %vm856 = vcmp.lt.s32.totalorder %v820, 16
      %vm857 = vcmp.lt.s32.totalorder %v821, 16
      %vm858 = vcmp.lt.s32.totalorder %v822, 16
      %vm859 = vcmp.lt.s32.totalorder %v823, 16
      %vm860 = vmand %vm824, %vm842
      %vm861 = vmand %vm825, %vm843
      %vm862 = vmand %vm826, %vm844
      %vm863 = vmand %vm827, %vm845
      %vm864 = vmand %vm828, %vm846
      %vm865 = vmand %vm829, %vm847
      %vm866 = vmand %vm830, %vm848
      %vm867 = vmand %vm831, %vm849
      %vm868 = vmand %vm832, %vm850
      %vm869 = vmand %vm833, %vm851
      %vm870 = vmand %vm834, %vm852
      %vm871 = vmand %vm835, %vm853
      %vm872 = vmand %vm836, %vm854
      %vm873 = vmand %vm837, %vm855
      %vm874 = vmand %vm838, %vm856
      %vm875 = vmand %vm839, %vm857
      %vm876 = vmand %vm840, %vm858
      %vm877 = vmand %vm841, %vm859
      %v878 = vsel %vm860, 1, 0
      %v879 = vsel %vm861, 1, 0
      %v880 = vsel %vm862, 1, 0
      %v881 = vsel %vm863, 1, 0
      %v882 = vsel %vm864, 1, 0
      %v883 = vsel %vm865, 1, 0
      %v884 = vsel %vm866, 1, 0
      %v885 = vsel %vm867, 1, 0
      %v886 = vsel %vm868, 1, 0
      %v887 = vsel %vm869, 1, 0
      %v888 = vsel %vm870, 1, 0
      %v889 = vsel %vm871, 1, 0
      %v890 = vsel %vm872, 1, 0
      %v891 = vsel %vm873, 1, 0
      %v892 = vsel %vm874, 1, 0
      %v893 = vsel %vm875, 1, 0
      %v894 = vsel %vm876, 1, 0
      %v895 = vsel %vm877, 1, 0
      %vm896 = vcmp.eq.s32.totalorder %v878, 1
      %vm897 = vcmp.eq.s32.totalorder %v879, 1
      %vm898 = vcmp.eq.s32.totalorder %v880, 1
      %vm899 = vcmp.eq.s32.totalorder %v881, 1
      %vm900 = vcmp.eq.s32.totalorder %v882, 1
      %vm901 = vcmp.eq.s32.totalorder %v883, 1
      %vm902 = vcmp.eq.s32.totalorder %v884, 1
      %vm903 = vcmp.eq.s32.totalorder %v885, 1
      %vm904 = vcmp.eq.s32.totalorder %v886, 1
      %vm905 = vcmp.eq.s32.totalorder %v887, 1
      %vm906 = vcmp.eq.s32.totalorder %v888, 1
      %vm907 = vcmp.eq.s32.totalorder %v889, 1
      %vm908 = vcmp.eq.s32.totalorder %v890, 1
      %vm909 = vcmp.eq.s32.totalorder %v891, 1
      %vm910 = vcmp.eq.s32.totalorder %v892, 1
      %vm911 = vcmp.eq.s32.totalorder %v893, 1
      %vm912 = vcmp.eq.s32.totalorder %v894, 1
      %vm913 = vcmp.eq.s32.totalorder %v895, 1
      %v914 = vsel %vm896, %v769, 0.0
      %v915 = vsel %vm896, %v770, 0.0
      %v916 = vsel %vm897, %v771, 0.0
      %v917 = vsel %vm897, %v772, 0.0
      %v918 = vsel %vm898, %v773, 0.0
      %v919 = vsel %vm898, %v774, 0.0
      %v920 = vsel %vm899, %v775, 0.0
      %v921 = vsel %vm899, %v776, 0.0
      %v922 = vsel %vm900, %v777, 0.0
      %v923 = vsel %vm900, %v778, 0.0
      %v924 = vsel %vm901, %v779, 0.0
      %v925 = vsel %vm901, %v780, 0.0
      %v926 = vsel %vm902, %v781, 0.0
      %v927 = vsel %vm902, %v782, 0.0
      %v928 = vsel %vm903, %v783, 0.0
      %v929 = vsel %vm903, %v784, 0.0
      %v930 = vsel %vm904, %v785, 0.0
      %v931 = vsel %vm904, %v786, 0.0
      %v932 = vsel %vm905, %v787, 0.0
      %v933 = vsel %vm905, %v788, 0.0
      %v934 = vsel %vm906, %v789, 0.0
      %v935 = vsel %vm906, %v790, 0.0
      %v936 = vsel %vm907, %v791, 0.0
      %v937 = vsel %vm907, %v792, 0.0
      %v938 = vsel %vm908, %v793, 0.0
      %v939 = vsel %vm908, %v794, 0.0
      %v940 = vsel %vm909, %v795, 0.0
      %v941 = vsel %vm909, %v796, 0.0
      %v942 = vsel %vm910, %v797, 0.0
      %v943 = vsel %vm910, %v798, 0.0
      %v944 = vsel %vm911, %v799, 0.0
      %v945 = vsel %vm911, %v800, 0.0
      %v946 = vsel %vm912, %v801, 0.0
      %v947 = vsel %vm912, %v802, 0.0
      %v948 = vsel %vm913, %v803, 0.0
      %v949 = vsel %vm913, %v804, 0.0
      %v950 = vpack.c.bf16 %v915, %v914
      %v951 = vpack.c.bf16 %v917, %v916
      %v952 = vpack.c.bf16 %v919, %v918
      %v953 = vpack.c.bf16 %v921, %v920
      %v954 = vpack.c.bf16 %v923, %v922
      %v955 = vpack.c.bf16 %v925, %v924
      %v956 = vpack.c.bf16 %v927, %v926
      %v957 = vpack.c.bf16 %v929, %v928
      %v958 = vpack.c.bf16 %v931, %v930
      %v959 = vpack.c.bf16 %v933, %v932
      %v960 = vpack.c.bf16 %v935, %v934
      %v961 = vpack.c.bf16 %v937, %v936
      %v962 = vpack.c.bf16 %v939, %v938
      %v963 = vpack.c.bf16 %v941, %v940
      %v964 = vpack.c.bf16 %v943, %v942
      %v965 = vpack.c.bf16 %v945, %v944
      %v966 = vpack.c.bf16 %v947, %v946
      %v967 = vpack.c.bf16 %v949, %v948
      %v969 = vshrl.u32 %v950, 16
      %v971 = vrot.slane %v969, 7
      %v972 = vshll.u32 %v950, 16
      %v974 = vor.u32 %v971, %v972
      %v976 = vshrl.u32 %v951, 16
      %v978 = vrot.slane %v976, 7
      %v979 = vshll.u32 %v951, 16
      %v981 = vor.u32 %v978, %v979
      %v983 = vshrl.u32 %v952, 16
      %v985 = vrot.slane %v983, 7
      %v986 = vshll.u32 %v952, 16
      %v988 = vor.u32 %v985, %v986
      %v990 = vshrl.u32 %v953, 16
      %v992 = vrot.slane %v990, 7
      %v993 = vshll.u32 %v953, 16
      %v995 = vor.u32 %v992, %v993
      %v997 = vshrl.u32 %v954, 16
      %v999 = vrot.slane %v997, 7
      %v1000 = vshll.u32 %v954, 16
      %v1002 = vor.u32 %v999, %v1000
      %v1004 = vshrl.u32 %v955, 16
      %v1006 = vrot.slane %v1004, 7
      %v1007 = vshll.u32 %v955, 16
      %v1009 = vor.u32 %v1006, %v1007
      %v1011 = vshrl.u32 %v956, 16
      %v1013 = vrot.slane %v1011, 7
      %v1014 = vshll.u32 %v956, 16
      %v1016 = vor.u32 %v1013, %v1014
      %v1018 = vshrl.u32 %v957, 16
      %v1020 = vrot.slane %v1018, 7
      %v1021 = vshll.u32 %v957, 16
      %v1023 = vor.u32 %v1020, %v1021
      %v1025 = vshrl.u32 %v958, 16
      %v1027 = vrot.slane %v1025, 7
      %v1028 = vshll.u32 %v958, 16
      %v1030 = vor.u32 %v1027, %v1028
      %v1032 = vshrl.u32 %v959, 16
      %v1034 = vrot.slane %v1032, 7
      %v1035 = vshll.u32 %v959, 16
      %v1037 = vor.u32 %v1034, %v1035
      %v1039 = vshrl.u32 %v960, 16
      %v1041 = vrot.slane %v1039, 7
      %v1042 = vshll.u32 %v960, 16
      %v1044 = vor.u32 %v1041, %v1042
      %v1046 = vshrl.u32 %v961, 16
      %v1048 = vrot.slane %v1046, 7
      %v1049 = vshll.u32 %v961, 16
      %v1051 = vor.u32 %v1048, %v1049
      %v1053 = vshrl.u32 %v962, 16
      %v1055 = vrot.slane %v1053, 7
      %v1056 = vshll.u32 %v962, 16
      %v1058 = vor.u32 %v1055, %v1056
      %v1060 = vshrl.u32 %v963, 16
      %v1062 = vrot.slane %v1060, 7
      %v1063 = vshll.u32 %v963, 16
      %v1065 = vor.u32 %v1062, %v1063
      %v1067 = vshrl.u32 %v964, 16
      %v1069 = vrot.slane %v1067, 7
      %v1070 = vshll.u32 %v964, 16
      %v1072 = vor.u32 %v1069, %v1070
      %v1074 = vshrl.u32 %v965, 16
      %v1076 = vrot.slane %v1074, 7
      %v1077 = vshll.u32 %v965, 16
      %v1079 = vor.u32 %v1076, %v1077
      %v1081 = vshrl.u32 %v966, 16
      %v1083 = vrot.slane %v1081, 7
      %v1084 = vshll.u32 %v966, 16
      %v1086 = vor.u32 %v1083, %v1084
      %v1088 = vshrl.u32 %v967, 16
      %v1090 = vrot.slane %v1088, 7
      %v1091 = vshll.u32 %v967, 16
      %v1093 = vor.u32 %v1090, %v1091
      %vm1130 = vcmask 1040384
      %vm1131 = vsmask.f32 256
      %vm1132 = vmand %vm1130, %vm1131
      %v1133 = vsel %vm1132, 0, %v974
      %v1134 = vsel %vm1132, 0, %v981
      %v1135 = vsel %vm1132, 0, %v988
      %v1136 = vsel %vm1132, 0, %v995
      %v1137 = vsel %vm1132, 0, %v1002
      %v1138 = vsel %vm1132, 0, %v1009
      %v1139 = vsel %vm1132, 0, %v1016
      %v1140 = vsel %vm1132, 0, %v1023
      %v1141 = vsel %vm1132, 0, %v1030
      %v1142 = vsel %vm1132, 0, %v1037
      %v1143 = vsel %vm1132, 0, %v1044
      %v1144 = vsel %vm1132, 0, %v1051
      %v1145 = vsel %vm1132, 0, %v1058
      %v1146 = vsel %vm1132, 0, %v1065
      %v1147 = vsel %vm1132, 0, %v1072
      %v1148 = vsel %vm1132, 0, %v1079
      %v1149 = vsel %vm1132, 0, %v1086
      %v1150 = vsel %vm1132, 0, %v1093
      %v1151 = vsel %vm1132, %v971, 0
      %v1152 = vsel %vm1132, %v978, 0
      %v1153 = vsel %vm1132, %v985, 0
      %v1154 = vsel %vm1132, %v992, 0
      %v1155 = vsel %vm1132, %v999, 0
      %v1156 = vsel %vm1132, %v1006, 0
      %v1157 = vsel %vm1132, %v1013, 0
      %v1158 = vsel %vm1132, %v1020, 0
      %v1159 = vsel %vm1132, %v1027, 0
      %v1160 = vsel %vm1132, %v1034, 0
      %v1161 = vsel %vm1132, %v1041, 0
      %v1162 = vsel %vm1132, %v1048, 0
      %v1163 = vsel %vm1132, %v1055, 0
      %v1164 = vsel %vm1132, %v1062, 0
      %v1165 = vsel %vm1132, %v1069, 0
      %v1166 = vsel %vm1132, %v1076, 0
      %v1167 = vsel %vm1132, %v1083, 0
      %v1168 = vsel %vm1132, %v1090, 0
      %vm1169 = vsmask.f32 7424
      %v1171 = vshrl.u32 %v1133, 16
      %v1173 = vshll.u32 %v1133, 16
      %v1175 = vrot.slane %v1173, 1
      %v1176 = vor.u32 %v1171, %v1175
      %v1178 = vshll.u32 %v1151, 16
      %v1180 = vrot.slane %v1178, 1
      %v1181 = vsel %vm1169, %v1176, %v1180
      %v1183 = vshrl.u32 %v1134, 16
      %v1185 = vshll.u32 %v1134, 16
      %v1187 = vrot.slane %v1185, 1
      %v1188 = vor.u32 %v1183, %v1187
      %v1190 = vshll.u32 %v1152, 16
      %v1192 = vrot.slane %v1190, 1
      %v1193 = vsel %vm1169, %v1188, %v1192
      %v1195 = vshrl.u32 %v1135, 16
      %v1197 = vshll.u32 %v1135, 16
      %v1199 = vrot.slane %v1197, 1
      %v1200 = vor.u32 %v1195, %v1199
      %v1202 = vshll.u32 %v1153, 16
      %v1204 = vrot.slane %v1202, 1
      %v1205 = vsel %vm1169, %v1200, %v1204
      %v1207 = vshrl.u32 %v1136, 16
      %v1209 = vshll.u32 %v1136, 16
      %v1211 = vrot.slane %v1209, 1
      %v1212 = vor.u32 %v1207, %v1211
      %v1214 = vshll.u32 %v1154, 16
      %v1216 = vrot.slane %v1214, 1
      %v1217 = vsel %vm1169, %v1212, %v1216
      %v1219 = vshrl.u32 %v1137, 16
      %v1221 = vshll.u32 %v1137, 16
      %v1223 = vrot.slane %v1221, 1
      %v1224 = vor.u32 %v1219, %v1223
      %v1226 = vshll.u32 %v1155, 16
      %v1228 = vrot.slane %v1226, 1
      %v1229 = vsel %vm1169, %v1224, %v1228
      %v1231 = vshrl.u32 %v1138, 16
      %v1233 = vshll.u32 %v1138, 16
      %v1235 = vrot.slane %v1233, 1
      %v1236 = vor.u32 %v1231, %v1235
      %v1238 = vshll.u32 %v1156, 16
      %v1240 = vrot.slane %v1238, 1
      %v1241 = vsel %vm1169, %v1236, %v1240
      %v1243 = vshrl.u32 %v1139, 16
      %v1245 = vshll.u32 %v1139, 16
      %v1247 = vrot.slane %v1245, 1
      %v1248 = vor.u32 %v1243, %v1247
      %v1250 = vshll.u32 %v1157, 16
      %v1252 = vrot.slane %v1250, 1
      %v1253 = vsel %vm1169, %v1248, %v1252
      %v1255 = vshrl.u32 %v1140, 16
      %v1257 = vshll.u32 %v1140, 16
      %v1259 = vrot.slane %v1257, 1
      %v1260 = vor.u32 %v1255, %v1259
      %v1262 = vshll.u32 %v1158, 16
      %v1264 = vrot.slane %v1262, 1
      %v1265 = vsel %vm1169, %v1260, %v1264
      %v1267 = vshrl.u32 %v1141, 16
      %v1269 = vshll.u32 %v1141, 16
      %v1271 = vrot.slane %v1269, 1
      %v1272 = vor.u32 %v1267, %v1271
      %v1274 = vshll.u32 %v1159, 16
      %v1276 = vrot.slane %v1274, 1
      %v1277 = vsel %vm1169, %v1272, %v1276
      %v1279 = vshrl.u32 %v1142, 16
      %v1281 = vshll.u32 %v1142, 16
      %v1283 = vrot.slane %v1281, 1
      %v1284 = vor.u32 %v1279, %v1283
      %v1286 = vshll.u32 %v1160, 16
      %v1288 = vrot.slane %v1286, 1
      %v1289 = vsel %vm1169, %v1284, %v1288
      %v1291 = vshrl.u32 %v1143, 16
      %v1293 = vshll.u32 %v1143, 16
      %v1295 = vrot.slane %v1293, 1
      %v1296 = vor.u32 %v1291, %v1295
      %v1298 = vshll.u32 %v1161, 16
      %v1300 = vrot.slane %v1298, 1
      %v1301 = vsel %vm1169, %v1296, %v1300
      %v1303 = vshrl.u32 %v1144, 16
      %v1305 = vshll.u32 %v1144, 16
      %v1307 = vrot.slane %v1305, 1
      %v1308 = vor.u32 %v1303, %v1307
      %v1310 = vshll.u32 %v1162, 16
      %v1312 = vrot.slane %v1310, 1
      %v1313 = vsel %vm1169, %v1308, %v1312
      %v1315 = vshrl.u32 %v1145, 16
      %v1317 = vshll.u32 %v1145, 16
      %v1319 = vrot.slane %v1317, 1
      %v1320 = vor.u32 %v1315, %v1319
      %v1322 = vshll.u32 %v1163, 16
      %v1324 = vrot.slane %v1322, 1
      %v1325 = vsel %vm1169, %v1320, %v1324
      %v1327 = vshrl.u32 %v1146, 16
      %v1329 = vshll.u32 %v1146, 16
      %v1331 = vrot.slane %v1329, 1
      %v1332 = vor.u32 %v1327, %v1331
      %v1334 = vshll.u32 %v1164, 16
      %v1336 = vrot.slane %v1334, 1
      %v1337 = vsel %vm1169, %v1332, %v1336
      %v1339 = vshrl.u32 %v1147, 16
      %v1341 = vshll.u32 %v1147, 16
      %v1343 = vrot.slane %v1341, 1
      %v1344 = vor.u32 %v1339, %v1343
      %v1346 = vshll.u32 %v1165, 16
      %v1348 = vrot.slane %v1346, 1
      %v1349 = vsel %vm1169, %v1344, %v1348
      %v1351 = vshrl.u32 %v1148, 16
      %v1353 = vshll.u32 %v1148, 16
      %v1355 = vrot.slane %v1353, 1
      %v1356 = vor.u32 %v1351, %v1355
      %v1358 = vshll.u32 %v1166, 16
      %v1360 = vrot.slane %v1358, 1
      %v1361 = vsel %vm1169, %v1356, %v1360
      %vm1410 = vcmask 1046528
      %v1411 = vrot.slane %v1133, 1
      %v1412 = vrot.slane %v1151, 1
      %v1413 = vsel %vm1410, %v1411, %v1412
      %v1414 = vrot.slane %v1134, 1
      %v1415 = vrot.slane %v1152, 1
      %v1416 = vsel %vm1410, %v1414, %v1415
      %v1417 = vrot.slane %v1135, 1
      %v1418 = vrot.slane %v1153, 1
      %v1419 = vsel %vm1410, %v1417, %v1418
      %v1420 = vrot.slane %v1136, 1
      %v1421 = vrot.slane %v1154, 1
      %v1422 = vsel %vm1410, %v1420, %v1421
      %v1423 = vrot.slane %v1137, 1
      %v1424 = vrot.slane %v1155, 1
      %v1425 = vsel %vm1410, %v1423, %v1424
      %v1426 = vrot.slane %v1138, 1
      %v1427 = vrot.slane %v1156, 1
      %v1428 = vsel %vm1410, %v1426, %v1427
      %v1429 = vrot.slane %v1139, 1
      %v1430 = vrot.slane %v1157, 1
      %v1431 = vsel %vm1410, %v1429, %v1430
      %v1432 = vrot.slane %v1140, 1
      %v1433 = vrot.slane %v1158, 1
      %v1434 = vsel %vm1410, %v1432, %v1433
      %v1435 = vrot.slane %v1141, 1
      %v1436 = vrot.slane %v1159, 1
      %v1437 = vsel %vm1410, %v1435, %v1436
      %v1438 = vrot.slane %v1142, 1
      %v1439 = vrot.slane %v1160, 1
      %v1440 = vsel %vm1410, %v1438, %v1439
      %v1441 = vrot.slane %v1143, 1
      %v1442 = vrot.slane %v1161, 1
      %v1443 = vsel %vm1410, %v1441, %v1442
      %v1444 = vrot.slane %v1144, 1
      %v1445 = vrot.slane %v1162, 1
      %v1446 = vsel %vm1410, %v1444, %v1445
      %v1447 = vrot.slane %v1145, 1
      %v1448 = vrot.slane %v1163, 1
      %v1449 = vsel %vm1410, %v1447, %v1448
      %v1450 = vrot.slane %v1146, 1
      %v1451 = vrot.slane %v1164, 1
      %v1452 = vsel %vm1410, %v1450, %v1451
      %v1453 = vrot.slane %v1147, 1
      %v1454 = vrot.slane %v1165, 1
      %v1455 = vsel %vm1410, %v1453, %v1454
      %v1456 = vrot.slane %v1148, 1
      %v1457 = vrot.slane %v1166, 1
      %v1458 = vsel %vm1410, %v1456, %v1457
      %v1476 = vshrl.u32 %v1149, 16
      %v1478 = vshll.u32 %v1149, 16
      %v1480 = vrot.slane %v1478, 1
      %v1481 = vor.u32 %v1476, %v1480
      %v1483 = vshll.u32 %v1167, 16
      %v1485 = vrot.slane %v1483, 1
      %v1486 = vsel %vm1169, %v1481, %v1485
      %v1490 = vrot.slane %v1149, 1
      %v1491 = vrot.slane %v1167, 1
      %v1492 = vsel %vm1410, %v1490, %v1491
      %v1495 = vshrl.u32 %v1150, 16
      %v1497 = vshll.u32 %v1150, 16
      %v1499 = vrot.slane %v1497, 1
      %v1500 = vor.u32 %v1495, %v1499
      %v1502 = vshll.u32 %v1168, 16
      %v1504 = vrot.slane %v1502, 1
      %v1505 = vsel %vm1169, %v1500, %v1504
      %v1509 = vrot.slane %v1150, 1
      %v1510 = vrot.slane %v1168, 1
      %v1511 = vsel %vm1410, %v1509, %v1510
      %v1513 = vld [vmem:[%s3] sm:$0xf]
      %v1514 = vld [vmem:[%s3 + $0x4] sm:$0xf]
      %v1515 = vld [vmem:[%s3 + $0x8] sm:$0xf]
      %v1516 = vld [vmem:[%s3 + $0xc] sm:$0xf]
      %v1517 = vld [vmem:[%s3 + $0x10] sm:$0xf]
      %v1518 = vld [vmem:[%s3 + $0x14] sm:$0xf]
      %v1519 = vld [vmem:[%s3 + $0x18] sm:$0xf]
      %v1520 = vld [vmem:[%s3 + $0x1c] sm:$0xf]
      %v1521 = vld [vmem:[%s3 + $0x20] sm:$0xf]
      %v1522 = vld [vmem:[%s3 + $0x24] sm:$0xf]
      %v1523 = vld [vmem:[%s3 + $0x28] sm:$0xf]
      %v1524 = vld [vmem:[%s3 + $0x2c] sm:$0xf]
      %v1525 = vld [vmem:[%s3 + $0x30] sm:$0xf]
      %v1526 = vld [vmem:[%s3 + $0x34] sm:$0xf]
      %v1527 = vld [vmem:[%s3 + $0x38] sm:$0xf]
      %v1528 = vld [vmem:[%s3 + $0x3c] sm:$0xf]
      %v1529 = vld [vmem:[%s3 + $0x40] sm:$0xf]
      %v1530 = vld [vmem:[%s3 + $0x44] sm:$0xf]
      %v1531 = vld [vmem:[%s3 + $0x48] sm:$0xf]
      %v1532 = vld [vmem:[%s3 + $0x4c] sm:$0xf]
      %v1533 = vld [vmem:[%s3 + $0x50] sm:$0xf]
      %v1534 = vld [vmem:[%s3 + $0x54] sm:$0xf]
      %v1535 = vld [vmem:[%s3 + $0x58] sm:$0xf]
      %v1536 = vld [vmem:[%s3 + $0x5c] sm:$0xf]
      %v1537 = vld [vmem:[%s3 + $0x60] sm:$0xf]
      %v1538 = vld [vmem:[%s3 + $0x64] sm:$0xf]
      %v1539 = vld [vmem:[%s3 + $0x68] sm:$0xf]
      %v1540 = vld [vmem:[%s3 + $0x6c] sm:$0xf]
      %v1541 = vld [vmem:[%s3 + $0x70] sm:$0xf]
      %v1542 = vld [vmem:[%s3 + $0x74] sm:$0xf]
      %v1543 = vld [vmem:[%s3 + $0x78] sm:$0xf]
      %v1544 = vld [vmem:[%s3 + $0x7c] sm:$0xf]
      %v1545 = vld [vmem:[%s3 + $0x80] sm:$0xf]
      %v1546 = vld [vmem:[%s3 + $0x84] sm:$0xf]
      %v1547 = vld [vmem:[%s3 + $0x88] sm:$0xf]
      %v1548 = vld [vmem:[%s3 + $0x8c] sm:$0xf]
      %v1549 = vld [vmem:[%s3 + $0x90] sm:$0xf]
      %v1550 = vld [vmem:[%s3 + $0x94] sm:$0xf]
      %v1551 = vld [vmem:[%s3 + $0x98] sm:$0xf]
      %v1552 = vld [vmem:[%s3 + $0x9c] sm:$0xf]
      %v1553 = vld [vmem:[%s3 + $0xa0] sm:$0xf]
      %v1554 = vld [vmem:[%s3 + $0xa4] sm:$0xf]
      %v1555 = vld [vmem:[%s3 + $0xa8] sm:$0xf]
      %v1556 = vld [vmem:[%s3 + $0xac] sm:$0xf]
      %v1557 = vld [vmem:[%s3 + $0xb0] sm:$0xf]
      %v1558 = vld [vmem:[%s3 + $0xb4] sm:$0xf]
      %v1559 = vld [vmem:[%s3 + $0xb8] sm:$0xf]
      %v1560 = vld [vmem:[%s3 + $0xbc] sm:$0xf]
      %v1561 = vld [vmem:[%s3 + $0xc0] sm:$0xf]
      %v1562 = vld [vmem:[%s3 + $0xc4] sm:$0xf]
      %v1563 = vld [vmem:[%s3 + $0xc8] sm:$0xf]
      %v1564 = vld [vmem:[%s3 + $0xcc] sm:$0xf]
      %v1565 = vld [vmem:[%s3 + $0xd0] sm:$0xf]
      %v1566 = vld [vmem:[%s3 + $0xd4] sm:$0xf]
      %v1567 = vld [vmem:[%s3 + $0xd8] sm:$0xf]
      %v1568 = vld [vmem:[%s3 + $0xdc] sm:$0xf]
      %v1569 = vld [vmem:[%s3 + $0xe0] sm:$0xf]
      %v1570 = vld [vmem:[%s3 + $0xe4] sm:$0xf]
      %v1571 = vld [vmem:[%s3 + $0xe8] sm:$0xf]
      %v1572 = vld [vmem:[%s3 + $0xec] sm:$0xf]
      %v1573 = vld [vmem:[%s3 + $0xf0] sm:$0xf]
      %v1574 = vld [vmem:[%s3 + $0xf4] sm:$0xf]
      %v1575 = vld [vmem:[%s3 + $0xf8] sm:$0xf]
      %v1576 = vld [vmem:[%s3 + $0xfc] sm:$0xf]
      %v1577 = vld [vmem:[%s3 + $0x100] sm:$0xf]
      %v1578 = vld [vmem:[%s3 + $0x104] sm:$0xf]
      %v1579 = vld [vmem:[%s3 + $0x108] sm:$0xf]
      %v1580 = vld [vmem:[%s3 + $0x10c] sm:$0xf]
      %v1581 = vld [vmem:[%s3 + $0x110] sm:$0xf]
      %v1582 = vld [vmem:[%s3 + $0x114] sm:$0xf]
      %v1583 = vld [vmem:[%s3 + $0x118] sm:$0xf]
      %v1584 = vld [vmem:[%s3 + $0x11c] sm:$0xf]
      %v1585 = vld [vmem:[%s3 + $0x120] sm:$0xf]
      %v1586 = vld [vmem:[%s3 + $0x124] sm:$0xf]
      %v1587 = vld [vmem:[%s3 + $0x128] sm:$0xf]
      %v1588 = vld [vmem:[%s3 + $0x12c] sm:$0xf]
      %v1589 = vld [vmem:[%s3 + $0x130] sm:$0xf]
      %v1590 = vld [vmem:[%s3 + $0x134] sm:$0xf]
      %v1591 = vld [vmem:[%s3 + $0x138] sm:$0xf]
      %v1592 = vld [vmem:[%s3 + $0x13c] sm:$0xf]
      %v1593 = vld [vmem:[%s3 + $0x140] sm:$0xf]
      %v1594 = vld [vmem:[%s3 + $0x144] sm:$0xf]
      %v1595 = vld [vmem:[%s3 + $0x148] sm:$0xf]
      %v1596 = vld [vmem:[%s3 + $0x14c] sm:$0xf]
      %v1597 = vld [vmem:[%s3 + $0x150] sm:$0xf]
      %v1598 = vld [vmem:[%s3 + $0x154] sm:$0xf]
      %v1599 = vld [vmem:[%s3 + $0x158] sm:$0xf]
      %v1600 = vld [vmem:[%s3 + $0x15c] sm:$0xf]
      %v1601 = vld [vmem:[%s3 + $0x160] sm:$0xf]
      %v1602 = vld [vmem:[%s3 + $0x164] sm:$0xf]
      %v1603 = vld [vmem:[%s3 + $0x168] sm:$0xf]
      %v1604 = vld [vmem:[%s3 + $0x16c] sm:$0xf]
      %v1605 = vld [vmem:[%s3 + $0x170] sm:$0xf]
      %v1606 = vld [vmem:[%s3 + $0x174] sm:$0xf]
      %v1607 = vld [vmem:[%s3 + $0x178] sm:$0xf]
      %v1608 = vld [vmem:[%s3 + $0x17c] sm:$0xf]
      %v1609 = vld [vmem:[%s3 + $0x180] sm:$0xf]
      %v1610 = vld [vmem:[%s3 + $0x184] sm:$0xf]
      %v1611 = vld [vmem:[%s3 + $0x188] sm:$0xf]
      %v1612 = vld [vmem:[%s3 + $0x18c] sm:$0xf]
      %v1613 = vld [vmem:[%s3 + $0x190] sm:$0xf]
      %v1614 = vld [vmem:[%s3 + $0x194] sm:$0xf]
      %v1615 = vld [vmem:[%s3 + $0x198] sm:$0xf]
      %v1616 = vld [vmem:[%s3 + $0x19c] sm:$0xf]
      %v1617 = vld [vmem:[%s3 + $0x1a0] sm:$0xf]
      %v1618 = vld [vmem:[%s3 + $0x1a4] sm:$0xf]
      %v1619 = vld [vmem:[%s3 + $0x1a8] sm:$0xf]
      %v1620 = vld [vmem:[%s3 + $0x1ac] sm:$0xf]
      %v1621 = vld [vmem:[%s3 + $0x1b0] sm:$0xf]
      %v1622 = vld [vmem:[%s3 + $0x1b4] sm:$0xf]
      %v1623 = vld [vmem:[%s3 + $0x1b8] sm:$0xf]
      %v1624 = vld [vmem:[%s3 + $0x1bc] sm:$0xf]
      %v1625 = vld [vmem:[%s3 + $0x1c0] sm:$0xf]
      %v1626 = vld [vmem:[%s3 + $0x1c4] sm:$0xf]
      %v1627 = vld [vmem:[%s3 + $0x1c8] sm:$0xf]
      %v1628 = vld [vmem:[%s3 + $0x1cc] sm:$0xf]
      %v1629 = vld [vmem:[%s3 + $0x1d0] sm:$0xf]
      %v1630 = vld [vmem:[%s3 + $0x1d4] sm:$0xf]
      %v1631 = vld [vmem:[%s3 + $0x1d8] sm:$0xf]
      %v1632 = vld [vmem:[%s3 + $0x1dc] sm:$0xf]
      %v1633 = vld [vmem:[%s3 + $0x1e0] sm:$0xf]
      %v1634 = vld [vmem:[%s3 + $0x1e4] sm:$0xf]
      %v1635 = vld [vmem:[%s3 + $0x1e8] sm:$0xf]
      %v1636 = vld [vmem:[%s3 + $0x1ec] sm:$0xf]
      %v1637 = vld [vmem:[%s3 + $0x1f0] sm:$0xf]
      %v1638 = vld [vmem:[%s3 + $0x1f4] sm:$0xf]
      %v1639 = vld [vmem:[%s3 + $0x1f8] sm:$0xf]
      %v1640 = vld [vmem:[%s3 + $0x1fc] sm:$0xf]
      %v1641 = vld [vmem:[%s3 + $0x200] sm:$0xf]
      %v1642 = vld [vmem:[%s3 + $0x204] sm:$0xf]
      %v1643 = vld [vmem:[%s3 + $0x208] sm:$0xf]
      %v1644 = vld [vmem:[%s3 + $0x20c] sm:$0xf]
      %v1645 = vld [vmem:[%s3 + $0x210] sm:$0xf]
      %v1646 = vld [vmem:[%s3 + $0x214] sm:$0xf]
      %v1647 = vld [vmem:[%s3 + $0x218] sm:$0xf]
      %v1648 = vld [vmem:[%s3 + $0x21c] sm:$0xf]
      %v1649 = vld [vmem:[%s3 + $0x220] sm:$0xf]
      %v1650 = vld [vmem:[%s3 + $0x224] sm:$0xf]
      %v1651 = vld [vmem:[%s3 + $0x228] sm:$0xf]
      %v1652 = vld [vmem:[%s3 + $0x22c] sm:$0xf]
      %v1653 = vld [vmem:[%s3 + $0x230] sm:$0xf]
      %v1654 = vld [vmem:[%s3 + $0x234] sm:$0xf]
      %v1655 = vld [vmem:[%s3 + $0x238] sm:$0xf]
      %v1656 = vld [vmem:[%s3 + $0x23c] sm:$0xf]
      %v1801 = vunpack.c.l.b16 %v1513
      %v1802 = vunpack.c.l.b16 %v1514
      %v1803 = vunpack.c.l.b16 %v1515
      %v1804 = vunpack.c.l.b16 %v1516
      %v1805 = vunpack.c.l.b16 %v1517
      %v1806 = vunpack.c.l.b16 %v1518
      %v1807 = vunpack.c.l.b16 %v1519
      %v1808 = vunpack.c.l.b16 %v1520
      %v1809 = vunpack.c.l.b16 %v1521
      %v1810 = vunpack.c.l.b16 %v1522
      %v1811 = vunpack.c.l.b16 %v1523
      %v1812 = vunpack.c.l.b16 %v1524
      %v1813 = vunpack.c.l.b16 %v1525
      %v1814 = vunpack.c.l.b16 %v1526
      %v1815 = vunpack.c.l.b16 %v1527
      %v1816 = vunpack.c.l.b16 %v1528
      %v1817 = vunpack.c.l.b16 %v1529
      %v1818 = vunpack.c.l.b16 %v1530
      %v1819 = vunpack.c.l.b16 %v1531
      %v1820 = vunpack.c.l.b16 %v1532
      %v1821 = vunpack.c.l.b16 %v1533
      %v1822 = vunpack.c.l.b16 %v1534
      %v1823 = vunpack.c.l.b16 %v1535
      %v1824 = vunpack.c.l.b16 %v1536
      %v1825 = vunpack.c.l.b16 %v1537
      %v1826 = vunpack.c.l.b16 %v1538
      %v1827 = vunpack.c.l.b16 %v1539
      %v1828 = vunpack.c.l.b16 %v1540
      %v1829 = vunpack.c.l.b16 %v1541
      %v1830 = vunpack.c.l.b16 %v1542
      %v1831 = vunpack.c.l.b16 %v1543
      %v1832 = vunpack.c.l.b16 %v1544
      %v1833 = vunpack.c.l.b16 %v1545
      %v1834 = vunpack.c.l.b16 %v1546
      %v1835 = vunpack.c.l.b16 %v1547
      %v1836 = vunpack.c.l.b16 %v1548
      %v1837 = vunpack.c.l.b16 %v1549
      %v1838 = vunpack.c.l.b16 %v1550
      %v1839 = vunpack.c.l.b16 %v1551
      %v1840 = vunpack.c.l.b16 %v1552
      %v1841 = vunpack.c.l.b16 %v1553
      %v1842 = vunpack.c.l.b16 %v1554
      %v1843 = vunpack.c.l.b16 %v1555
      %v1844 = vunpack.c.l.b16 %v1556
      %v1845 = vunpack.c.l.b16 %v1557
      %v1846 = vunpack.c.l.b16 %v1558
      %v1847 = vunpack.c.l.b16 %v1559
      %v1848 = vunpack.c.l.b16 %v1560
      %v1849 = vunpack.c.l.b16 %v1561
      %v1850 = vunpack.c.l.b16 %v1562
      %v1851 = vunpack.c.l.b16 %v1563
      %v1852 = vunpack.c.l.b16 %v1564
      %v1853 = vunpack.c.l.b16 %v1565
      %v1854 = vunpack.c.l.b16 %v1566
      %v1855 = vunpack.c.l.b16 %v1567
      %v1856 = vunpack.c.l.b16 %v1568
      %v1857 = vunpack.c.l.b16 %v1569
      %v1858 = vunpack.c.l.b16 %v1570
      %v1859 = vunpack.c.l.b16 %v1571
      %v1860 = vunpack.c.l.b16 %v1572
      %v1861 = vunpack.c.l.b16 %v1573
      %v1862 = vunpack.c.l.b16 %v1574
      %v1863 = vunpack.c.l.b16 %v1575
      %v1864 = vunpack.c.l.b16 %v1576
      %v1865 = vunpack.c.l.b16 %v1577
      %v1866 = vunpack.c.l.b16 %v1578
      %v1867 = vunpack.c.l.b16 %v1579
      %v1868 = vunpack.c.l.b16 %v1580
      %v1869 = vunpack.c.l.b16 %v1581
      %v1870 = vunpack.c.l.b16 %v1582
      %v1871 = vunpack.c.l.b16 %v1583
      %v1872 = vunpack.c.l.b16 %v1584
      %v1873 = vunpack.c.l.b16 %v1585
      %v1874 = vunpack.c.l.b16 %v1586
      %v1875 = vunpack.c.l.b16 %v1587
      %v1876 = vunpack.c.l.b16 %v1588
      %v1877 = vunpack.c.l.b16 %v1589
      %v1878 = vunpack.c.l.b16 %v1590
      %v1879 = vunpack.c.l.b16 %v1591
      %v1880 = vunpack.c.l.b16 %v1592
      %v1881 = vunpack.c.l.b16 %v1593
      %v1882 = vunpack.c.l.b16 %v1594
      %v1883 = vunpack.c.l.b16 %v1595
      %v1884 = vunpack.c.l.b16 %v1596
      %v1885 = vunpack.c.l.b16 %v1597
      %v1886 = vunpack.c.l.b16 %v1598
      %v1887 = vunpack.c.l.b16 %v1599
      %v1888 = vunpack.c.l.b16 %v1600
      %v1889 = vunpack.c.l.b16 %v1601
      %v1890 = vunpack.c.l.b16 %v1602
      %v1891 = vunpack.c.l.b16 %v1603
      %v1892 = vunpack.c.l.b16 %v1604
      %v1893 = vunpack.c.l.b16 %v1605
      %v1894 = vunpack.c.l.b16 %v1606
      %v1895 = vunpack.c.l.b16 %v1607
      %v1896 = vunpack.c.l.b16 %v1608
      %v1897 = vunpack.c.l.b16 %v1609
      %v1898 = vunpack.c.l.b16 %v1610
      %v1899 = vunpack.c.l.b16 %v1611
      %v1900 = vunpack.c.l.b16 %v1612
      %v1901 = vunpack.c.l.b16 %v1613
      %v1902 = vunpack.c.l.b16 %v1614
      %v1903 = vunpack.c.l.b16 %v1615
      %v1904 = vunpack.c.l.b16 %v1616
      %v1905 = vunpack.c.l.b16 %v1617
      %v1906 = vunpack.c.l.b16 %v1618
      %v1907 = vunpack.c.l.b16 %v1619
      %v1908 = vunpack.c.l.b16 %v1620
      %v1909 = vunpack.c.l.b16 %v1621
      %v1910 = vunpack.c.l.b16 %v1622
      %v1911 = vunpack.c.l.b16 %v1623
      %v1912 = vunpack.c.l.b16 %v1624
      %v1913 = vunpack.c.l.b16 %v1625
      %v1914 = vunpack.c.l.b16 %v1626
      %v1915 = vunpack.c.l.b16 %v1627
      %v1916 = vunpack.c.l.b16 %v1628
      %v1917 = vunpack.c.l.b16 %v1629
      %v1918 = vunpack.c.l.b16 %v1630
      %v1919 = vunpack.c.l.b16 %v1631
      %v1920 = vunpack.c.l.b16 %v1632
      %v1921 = vunpack.c.l.b16 %v1633
      %v1922 = vunpack.c.l.b16 %v1634
      %v1923 = vunpack.c.l.b16 %v1635
      %v1924 = vunpack.c.l.b16 %v1636
      %v1925 = vunpack.c.l.b16 %v1637
      %v1926 = vunpack.c.l.b16 %v1638
      %v1927 = vunpack.c.l.b16 %v1639
      %v1928 = vunpack.c.l.b16 %v1640
      %v1929 = vunpack.c.l.b16 %v1641
      %v1930 = vunpack.c.l.b16 %v1642
      %v1931 = vunpack.c.l.b16 %v1643
      %v1932 = vunpack.c.l.b16 %v1644
      %v1933 = vunpack.c.l.b16 %v1645
      %v1934 = vunpack.c.l.b16 %v1646
      %v1935 = vunpack.c.l.b16 %v1647
      %v1936 = vunpack.c.l.b16 %v1648
      %v1937 = vunpack.c.l.b16 %v1649
      %v1938 = vunpack.c.l.b16 %v1650
      %v1939 = vunpack.c.l.b16 %v1651
      %v1940 = vunpack.c.l.b16 %v1652
      %v1941 = vunpack.c.l.b16 %v1653
      %v1942 = vunpack.c.l.b16 %v1654
      %v1943 = vunpack.c.l.b16 %v1655
      %v1944 = vunpack.c.l.b16 %v1656
      %v1945 = vpack.c.b16 %v1802, %v1801
      %v1946 = vpack.c.b16 %v1804, %v1803
      %v1947 = vpack.c.b16 %v1806, %v1805
      %v1948 = vpack.c.b16 %v1808, %v1807
      %v1949 = vpack.c.b16 %v1810, %v1809
      %v1950 = vpack.c.b16 %v1812, %v1811
      %v1951 = vpack.c.b16 %v1814, %v1813
      %v1952 = vpack.c.b16 %v1816, %v1815
      %v1953 = vpack.c.b16 %v1818, %v1817
      %v1954 = vpack.c.b16 %v1820, %v1819
      %v1955 = vpack.c.b16 %v1822, %v1821
      %v1956 = vpack.c.b16 %v1824, %v1823
      %v1957 = vpack.c.b16 %v1826, %v1825
      %v1958 = vpack.c.b16 %v1828, %v1827
      %v1959 = vpack.c.b16 %v1830, %v1829
      %v1960 = vpack.c.b16 %v1832, %v1831
      %v1961 = vpack.c.b16 %v1834, %v1833
      %v1962 = vpack.c.b16 %v1836, %v1835
      %v1963 = vpack.c.b16 %v1838, %v1837
      %v1964 = vpack.c.b16 %v1840, %v1839
      %v1965 = vpack.c.b16 %v1842, %v1841
      %v1966 = vpack.c.b16 %v1844, %v1843
      %v1967 = vpack.c.b16 %v1846, %v1845
      %v1968 = vpack.c.b16 %v1848, %v1847
      %v1969 = vpack.c.b16 %v1850, %v1849
      %v1970 = vpack.c.b16 %v1852, %v1851
      %v1971 = vpack.c.b16 %v1854, %v1853
      %v1972 = vpack.c.b16 %v1856, %v1855
      %v1973 = vpack.c.b16 %v1858, %v1857
      %v1974 = vpack.c.b16 %v1860, %v1859
      %v1975 = vpack.c.b16 %v1862, %v1861
      %v1976 = vpack.c.b16 %v1864, %v1863
      %v1977 = vpack.c.b16 %v1866, %v1865
      %v1978 = vpack.c.b16 %v1868, %v1867
      %v1979 = vpack.c.b16 %v1870, %v1869
      %v1980 = vpack.c.b16 %v1872, %v1871
      %v1981 = vpack.c.b16 %v1874, %v1873
      %v1982 = vpack.c.b16 %v1876, %v1875
      %v1983 = vpack.c.b16 %v1878, %v1877
      %v1984 = vpack.c.b16 %v1880, %v1879
      %v1985 = vpack.c.b16 %v1882, %v1881
      %v1986 = vpack.c.b16 %v1884, %v1883
      %v1987 = vpack.c.b16 %v1886, %v1885
      %v1988 = vpack.c.b16 %v1888, %v1887
      %v1989 = vpack.c.b16 %v1890, %v1889
      %v1990 = vpack.c.b16 %v1892, %v1891
      %v1991 = vpack.c.b16 %v1894, %v1893
      %v1992 = vpack.c.b16 %v1896, %v1895
      %v1993 = vpack.c.b16 %v1898, %v1897
      %v1994 = vpack.c.b16 %v1900, %v1899
      %v1995 = vpack.c.b16 %v1902, %v1901
      %v1996 = vpack.c.b16 %v1904, %v1903
      %v1997 = vpack.c.b16 %v1906, %v1905
      %v1998 = vpack.c.b16 %v1908, %v1907
      %v1999 = vpack.c.b16 %v1910, %v1909
      %v2000 = vpack.c.b16 %v1912, %v1911
      %v2001 = vpack.c.b16 %v1914, %v1913
      %v2002 = vpack.c.b16 %v1916, %v1915
      %v2003 = vpack.c.b16 %v1918, %v1917
      %v2004 = vpack.c.b16 %v1920, %v1919
      %v2005 = vpack.c.b16 %v1922, %v1921
      %v2006 = vpack.c.b16 %v1924, %v1923
      %v2007 = vpack.c.b16 %v1926, %v1925
      %v2008 = vpack.c.b16 %v1928, %v1927
      %v2009 = vpack.c.b16 %v1930, %v1929
      %v2010 = vpack.c.b16 %v1932, %v1931
      %v2011 = vpack.c.b16 %v1934, %v1933
      %v2012 = vpack.c.b16 %v1936, %v1935
      %v2013 = vpack.c.b16 %v1938, %v1937
      %v2014 = vpack.c.b16 %v1940, %v1939
      %v2015 = vpack.c.b16 %v1942, %v1941
      %v2016 = vpack.c.b16 %v1944, %v1943
      %2089 = vmatprep.subr.bf16.mxu0 0
      %2090 = vmatpush1.bf16.msra.mxu0 %v1952
      %2091 = vmatprep.subr.bf16.mxu0 0
      %2092 = vmatpush1.bf16.msra.mxu0 %v1951
      %2093 = vmatprep.subr.bf16.mxu0 0
      %2094 = vmatpush1.bf16.msra.mxu0 %v1950
      %2095 = vmatprep.subr.bf16.mxu0 0
      %2096 = vmatpush1.bf16.msra.mxu0 %v1949
      %2097 = vmatprep.subr.bf16.mxu0 0
      %2098 = vmatpush1.bf16.msra.mxu0 %v1948
      %2099 = vmatprep.subr.bf16.mxu0 0
      %2100 = vmatpush1.bf16.msra.mxu0 %v1947
      %2101 = vmatprep.subr.bf16.mxu0 0
      %2102 = vmatpush1.bf16.msra.mxu0 %v1946
      %2103 = vmatprep.subr.bf16.mxu0 0
      %2104 = vmatpush1.bf16.msra.mxu0 %v1945
      %2105 = vmatprep.subr.bf16.mxu0 0
      %2106 = vmatpush2.bf16.msra.mxu0 %v1960
      %2107 = vmatprep.subr.bf16.mxu0 0
      %2108 = vmatpush2.bf16.msra.mxu0 %v1959
      %2109 = vmatprep.subr.bf16.mxu0 0
      %2110 = vmatpush2.bf16.msra.mxu0 %v1958
      %2111 = vmatprep.subr.bf16.mxu0 0
      %2112 = vmatpush2.bf16.msra.mxu0 %v1957
      %2113 = vmatprep.subr.bf16.mxu0 0
      %2114 = vmatpush2.bf16.msra.mxu0 %v1956
      %2115 = vmatprep.subr.bf16.mxu0 0
      %2116 = vmatpush2.bf16.msra.mxu0 %v1955
      %2117 = vmatprep.subr.bf16.mxu0 0
      %2118 = vmatpush2.bf16.msra.mxu0 %v1954
      %2119 = vmatprep.subr.bf16.mxu0 0
      %2120 = vmatpush2.bf16.msra.mxu0 %v1953
      %2121 = vmatprep.mubr.bf16.mxu0 %v1181
      %2122 = vmatmul.mubr.bf16.gmra.mxu0 %v1133
      %v2123 = vpop.f32.mrf.mxu0
      %v2124 = vadd.f32 0.0, %v2123
      %v2125 = vpop.f32.mrf.mxu0
      %v2126 = vpop.f32.mrf.mxu0
      %v2127 = vadd.f32 0.0, %v2126
      %v2128 = vpop.f32.mrf.mxu0
      %2129 = vmatprep.mubr.bf16.mxu0 %v1193
      %2130 = vmatmul.mubr.bf16.gmra.mxu0 %v1134
      %v2131 = vpop.f32.mrf.mxu0
      %v2132 = vadd.f32 0.0, %v2131
      %v2133 = vpop.f32.mrf.mxu0
      %v2134 = vpop.f32.mrf.mxu0
      %v2135 = vadd.f32 0.0, %v2134
      %v2136 = vpop.f32.mrf.mxu0
      %2137 = vmatprep.mubr.bf16.mxu0 %v1205
      %2138 = vmatmul.mubr.bf16.gmra.mxu0 %v1135
      %v2139 = vpop.f32.mrf.mxu0
      %v2140 = vadd.f32 0.0, %v2139
      %v2141 = vpop.f32.mrf.mxu0
      %v2142 = vpop.f32.mrf.mxu0
      %v2143 = vadd.f32 0.0, %v2142
      %v2144 = vpop.f32.mrf.mxu0
      %2145 = vmatprep.mubr.bf16.mxu0 %v1217
      %2146 = vmatmul.mubr.bf16.gmra.mxu0 %v1136
      %v2147 = vpop.f32.mrf.mxu0
      %v2148 = vadd.f32 0.0, %v2147
      %v2149 = vpop.f32.mrf.mxu0
      %v2150 = vpop.f32.mrf.mxu0
      %v2151 = vadd.f32 0.0, %v2150
      %v2152 = vpop.f32.mrf.mxu0
      %2153 = vmatprep.mubr.bf16.mxu0 %v1229
      %2154 = vmatmul.mubr.bf16.gmra.mxu0 %v1137
      %v2155 = vpop.f32.mrf.mxu0
      %v2156 = vadd.f32 0.0, %v2155
      %v2157 = vpop.f32.mrf.mxu0
      %v2158 = vpop.f32.mrf.mxu0
      %v2159 = vadd.f32 0.0, %v2158
      %v2160 = vpop.f32.mrf.mxu0
      %2161 = vmatprep.mubr.bf16.mxu0 %v1241
      %2162 = vmatmul.mubr.bf16.gmra.mxu0 %v1138
      %v2163 = vpop.f32.mrf.mxu0
      %v2164 = vadd.f32 0.0, %v2163
      %v2165 = vpop.f32.mrf.mxu0
      %v2166 = vpop.f32.mrf.mxu0
      %v2167 = vadd.f32 0.0, %v2166
      %v2168 = vpop.f32.mrf.mxu0
      %2169 = vmatprep.mubr.bf16.mxu0 %v1253
      %2170 = vmatmul.mubr.bf16.gmra.mxu0 %v1139
      %v2171 = vpop.f32.mrf.mxu0
      %v2172 = vadd.f32 0.0, %v2171
      %v2173 = vpop.f32.mrf.mxu0
      %v2174 = vpop.f32.mrf.mxu0
      %v2175 = vadd.f32 0.0, %v2174
      %v2176 = vpop.f32.mrf.mxu0
      %2177 = vmatprep.mubr.bf16.mxu0 %v1265
      %2178 = vmatmul.mubr.bf16.gmra.mxu0 %v1140
      %v2179 = vpop.f32.mrf.mxu0
      %v2180 = vadd.f32 0.0, %v2179
      %v2181 = vpop.f32.mrf.mxu0
      %v2182 = vpop.f32.mrf.mxu0
      %v2183 = vadd.f32 0.0, %v2182
      %v2184 = vpop.f32.mrf.mxu0
      %2185 = vmatprep.mubr.bf16.mxu0 %v1277
      %2186 = vmatmul.mubr.bf16.gmra.mxu0 %v1141
      %v2187 = vpop.f32.mrf.mxu0
      %v2188 = vadd.f32 0.0, %v2187
      %v2189 = vpop.f32.mrf.mxu0
      %v2190 = vpop.f32.mrf.mxu0
      %v2191 = vadd.f32 0.0, %v2190
      %v2192 = vpop.f32.mrf.mxu0
      %2193 = vmatprep.mubr.bf16.mxu0 %v1289
      %2194 = vmatmul.mubr.bf16.gmra.mxu0 %v1142
      %v2195 = vpop.f32.mrf.mxu0
      %v2196 = vadd.f32 0.0, %v2195
      %v2197 = vpop.f32.mrf.mxu0
      %v2198 = vpop.f32.mrf.mxu0
      %v2199 = vadd.f32 0.0, %v2198
      %v2200 = vpop.f32.mrf.mxu0
      %2201 = vmatprep.mubr.bf16.mxu0 %v1301
      %2202 = vmatmul.mubr.bf16.gmra.mxu0 %v1143
      %v2203 = vpop.f32.mrf.mxu0
      %v2204 = vadd.f32 0.0, %v2203
      %v2205 = vpop.f32.mrf.mxu0
      %v2206 = vpop.f32.mrf.mxu0
      %v2207 = vadd.f32 0.0, %v2206
      %v2208 = vpop.f32.mrf.mxu0
      %2209 = vmatprep.mubr.bf16.mxu0 %v1313
      %2210 = vmatmul.mubr.bf16.gmra.mxu0 %v1144
      %v2211 = vpop.f32.mrf.mxu0
      %v2212 = vadd.f32 0.0, %v2211
      %v2213 = vpop.f32.mrf.mxu0
      %v2214 = vpop.f32.mrf.mxu0
      %v2215 = vadd.f32 0.0, %v2214
      %v2216 = vpop.f32.mrf.mxu0
      %2217 = vmatprep.mubr.bf16.mxu0 %v1325
      %2218 = vmatmul.mubr.bf16.gmra.mxu0 %v1145
      %v2219 = vpop.f32.mrf.mxu0
      %v2220 = vadd.f32 0.0, %v2219
      %v2221 = vpop.f32.mrf.mxu0
      %v2222 = vpop.f32.mrf.mxu0
      %v2223 = vadd.f32 0.0, %v2222
      %v2224 = vpop.f32.mrf.mxu0
      %2225 = vmatprep.mubr.bf16.mxu0 %v1337
      %2226 = vmatmul.mubr.bf16.gmra.mxu0 %v1146
      %v2227 = vpop.f32.mrf.mxu0
      %v2228 = vadd.f32 0.0, %v2227
      %v2229 = vpop.f32.mrf.mxu0
      %v2230 = vpop.f32.mrf.mxu0
      %v2231 = vadd.f32 0.0, %v2230
      %v2232 = vpop.f32.mrf.mxu0
      %2233 = vmatprep.mubr.bf16.mxu0 %v1349
      %2234 = vmatmul.mubr.bf16.gmra.mxu0 %v1147
      %v2235 = vpop.f32.mrf.mxu0
      %v2236 = vadd.f32 0.0, %v2235
      %v2237 = vpop.f32.mrf.mxu0
      %v2238 = vpop.f32.mrf.mxu0
      %v2239 = vadd.f32 0.0, %v2238
      %v2240 = vpop.f32.mrf.mxu0
      %2241 = vmatprep.mubr.bf16.mxu0 %v1361
      %2242 = vmatmul.mubr.bf16.gmra.mxu0 %v1148
      %v2243 = vpop.f32.mrf.mxu0
      %v2244 = vadd.f32 0.0, %v2243
      %v2245 = vpop.f32.mrf.mxu0
      %v2246 = vpop.f32.mrf.mxu0
      %v2247 = vadd.f32 0.0, %v2246
      %v2248 = vpop.f32.mrf.mxu0
      %2249 = vdwg.mxu0
      %2250 = vmatprep.subr.bf16.mxu0 0
      %2251 = vmatpush1.bf16.msra.mxu0 %v1968
      %2252 = vmatprep.subr.bf16.mxu0 0
      %2253 = vmatpush1.bf16.msra.mxu0 %v1967
      %2254 = vmatprep.subr.bf16.mxu0 0
      %2255 = vmatpush1.bf16.msra.mxu0 %v1966
      %2256 = vmatprep.subr.bf16.mxu0 0
      %2257 = vmatpush1.bf16.msra.mxu0 %v1965
      %2258 = vmatprep.subr.bf16.mxu0 0
      %2259 = vmatpush1.bf16.msra.mxu0 %v1964
      %2260 = vmatprep.subr.bf16.mxu0 0
      %2261 = vmatpush1.bf16.msra.mxu0 %v1963
      %2262 = vmatprep.subr.bf16.mxu0 0
      %2263 = vmatpush1.bf16.msra.mxu0 %v1962
      %2264 = vmatprep.subr.bf16.mxu0 0
      %2265 = vmatpush1.bf16.msra.mxu0 %v1961
      %2266 = vmatprep.subr.bf16.mxu0 0
      %2267 = vmatpush2.bf16.msra.mxu0 %v1976
      %2268 = vmatprep.subr.bf16.mxu0 0
      %2269 = vmatpush2.bf16.msra.mxu0 %v1975
      %2270 = vmatprep.subr.bf16.mxu0 0
      %2271 = vmatpush2.bf16.msra.mxu0 %v1974
      %2272 = vmatprep.subr.bf16.mxu0 0
      %2273 = vmatpush2.bf16.msra.mxu0 %v1973
      %2274 = vmatprep.subr.bf16.mxu0 0
      %2275 = vmatpush2.bf16.msra.mxu0 %v1972
      %2276 = vmatprep.subr.bf16.mxu0 0
      %2277 = vmatpush2.bf16.msra.mxu0 %v1971
      %2278 = vmatprep.subr.bf16.mxu0 0
      %2279 = vmatpush2.bf16.msra.mxu0 %v1970
      %2280 = vmatprep.subr.bf16.mxu0 0
      %2281 = vmatpush2.bf16.msra.mxu0 %v1969
      %2282 = vmatprep.mubr.bf16.mxu0 %v1134
      %2283 = vmatmul.mubr.bf16.gmra.mxu0 %v1413
      %v2284 = vpop.f32.mrf.mxu0
      %v2285 = vadd.f32 %v2124, %v2284
      %v2286 = vpop.f32.mrf.mxu0
      %v2287 = vpop.f32.mrf.mxu0
      %v2288 = vadd.f32 %v2127, %v2287
      %v2289 = vpop.f32.mrf.mxu0
      %2290 = vmatprep.mubr.bf16.mxu0 %v1135
      %2291 = vmatmul.mubr.bf16.gmra.mxu0 %v1416
      %v2292 = vpop.f32.mrf.mxu0
      %v2293 = vadd.f32 %v2132, %v2292
      %v2294 = vpop.f32.mrf.mxu0
      %v2295 = vpop.f32.mrf.mxu0
      %v2296 = vadd.f32 %v2135, %v2295
      %v2297 = vpop.f32.mrf.mxu0
      %2298 = vmatprep.mubr.bf16.mxu0 %v1136
      %2299 = vmatmul.mubr.bf16.gmra.mxu0 %v1419
      %v2300 = vpop.f32.mrf.mxu0
      %v2301 = vadd.f32 %v2140, %v2300
      %v2302 = vpop.f32.mrf.mxu0
      %v2303 = vpop.f32.mrf.mxu0
      %v2304 = vadd.f32 %v2143, %v2303
      %v2305 = vpop.f32.mrf.mxu0
      %2306 = vmatprep.mubr.bf16.mxu0 %v1137
      %2307 = vmatmul.mubr.bf16.gmra.mxu0 %v1422
      %v2308 = vpop.f32.mrf.mxu0
      %v2309 = vadd.f32 %v2148, %v2308
      %v2310 = vpop.f32.mrf.mxu0
      %v2311 = vpop.f32.mrf.mxu0
      %v2312 = vadd.f32 %v2151, %v2311
      %v2313 = vpop.f32.mrf.mxu0
      %2314 = vmatprep.mubr.bf16.mxu0 %v1138
      %2315 = vmatmul.mubr.bf16.gmra.mxu0 %v1425
      %v2316 = vpop.f32.mrf.mxu0
      %v2317 = vadd.f32 %v2156, %v2316
      %v2318 = vpop.f32.mrf.mxu0
      %v2319 = vpop.f32.mrf.mxu0
      %v2320 = vadd.f32 %v2159, %v2319
      %v2321 = vpop.f32.mrf.mxu0
      %2322 = vmatprep.mubr.bf16.mxu0 %v1139
      %2323 = vmatmul.mubr.bf16.gmra.mxu0 %v1428
      %v2324 = vpop.f32.mrf.mxu0
      %v2325 = vadd.f32 %v2164, %v2324
      %v2326 = vpop.f32.mrf.mxu0
      %v2327 = vpop.f32.mrf.mxu0
      %v2328 = vadd.f32 %v2167, %v2327
      %v2329 = vpop.f32.mrf.mxu0
      %2330 = vmatprep.mubr.bf16.mxu0 %v1140
      %2331 = vmatmul.mubr.bf16.gmra.mxu0 %v1431
      %v2332 = vpop.f32.mrf.mxu0
      %v2333 = vadd.f32 %v2172, %v2332
      %v2334 = vpop.f32.mrf.mxu0
      %v2335 = vpop.f32.mrf.mxu0
      %v2336 = vadd.f32 %v2175, %v2335
      %v2337 = vpop.f32.mrf.mxu0
      %2338 = vmatprep.mubr.bf16.mxu0 %v1141
      %2339 = vmatmul.mubr.bf16.gmra.mxu0 %v1434
      %v2340 = vpop.f32.mrf.mxu0
      %v2341 = vadd.f32 %v2180, %v2340
      %v2342 = vpop.f32.mrf.mxu0
      %v2343 = vpop.f32.mrf.mxu0
      %v2344 = vadd.f32 %v2183, %v2343
      %v2345 = vpop.f32.mrf.mxu0
      %2346 = vmatprep.mubr.bf16.mxu0 %v1142
      %2347 = vmatmul.mubr.bf16.gmra.mxu0 %v1437
      %v2348 = vpop.f32.mrf.mxu0
      %v2349 = vadd.f32 %v2188, %v2348
      %v2350 = vpop.f32.mrf.mxu0
      %v2351 = vpop.f32.mrf.mxu0
      %v2352 = vadd.f32 %v2191, %v2351
      %v2353 = vpop.f32.mrf.mxu0
      %2354 = vmatprep.mubr.bf16.mxu0 %v1143
      %2355 = vmatmul.mubr.bf16.gmra.mxu0 %v1440
      %v2356 = vpop.f32.mrf.mxu0
      %v2357 = vadd.f32 %v2196, %v2356
      %v2358 = vpop.f32.mrf.mxu0
      %v2359 = vpop.f32.mrf.mxu0
      %v2360 = vadd.f32 %v2199, %v2359
      %v2361 = vpop.f32.mrf.mxu0
      %2362 = vmatprep.mubr.bf16.mxu0 %v1144
      %2363 = vmatmul.mubr.bf16.gmra.mxu0 %v1443
      %v2364 = vpop.f32.mrf.mxu0
      %v2365 = vadd.f32 %v2204, %v2364
      %v2366 = vpop.f32.mrf.mxu0
      %v2367 = vpop.f32.mrf.mxu0
      %v2368 = vadd.f32 %v2207, %v2367
      %v2369 = vpop.f32.mrf.mxu0
      %2370 = vmatprep.mubr.bf16.mxu0 %v1145
      %2371 = vmatmul.mubr.bf16.gmra.mxu0 %v1446
      %v2372 = vpop.f32.mrf.mxu0
      %v2373 = vadd.f32 %v2212, %v2372
      %v2374 = vpop.f32.mrf.mxu0
      %v2375 = vpop.f32.mrf.mxu0
      %v2376 = vadd.f32 %v2215, %v2375
      %v2377 = vpop.f32.mrf.mxu0
      %2378 = vmatprep.mubr.bf16.mxu0 %v1146
      %2379 = vmatmul.mubr.bf16.gmra.mxu0 %v1449
      %v2380 = vpop.f32.mrf.mxu0
      %v2381 = vadd.f32 %v2220, %v2380
      %v2382 = vpop.f32.mrf.mxu0
      %v2383 = vpop.f32.mrf.mxu0
      %v2384 = vadd.f32 %v2223, %v2383
      %v2385 = vpop.f32.mrf.mxu0
      %2386 = vmatprep.mubr.bf16.mxu0 %v1147
      %2387 = vmatmul.mubr.bf16.gmra.mxu0 %v1452
      %v2388 = vpop.f32.mrf.mxu0
      %v2389 = vadd.f32 %v2228, %v2388
      %v2390 = vpop.f32.mrf.mxu0
      %v2391 = vpop.f32.mrf.mxu0
      %v2392 = vadd.f32 %v2231, %v2391
      %v2393 = vpop.f32.mrf.mxu0
      %2394 = vmatprep.mubr.bf16.mxu0 %v1148
      %2395 = vmatmul.mubr.bf16.gmra.mxu0 %v1455
      %v2396 = vpop.f32.mrf.mxu0
      %v2397 = vadd.f32 %v2236, %v2396
      %v2398 = vpop.f32.mrf.mxu0
      %v2399 = vpop.f32.mrf.mxu0
      %v2400 = vadd.f32 %v2239, %v2399
      %v2401 = vpop.f32.mrf.mxu0
      %2402 = vmatprep.mubr.bf16.mxu0 %v1149
      %2403 = vmatmul.mubr.bf16.gmra.mxu0 %v1458
      %v2404 = vpop.f32.mrf.mxu0
      %v2405 = vadd.f32 %v2244, %v2404
      %v2406 = vpop.f32.mrf.mxu0
      %v2407 = vpop.f32.mrf.mxu0
      %v2408 = vadd.f32 %v2247, %v2407
      %v2409 = vpop.f32.mrf.mxu0
      %2410 = vdwg.mxu0
      %2411 = vmatprep.subr.bf16.mxu0 0
      %2412 = vmatpush1.bf16.msra.mxu0 %v1984
      %2413 = vmatprep.subr.bf16.mxu0 0
      %2414 = vmatpush1.bf16.msra.mxu0 %v1983
      %2415 = vmatprep.subr.bf16.mxu0 0
      %2416 = vmatpush1.bf16.msra.mxu0 %v1982
      %2417 = vmatprep.subr.bf16.mxu0 0
      %2418 = vmatpush1.bf16.msra.mxu0 %v1981
      %2419 = vmatprep.subr.bf16.mxu0 0
      %2420 = vmatpush1.bf16.msra.mxu0 %v1980
      %2421 = vmatprep.subr.bf16.mxu0 0
      %2422 = vmatpush1.bf16.msra.mxu0 %v1979
      %2423 = vmatprep.subr.bf16.mxu0 0
      %2424 = vmatpush1.bf16.msra.mxu0 %v1978
      %2425 = vmatprep.subr.bf16.mxu0 0
      %2426 = vmatpush1.bf16.msra.mxu0 %v1977
      %2427 = vmatprep.subr.bf16.mxu0 0
      %2428 = vmatpush2.bf16.msra.mxu0 %v1992
      %2429 = vmatprep.subr.bf16.mxu0 0
      %2430 = vmatpush2.bf16.msra.mxu0 %v1991
      %2431 = vmatprep.subr.bf16.mxu0 0
      %2432 = vmatpush2.bf16.msra.mxu0 %v1990
      %2433 = vmatprep.subr.bf16.mxu0 0
      %2434 = vmatpush2.bf16.msra.mxu0 %v1989
      %2435 = vmatprep.subr.bf16.mxu0 0
      %2436 = vmatpush2.bf16.msra.mxu0 %v1988
      %2437 = vmatprep.subr.bf16.mxu0 0
      %2438 = vmatpush2.bf16.msra.mxu0 %v1987
      %2439 = vmatprep.subr.bf16.mxu0 0
      %2440 = vmatpush2.bf16.msra.mxu0 %v1986
      %2441 = vmatprep.subr.bf16.mxu0 0
      %2442 = vmatpush2.bf16.msra.mxu0 %v1985
      %2443 = vmatprep.mubr.bf16.mxu0 %v1416
      %2444 = vmatmul.mubr.bf16.gmra.mxu0 %v1193
      %v2445 = vpop.f32.mrf.mxu0
      %v2446 = vadd.f32 %v2285, %v2445
      %v2447 = vpop.f32.mrf.mxu0
      %v2448 = vpop.f32.mrf.mxu0
      %v2449 = vadd.f32 %v2288, %v2448
      %v2450 = vpop.f32.mrf.mxu0
      %2451 = vmatprep.mubr.bf16.mxu0 %v1419
      %2452 = vmatmul.mubr.bf16.gmra.mxu0 %v1205
      %v2453 = vpop.f32.mrf.mxu0
      %v2454 = vadd.f32 %v2293, %v2453
      %v2455 = vpop.f32.mrf.mxu0
      %v2456 = vpop.f32.mrf.mxu0
      %v2457 = vadd.f32 %v2296, %v2456
      %v2458 = vpop.f32.mrf.mxu0
      %2459 = vmatprep.mubr.bf16.mxu0 %v1422
      %2460 = vmatmul.mubr.bf16.gmra.mxu0 %v1217
      %v2461 = vpop.f32.mrf.mxu0
      %v2462 = vadd.f32 %v2301, %v2461
      %v2463 = vpop.f32.mrf.mxu0
      %v2464 = vpop.f32.mrf.mxu0
      %v2465 = vadd.f32 %v2304, %v2464
      %v2466 = vpop.f32.mrf.mxu0
      %2467 = vmatprep.mubr.bf16.mxu0 %v1425
      %2468 = vmatmul.mubr.bf16.gmra.mxu0 %v1229
      %v2469 = vpop.f32.mrf.mxu0
      %v2470 = vadd.f32 %v2309, %v2469
      %v2471 = vpop.f32.mrf.mxu0
      %v2472 = vpop.f32.mrf.mxu0
      %v2473 = vadd.f32 %v2312, %v2472
      %v2474 = vpop.f32.mrf.mxu0
      %2475 = vmatprep.mubr.bf16.mxu0 %v1428
      %2476 = vmatmul.mubr.bf16.gmra.mxu0 %v1241
      %v2477 = vpop.f32.mrf.mxu0
      %v2478 = vadd.f32 %v2317, %v2477
      %v2479 = vpop.f32.mrf.mxu0
      %v2480 = vpop.f32.mrf.mxu0
      %v2481 = vadd.f32 %v2320, %v2480
      %v2482 = vpop.f32.mrf.mxu0
      %2483 = vmatprep.mubr.bf16.mxu0 %v1431
      %2484 = vmatmul.mubr.bf16.gmra.mxu0 %v1253
      %v2485 = vpop.f32.mrf.mxu0
      %v2486 = vadd.f32 %v2325, %v2485
      %v2487 = vpop.f32.mrf.mxu0
      %v2488 = vpop.f32.mrf.mxu0
      %v2489 = vadd.f32 %v2328, %v2488
      %v2490 = vpop.f32.mrf.mxu0
      %2491 = vmatprep.mubr.bf16.mxu0 %v1434
      %2492 = vmatmul.mubr.bf16.gmra.mxu0 %v1265
      %v2493 = vpop.f32.mrf.mxu0
      %v2494 = vadd.f32 %v2333, %v2493
      %v2495 = vpop.f32.mrf.mxu0
      %v2496 = vpop.f32.mrf.mxu0
      %v2497 = vadd.f32 %v2336, %v2496
      %v2498 = vpop.f32.mrf.mxu0
      %2499 = vmatprep.mubr.bf16.mxu0 %v1437
      %2500 = vmatmul.mubr.bf16.gmra.mxu0 %v1277
      %v2501 = vpop.f32.mrf.mxu0
      %v2502 = vadd.f32 %v2341, %v2501
      %v2503 = vpop.f32.mrf.mxu0
      %v2504 = vpop.f32.mrf.mxu0
      %v2505 = vadd.f32 %v2344, %v2504
      %v2506 = vpop.f32.mrf.mxu0
      %2507 = vmatprep.mubr.bf16.mxu0 %v1440
      %2508 = vmatmul.mubr.bf16.gmra.mxu0 %v1289
      %v2509 = vpop.f32.mrf.mxu0
      %v2510 = vadd.f32 %v2349, %v2509
      %v2511 = vpop.f32.mrf.mxu0
      %v2512 = vpop.f32.mrf.mxu0
      %v2513 = vadd.f32 %v2352, %v2512
      %v2514 = vpop.f32.mrf.mxu0
      %2515 = vmatprep.mubr.bf16.mxu0 %v1443
      %2516 = vmatmul.mubr.bf16.gmra.mxu0 %v1301
      %v2517 = vpop.f32.mrf.mxu0
      %v2518 = vadd.f32 %v2357, %v2517
      %v2519 = vpop.f32.mrf.mxu0
      %v2520 = vpop.f32.mrf.mxu0
      %v2521 = vadd.f32 %v2360, %v2520
      %v2522 = vpop.f32.mrf.mxu0
      %2523 = vmatprep.mubr.bf16.mxu0 %v1446
      %2524 = vmatmul.mubr.bf16.gmra.mxu0 %v1313
      %v2525 = vpop.f32.mrf.mxu0
      %v2526 = vadd.f32 %v2365, %v2525
      %v2527 = vpop.f32.mrf.mxu0
      %v2528 = vpop.f32.mrf.mxu0
      %v2529 = vadd.f32 %v2368, %v2528
      %v2530 = vpop.f32.mrf.mxu0
      %2531 = vmatprep.mubr.bf16.mxu0 %v1449
      %2532 = vmatmul.mubr.bf16.gmra.mxu0 %v1325
      %v2533 = vpop.f32.mrf.mxu0
      %v2534 = vadd.f32 %v2373, %v2533
      %v2535 = vpop.f32.mrf.mxu0
      %v2536 = vpop.f32.mrf.mxu0
      %v2537 = vadd.f32 %v2376, %v2536
      %v2538 = vpop.f32.mrf.mxu0
      %2539 = vmatprep.mubr.bf16.mxu0 %v1452
      %2540 = vmatmul.mubr.bf16.gmra.mxu0 %v1337
      %v2541 = vpop.f32.mrf.mxu0
      %v2542 = vadd.f32 %v2381, %v2541
      %v2543 = vpop.f32.mrf.mxu0
      %v2544 = vpop.f32.mrf.mxu0
      %v2545 = vadd.f32 %v2384, %v2544
      %v2546 = vpop.f32.mrf.mxu0
      %2547 = vmatprep.mubr.bf16.mxu0 %v1455
      %2548 = vmatmul.mubr.bf16.gmra.mxu0 %v1349
      %v2549 = vpop.f32.mrf.mxu0
      %v2550 = vadd.f32 %v2389, %v2549
      %v2551 = vpop.f32.mrf.mxu0
      %v2552 = vpop.f32.mrf.mxu0
      %v2553 = vadd.f32 %v2392, %v2552
      %v2554 = vpop.f32.mrf.mxu0
      %2555 = vmatprep.mubr.bf16.mxu0 %v1458
      %2556 = vmatmul.mubr.bf16.gmra.mxu0 %v1361
      %v2557 = vpop.f32.mrf.mxu0
      %v2558 = vadd.f32 %v2397, %v2557
      %v2559 = vpop.f32.mrf.mxu0
      %v2560 = vpop.f32.mrf.mxu0
      %v2561 = vadd.f32 %v2400, %v2560
      %v2562 = vpop.f32.mrf.mxu0
      %2563 = vmatprep.mubr.bf16.mxu0 %v1492
      %2564 = vmatmul.mubr.bf16.gmra.mxu0 %v1486
      %v2565 = vpop.f32.mrf.mxu0
      %v2566 = vadd.f32 %v2405, %v2565
      %v2567 = vpop.f32.mrf.mxu0
      %v2568 = vpop.f32.mrf.mxu0
      %v2569 = vadd.f32 %v2408, %v2568
      %v2570 = vpop.f32.mrf.mxu0
      %2571 = vdwg.mxu0
      %2572 = vmatprep.subr.bf16.mxu0 0
      %2573 = vmatpush1.bf16.msra.mxu0 %v2000
      %2574 = vmatprep.subr.bf16.mxu0 0
      %2575 = vmatpush1.bf16.msra.mxu0 %v1999
      %2576 = vmatprep.subr.bf16.mxu0 0
      %2577 = vmatpush1.bf16.msra.mxu0 %v1998
      %2578 = vmatprep.subr.bf16.mxu0 0
      %2579 = vmatpush1.bf16.msra.mxu0 %v1997
      %2580 = vmatprep.subr.bf16.mxu0 0
      %2581 = vmatpush1.bf16.msra.mxu0 %v1996
      %2582 = vmatprep.subr.bf16.mxu0 0
      %2583 = vmatpush1.bf16.msra.mxu0 %v1995
      %2584 = vmatprep.subr.bf16.mxu0 0
      %2585 = vmatpush1.bf16.msra.mxu0 %v1994
      %2586 = vmatprep.subr.bf16.mxu0 0
      %2587 = vmatpush1.bf16.msra.mxu0 %v1993
      %2588 = vmatprep.subr.bf16.mxu0 0
      %2589 = vmatpush2.bf16.msra.mxu0 %v2008
      %2590 = vmatprep.subr.bf16.mxu0 0
      %2591 = vmatpush2.bf16.msra.mxu0 %v2007
      %2592 = vmatprep.subr.bf16.mxu0 0
      %2593 = vmatpush2.bf16.msra.mxu0 %v2006
      %2594 = vmatprep.subr.bf16.mxu0 0
      %2595 = vmatpush2.bf16.msra.mxu0 %v2005
      %2596 = vmatprep.subr.bf16.mxu0 0
      %2597 = vmatpush2.bf16.msra.mxu0 %v2004
      %2598 = vmatprep.subr.bf16.mxu0 0
      %2599 = vmatpush2.bf16.msra.mxu0 %v2003
      %2600 = vmatprep.subr.bf16.mxu0 0
      %2601 = vmatpush2.bf16.msra.mxu0 %v2002
      %2602 = vmatprep.subr.bf16.mxu0 0
      %2603 = vmatpush2.bf16.msra.mxu0 %v2001
      %2604 = vmatprep.mubr.bf16.mxu0 %v1205
      %2605 = vmatmul.mubr.bf16.gmra.mxu0 %v1135
      %v2606 = vpop.f32.mrf.mxu0
      %v2607 = vadd.f32 %v2446, %v2606
      %v2608 = vpop.f32.mrf.mxu0
      %v2609 = vpop.f32.mrf.mxu0
      %v2610 = vadd.f32 %v2449, %v2609
      %v2611 = vpop.f32.mrf.mxu0
      %2612 = vmatprep.mubr.bf16.mxu0 %v1217
      %2613 = vmatmul.mubr.bf16.gmra.mxu0 %v1136
      %v2614 = vpop.f32.mrf.mxu0
      %v2615 = vadd.f32 %v2454, %v2614
      %v2616 = vpop.f32.mrf.mxu0
      %v2617 = vpop.f32.mrf.mxu0
      %v2618 = vadd.f32 %v2457, %v2617
      %v2619 = vpop.f32.mrf.mxu0
      %2620 = vmatprep.mubr.bf16.mxu0 %v1229
      %2621 = vmatmul.mubr.bf16.gmra.mxu0 %v1137
      %v2622 = vpop.f32.mrf.mxu0
      %v2623 = vadd.f32 %v2462, %v2622
      %v2624 = vpop.f32.mrf.mxu0
      %v2625 = vpop.f32.mrf.mxu0
      %v2626 = vadd.f32 %v2465, %v2625
      %v2627 = vpop.f32.mrf.mxu0
      %2628 = vmatprep.mubr.bf16.mxu0 %v1241
      %2629 = vmatmul.mubr.bf16.gmra.mxu0 %v1138
      %v2630 = vpop.f32.mrf.mxu0
      %v2631 = vadd.f32 %v2470, %v2630
      %v2632 = vpop.f32.mrf.mxu0
      %v2633 = vpop.f32.mrf.mxu0
      %v2634 = vadd.f32 %v2473, %v2633
      %v2635 = vpop.f32.mrf.mxu0
      %2636 = vmatprep.mubr.bf16.mxu0 %v1253
      %2637 = vmatmul.mubr.bf16.gmra.mxu0 %v1139
      %v2638 = vpop.f32.mrf.mxu0
      %v2639 = vadd.f32 %v2478, %v2638
      %v2640 = vpop.f32.mrf.mxu0
      %v2641 = vpop.f32.mrf.mxu0
      %v2642 = vadd.f32 %v2481, %v2641
      %v2643 = vpop.f32.mrf.mxu0
      %2644 = vmatprep.mubr.bf16.mxu0 %v1265
      %2645 = vmatmul.mubr.bf16.gmra.mxu0 %v1140
      %v2646 = vpop.f32.mrf.mxu0
      %v2647 = vadd.f32 %v2486, %v2646
      %v2648 = vpop.f32.mrf.mxu0
      %v2649 = vpop.f32.mrf.mxu0
      %v2650 = vadd.f32 %v2489, %v2649
      %v2651 = vpop.f32.mrf.mxu0
      %2652 = vmatprep.mubr.bf16.mxu0 %v1277
      %2653 = vmatmul.mubr.bf16.gmra.mxu0 %v1141
      %v2654 = vpop.f32.mrf.mxu0
      %v2655 = vadd.f32 %v2494, %v2654
      %v2656 = vpop.f32.mrf.mxu0
      %v2657 = vpop.f32.mrf.mxu0
      %v2658 = vadd.f32 %v2497, %v2657
      %v2659 = vpop.f32.mrf.mxu0
      %2660 = vmatprep.mubr.bf16.mxu0 %v1289
      %2661 = vmatmul.mubr.bf16.gmra.mxu0 %v1142
      %v2662 = vpop.f32.mrf.mxu0
      %v2663 = vadd.f32 %v2502, %v2662
      %v2664 = vpop.f32.mrf.mxu0
      %v2665 = vpop.f32.mrf.mxu0
      %v2666 = vadd.f32 %v2505, %v2665
      %v2667 = vpop.f32.mrf.mxu0
      %2668 = vmatprep.mubr.bf16.mxu0 %v1301
      %2669 = vmatmul.mubr.bf16.gmra.mxu0 %v1143
      %v2670 = vpop.f32.mrf.mxu0
      %v2671 = vadd.f32 %v2510, %v2670
      %v2672 = vpop.f32.mrf.mxu0
      %v2673 = vpop.f32.mrf.mxu0
      %v2674 = vadd.f32 %v2513, %v2673
      %v2675 = vpop.f32.mrf.mxu0
      %2676 = vmatprep.mubr.bf16.mxu0 %v1313
      %2677 = vmatmul.mubr.bf16.gmra.mxu0 %v1144
      %v2678 = vpop.f32.mrf.mxu0
      %v2679 = vadd.f32 %v2518, %v2678
      %v2680 = vpop.f32.mrf.mxu0
      %v2681 = vpop.f32.mrf.mxu0
      %v2682 = vadd.f32 %v2521, %v2681
      %v2683 = vpop.f32.mrf.mxu0
      %2684 = vmatprep.mubr.bf16.mxu0 %v1325
      %2685 = vmatmul.mubr.bf16.gmra.mxu0 %v1145
      %v2686 = vpop.f32.mrf.mxu0
      %v2687 = vadd.f32 %v2526, %v2686
      %v2688 = vpop.f32.mrf.mxu0
      %v2689 = vpop.f32.mrf.mxu0
      %v2690 = vadd.f32 %v2529, %v2689
      %v2691 = vpop.f32.mrf.mxu0
      %2692 = vmatprep.mubr.bf16.mxu0 %v1337
      %2693 = vmatmul.mubr.bf16.gmra.mxu0 %v1146
      %v2694 = vpop.f32.mrf.mxu0
      %v2695 = vadd.f32 %v2534, %v2694
      %v2696 = vpop.f32.mrf.mxu0
      %v2697 = vpop.f32.mrf.mxu0
      %v2698 = vadd.f32 %v2537, %v2697
      %v2699 = vpop.f32.mrf.mxu0
      %2700 = vmatprep.mubr.bf16.mxu0 %v1349
      %2701 = vmatmul.mubr.bf16.gmra.mxu0 %v1147
      %v2702 = vpop.f32.mrf.mxu0
      %v2703 = vadd.f32 %v2542, %v2702
      %v2704 = vpop.f32.mrf.mxu0
      %v2705 = vpop.f32.mrf.mxu0
      %v2706 = vadd.f32 %v2545, %v2705
      %v2707 = vpop.f32.mrf.mxu0
      %2708 = vmatprep.mubr.bf16.mxu0 %v1361
      %2709 = vmatmul.mubr.bf16.gmra.mxu0 %v1148
      %v2710 = vpop.f32.mrf.mxu0
      %v2711 = vadd.f32 %v2550, %v2710
      %v2712 = vpop.f32.mrf.mxu0
      %v2713 = vpop.f32.mrf.mxu0
      %v2714 = vadd.f32 %v2553, %v2713
      %v2715 = vpop.f32.mrf.mxu0
      %2716 = vmatprep.mubr.bf16.mxu0 %v1486
      %2717 = vmatmul.mubr.bf16.gmra.mxu0 %v1149
      %v2718 = vpop.f32.mrf.mxu0
      %v2719 = vadd.f32 %v2558, %v2718
      %v2720 = vpop.f32.mrf.mxu0
      %v2721 = vpop.f32.mrf.mxu0
      %v2722 = vadd.f32 %v2561, %v2721
      %v2723 = vpop.f32.mrf.mxu0
      %2724 = vmatprep.mubr.bf16.mxu0 %v1505
      %2725 = vmatmul.mubr.bf16.gmra.mxu0 %v1150
      %v2726 = vpop.f32.mrf.mxu0
      %v2727 = vadd.f32 %v2566, %v2726
      %v2728 = vpop.f32.mrf.mxu0
      %v2729 = vpop.f32.mrf.mxu0
      %v2730 = vadd.f32 %v2569, %v2729
      %v2731 = vpop.f32.mrf.mxu0
      %2732 = vdwg.mxu0
      %2733 = vmatprep.subr.bf16.mxu0 0
      %2734 = vmatpush1.bf16.msra.mxu0 %v2016
      %2735 = vmatprep.subr.bf16.mxu0 0
      %2736 = vmatpush1.bf16.msra.mxu0 %v2015
      %2737 = vmatprep.subr.bf16.mxu0 0
      %2738 = vmatpush1.bf16.msra.mxu0 %v2014
      %2739 = vmatprep.subr.bf16.mxu0 0
      %2740 = vmatpush1.bf16.msra.mxu0 %v2013
      %2741 = vmatprep.subr.bf16.mxu0 0
      %2742 = vmatpush1.bf16.msra.mxu0 %v2012
      %2743 = vmatprep.subr.bf16.mxu0 0
      %2744 = vmatpush1.bf16.msra.mxu0 %v2011
      %2745 = vmatprep.subr.bf16.mxu0 0
      %2746 = vmatpush1.bf16.msra.mxu0 %v2010
      %2747 = vmatprep.subr.bf16.mxu0 0
      %2748 = vmatpush1.bf16.msra.mxu0 %v2009
      %2749 = vmatprep.subr.bf16.mxu0 0
      %2750 = vmatpush2.bf16.msra.mxu0 0
      %2751 = vmatprep.subr.bf16.mxu0 0
      %2752 = vmatpush2.bf16.msra.mxu0 0
      %2753 = vmatprep.subr.bf16.mxu0 0
      %2754 = vmatpush2.bf16.msra.mxu0 0
      %2755 = vmatprep.subr.bf16.mxu0 0
      %2756 = vmatpush2.bf16.msra.mxu0 0
      %2757 = vmatprep.subr.bf16.mxu0 0
      %2758 = vmatpush2.bf16.msra.mxu0 0
      %2759 = vmatprep.subr.bf16.mxu0 0
      %2760 = vmatpush2.bf16.msra.mxu0 0
      %2761 = vmatprep.subr.bf16.mxu0 0
      %2762 = vmatpush2.bf16.msra.mxu0 0
      %2763 = vmatprep.subr.bf16.mxu0 0
      %2764 = vmatpush2.bf16.msra.mxu0 0
      %2765 = vmatprep.mubr.bf16.mxu0 0
      %2766 = vmatmul.mubr.bf16.gmra.mxu0 %v1419
      %v2767 = vpop.f32.mrf.mxu0
      %v2768 = vadd.f32 %v2607, %v2767
      %v2769 = vpop.f32.mrf.mxu0
      %v2770 = vpop.f32.mrf.mxu0
      %v2771 = vadd.f32 %v2610, %v2770
      %v2772 = vpop.f32.mrf.mxu0
      %2773 = vmatprep.mubr.bf16.mxu0 0
      %2774 = vmatmul.mubr.bf16.gmra.mxu0 %v1422
      %v2775 = vpop.f32.mrf.mxu0
      %v2776 = vadd.f32 %v2615, %v2775
      %v2777 = vpop.f32.mrf.mxu0
      %v2778 = vpop.f32.mrf.mxu0
      %v2779 = vadd.f32 %v2618, %v2778
      %v2780 = vpop.f32.mrf.mxu0
      %2781 = vmatprep.mubr.bf16.mxu0 0
      %2782 = vmatmul.mubr.bf16.gmra.mxu0 %v1425
      %v2783 = vpop.f32.mrf.mxu0
      %v2784 = vadd.f32 %v2623, %v2783
      %v2785 = vpop.f32.mrf.mxu0
      %v2786 = vpop.f32.mrf.mxu0
      %v2787 = vadd.f32 %v2626, %v2786
      %v2788 = vpop.f32.mrf.mxu0
      %2789 = vmatprep.mubr.bf16.mxu0 0
      %2790 = vmatmul.mubr.bf16.gmra.mxu0 %v1428
      %v2791 = vpop.f32.mrf.mxu0
      %v2792 = vadd.f32 %v2631, %v2791
      %v2793 = vpop.f32.mrf.mxu0
      %v2794 = vpop.f32.mrf.mxu0
      %v2795 = vadd.f32 %v2634, %v2794
      %v2796 = vpop.f32.mrf.mxu0
      %2797 = vmatprep.mubr.bf16.mxu0 0
      %2798 = vmatmul.mubr.bf16.gmra.mxu0 %v1431
      %v2799 = vpop.f32.mrf.mxu0
      %v2800 = vadd.f32 %v2639, %v2799
      %v2801 = vpop.f32.mrf.mxu0
      %v2802 = vpop.f32.mrf.mxu0
      %v2803 = vadd.f32 %v2642, %v2802
      %v2804 = vpop.f32.mrf.mxu0
      %2805 = vmatprep.mubr.bf16.mxu0 0
      %2806 = vmatmul.mubr.bf16.gmra.mxu0 %v1434
      %v2807 = vpop.f32.mrf.mxu0
      %v2808 = vadd.f32 %v2647, %v2807
      %v2809 = vpop.f32.mrf.mxu0
      %v2810 = vpop.f32.mrf.mxu0
      %v2811 = vadd.f32 %v2650, %v2810
      %v2812 = vpop.f32.mrf.mxu0
      %2813 = vmatprep.mubr.bf16.mxu0 0
      %2814 = vmatmul.mubr.bf16.gmra.mxu0 %v1437
      %v2815 = vpop.f32.mrf.mxu0
      %v2816 = vadd.f32 %v2655, %v2815
      %v2817 = vpop.f32.mrf.mxu0
      %v2818 = vpop.f32.mrf.mxu0
      %v2819 = vadd.f32 %v2658, %v2818
      %v2820 = vpop.f32.mrf.mxu0
      %2821 = vmatprep.mubr.bf16.mxu0 0
      %2822 = vmatmul.mubr.bf16.gmra.mxu0 %v1440
      %v2823 = vpop.f32.mrf.mxu0
      %v2824 = vadd.f32 %v2663, %v2823
      %v2825 = vpop.f32.mrf.mxu0
      %v2826 = vpop.f32.mrf.mxu0
      %v2827 = vadd.f32 %v2666, %v2826
      %v2828 = vpop.f32.mrf.mxu0
      %2829 = vmatprep.mubr.bf16.mxu0 0
      %2830 = vmatmul.mubr.bf16.gmra.mxu0 %v1443
      %v2831 = vpop.f32.mrf.mxu0
      %v2832 = vadd.f32 %v2671, %v2831
      %v2833 = vpop.f32.mrf.mxu0
      %v2834 = vpop.f32.mrf.mxu0
      %v2835 = vadd.f32 %v2674, %v2834
      %v2836 = vpop.f32.mrf.mxu0
      %2837 = vmatprep.mubr.bf16.mxu0 0
      %2838 = vmatmul.mubr.bf16.gmra.mxu0 %v1446
      %v2839 = vpop.f32.mrf.mxu0
      %v2840 = vadd.f32 %v2679, %v2839
      %v2841 = vpop.f32.mrf.mxu0
      %v2842 = vpop.f32.mrf.mxu0
      %v2843 = vadd.f32 %v2682, %v2842
      %v2844 = vpop.f32.mrf.mxu0
      %2845 = vmatprep.mubr.bf16.mxu0 0
      %2846 = vmatmul.mubr.bf16.gmra.mxu0 %v1449
      %v2847 = vpop.f32.mrf.mxu0
      %v2848 = vadd.f32 %v2687, %v2847
      %v2849 = vpop.f32.mrf.mxu0
      %v2850 = vpop.f32.mrf.mxu0
      %v2851 = vadd.f32 %v2690, %v2850
      %v2852 = vpop.f32.mrf.mxu0
      %2853 = vmatprep.mubr.bf16.mxu0 0
      %2854 = vmatmul.mubr.bf16.gmra.mxu0 %v1452
      %v2855 = vpop.f32.mrf.mxu0
      %v2856 = vadd.f32 %v2695, %v2855
      %v2857 = vpop.f32.mrf.mxu0
      %v2858 = vpop.f32.mrf.mxu0
      %v2859 = vadd.f32 %v2698, %v2858
      %v2860 = vpop.f32.mrf.mxu0
      %2861 = vmatprep.mubr.bf16.mxu0 0
      %2862 = vmatmul.mubr.bf16.gmra.mxu0 %v1455
      %v2863 = vpop.f32.mrf.mxu0
      %v2864 = vadd.f32 %v2703, %v2863
      %v2865 = vpop.f32.mrf.mxu0
      %v2866 = vpop.f32.mrf.mxu0
      %v2867 = vadd.f32 %v2706, %v2866
      %v2868 = vpop.f32.mrf.mxu0
      %2869 = vmatprep.mubr.bf16.mxu0 0
      %2870 = vmatmul.mubr.bf16.gmra.mxu0 %v1458
      %v2871 = vpop.f32.mrf.mxu0
      %v2872 = vadd.f32 %v2711, %v2871
      %v2873 = vpop.f32.mrf.mxu0
      %v2874 = vpop.f32.mrf.mxu0
      %v2875 = vadd.f32 %v2714, %v2874
      %v2876 = vpop.f32.mrf.mxu0
      %2877 = vmatprep.mubr.bf16.mxu0 0
      %2878 = vmatmul.mubr.bf16.gmra.mxu0 %v1492
      %v2879 = vpop.f32.mrf.mxu0
      %v2880 = vadd.f32 %v2719, %v2879
      %v2881 = vpop.f32.mrf.mxu0
      %v2882 = vpop.f32.mrf.mxu0
      %v2883 = vadd.f32 %v2722, %v2882
      %v2884 = vpop.f32.mrf.mxu0
      %2885 = vmatprep.mubr.bf16.mxu0 0
      %2886 = vmatmul.mubr.bf16.gmra.mxu0 %v1511
      %v2887 = vpop.f32.mrf.mxu0
      %v2888 = vadd.f32 %v2727, %v2887
      %v2889 = vpop.f32.mrf.mxu0
      %v2890 = vpop.f32.mrf.mxu0
      %v2891 = vadd.f32 %v2730, %v2890
      %v2892 = vpop.f32.mrf.mxu0
      %2893 = vdwg.mxu0
      %2894 = vst [vmem:[%s521] sm:$0xff] %v2768
      %2895 = vst [vmem:[%s521 + $0x8] sm:$0xff] %v2771
      %2896 = vst [vmem:[%s521 + $0x10] sm:$0xff] %v2776
      %2897 = vst [vmem:[%s521 + $0x18] sm:$0xff] %v2779
      %2898 = vst [vmem:[%s521 + $0x20] sm:$0xff] %v2784
      %2899 = vst [vmem:[%s521 + $0x28] sm:$0xff] %v2787
      %2900 = vst [vmem:[%s521 + $0x30] sm:$0xff] %v2792
      %2901 = vst [vmem:[%s521 + $0x38] sm:$0xff] %v2795
      %2902 = vst [vmem:[%s521 + $0x40] sm:$0xff] %v2800
      %2903 = vst [vmem:[%s521 + $0x48] sm:$0xff] %v2803
      %2904 = vst [vmem:[%s521 + $0x50] sm:$0xff] %v2808
      %2905 = vst [vmem:[%s521 + $0x58] sm:$0xff] %v2811
      %2906 = vst [vmem:[%s521 + $0x60] sm:$0xff] %v2816
      %2907 = vst [vmem:[%s521 + $0x68] sm:$0xff] %v2819
      %2908 = vst [vmem:[%s521 + $0x70] sm:$0xff] %v2824
      %2909 = vst [vmem:[%s521 + $0x78] sm:$0xff] %v2827
      %2910 = vst [vmem:[%s521 + $0x80] sm:$0xff] %v2832
      %2911 = vst [vmem:[%s521 + $0x88] sm:$0xff] %v2835
      %2912 = vst [vmem:[%s521 + $0x90] sm:$0xff] %v2840
      %2913 = vst [vmem:[%s521 + $0x98] sm:$0xff] %v2843
      %2914 = vst [vmem:[%s521 + $0xa0] sm:$0xff] %v2848
      %2915 = vst [vmem:[%s521 + $0xa8] sm:$0xff] %v2851
      %2916 = vst [vmem:[%s521 + $0xb0] sm:$0xff] %v2856
      %2917 = vst [vmem:[%s521 + $0xb8] sm:$0xff] %v2859
      %2918 = vst [vmem:[%s521 + $0xc0] sm:$0xff] %v2864
      %2919 = vst [vmem:[%s521 + $0xc8] sm:$0xff] %v2867
      %2920 = vst [vmem:[%s521 + $0xd0] sm:$0xff] %v2872
      %2921 = vst [vmem:[%s521 + $0xd8] sm:$0xff] %v2875
      %2922 = vst [vmem:[%s521 + $0xe0] sm:$0xff] %v2880
      %2923 = vst [vmem:[%s521 + $0xe8] sm:$0xff] %v2883
      %2924 = vst [vmem:[%s521 + $0xf0] sm:$0xff] %v2888
      %2925 = vst [vmem:[%s521 + $0xf8] sm:$0xff] %v2891
      %v2926 = vadd.f32 %v2768, %v2771
      %v2927 = vadd.f32 %v2926, %v2776
      %v2928 = vadd.f32 %v2927, %v2779
      %v2929 = vadd.f32 %v2928, %v2784
      %v2930 = vadd.f32 %v2929, %v2787
      %v2931 = vadd.f32 %v2930, %v2792
      %v2932 = vadd.f32 %v2931, %v2795
      %v2933 = vadd.f32 %v2932, %v2800
      %v2934 = vadd.f32 %v2933, %v2803
      %v2935 = vadd.f32 %v2934, %v2808
      %v2936 = vadd.f32 %v2935, %v2811
      %v2937 = vadd.f32 %v2936, %v2816
      %v2938 = vadd.f32 %v2937, %v2819
      %v2939 = vadd.f32 %v2938, %v2824
      %v2940 = vadd.f32 %v2939, %v2827
      %v2941 = vadd.f32 %v2940, %v2832
      %v2942 = vadd.f32 %v2941, %v2835
      %v2943 = vadd.f32 %v2942, %v2840
      %v2944 = vadd.f32 %v2943, %v2843
      %v2945 = vadd.f32 %v2944, %v2848
      %v2946 = vadd.f32 %v2945, %v2851
      %v2947 = vadd.f32 %v2946, %v2856
      %v2948 = vadd.f32 %v2947, %v2859
      %v2949 = vadd.f32 %v2948, %v2864
      %v2950 = vadd.f32 %v2949, %v2867
      %v2951 = vadd.f32 %v2950, %v2872
      %v2952 = vadd.f32 %v2951, %v2875
      %v2953 = vadd.f32 %v2952, %v2880
      %v2954 = vadd.f32 %v2953, %v2883
      %v2955 = vadd.f32 %v2954, %v2888
      %v2956 = vadd.f32 %v2955, %v2891
      %v2957 = vrot.slane %v2956, 4
      %v2958 = vadd.f32 %v2956, %v2957
      %v2959 = vrot.slane %v2958, 2
      %v2960 = vadd.f32 %v2958, %v2959
      %v2961 = vrot.slane %v2960, 1
      %v2962 = vadd.f32 %v2960, %v2961
      %2963 = vst [vmem:[%s528] sm:$0x1] %v2962
      %v2964 = vmul.f32 %v2768, %v2768
      %v2965 = vmul.f32 %v2771, %v2771
      %v2966 = vmul.f32 %v2776, %v2776
      %v2967 = vmul.f32 %v2779, %v2779
      %v2968 = vmul.f32 %v2784, %v2784
      %v2969 = vmul.f32 %v2787, %v2787
      %v2970 = vmul.f32 %v2792, %v2792
      %v2971 = vmul.f32 %v2795, %v2795
      %v2972 = vmul.f32 %v2800, %v2800
      %v2973 = vmul.f32 %v2803, %v2803
      %v2974 = vmul.f32 %v2808, %v2808
      %v2975 = vmul.f32 %v2811, %v2811
      %v2976 = vmul.f32 %v2816, %v2816
      %v2977 = vmul.f32 %v2819, %v2819
      %v2978 = vmul.f32 %v2824, %v2824
      %v2979 = vmul.f32 %v2827, %v2827
      %v2980 = vmul.f32 %v2832, %v2832
      %v2981 = vmul.f32 %v2835, %v2835
      %v2982 = vmul.f32 %v2840, %v2840
      %v2983 = vmul.f32 %v2843, %v2843
      %v2984 = vmul.f32 %v2848, %v2848
      %v2985 = vmul.f32 %v2851, %v2851
      %v2986 = vmul.f32 %v2856, %v2856
      %v2987 = vmul.f32 %v2859, %v2859
      %v2988 = vmul.f32 %v2864, %v2864
      %v2989 = vmul.f32 %v2867, %v2867
      %v2990 = vmul.f32 %v2872, %v2872
      %v2991 = vmul.f32 %v2875, %v2875
      %v2992 = vmul.f32 %v2880, %v2880
      %v2993 = vmul.f32 %v2883, %v2883
      %v2994 = vmul.f32 %v2888, %v2888
      %v2995 = vmul.f32 %v2891, %v2891
      %v2996 = vadd.f32 %v2964, %v2965
      %v2997 = vadd.f32 %v2996, %v2966
      %v2998 = vadd.f32 %v2997, %v2967
      %v2999 = vadd.f32 %v2998, %v2968
      %v3000 = vadd.f32 %v2999, %v2969
      %v3001 = vadd.f32 %v3000, %v2970
      %v3002 = vadd.f32 %v3001, %v2971
      %v3003 = vadd.f32 %v3002, %v2972
      %v3004 = vadd.f32 %v3003, %v2973
      %v3005 = vadd.f32 %v3004, %v2974
      %v3006 = vadd.f32 %v3005, %v2975
      %v3007 = vadd.f32 %v3006, %v2976
      %v3008 = vadd.f32 %v3007, %v2977
      %v3009 = vadd.f32 %v3008, %v2978
      %v3010 = vadd.f32 %v3009, %v2979
      %v3011 = vadd.f32 %v3010, %v2980
      %v3012 = vadd.f32 %v3011, %v2981
      %v3013 = vadd.f32 %v3012, %v2982
      %v3014 = vadd.f32 %v3013, %v2983
      %v3015 = vadd.f32 %v3014, %v2984
      %v3016 = vadd.f32 %v3015, %v2985
      %v3017 = vadd.f32 %v3016, %v2986
      %v3018 = vadd.f32 %v3017, %v2987
      %v3019 = vadd.f32 %v3018, %v2988
      %v3020 = vadd.f32 %v3019, %v2989
      %v3021 = vadd.f32 %v3020, %v2990
      %v3022 = vadd.f32 %v3021, %v2991
      %v3023 = vadd.f32 %v3022, %v2992
      %v3024 = vadd.f32 %v3023, %v2993
      %v3025 = vadd.f32 %v3024, %v2994
      %v3026 = vadd.f32 %v3025, %v2995
      %v3027 = vrot.slane %v3026, 4
      %v3028 = vadd.f32 %v3026, %v3027
      %v3029 = vrot.slane %v3028, 2
      %v3030 = vadd.f32 %v3028, %v3029
      %v3031 = vrot.slane %v3030, 1
      %v3032 = vadd.f32 %v3030, %v3031
      %3033 = vst [vmem:[%s534] sm:$0x1] %v3032
      %s3034 = smul.u32 16, %s27
      %p3035 = scmp.lt.s32.totalorder %s26, 1
      %s3036 = scalar_select %p3035, %s26, 1
      %p3037 = scmp.lt.s32.totalorder %s3034, 15
      %s3038 = scalar_select %p3037, %s3034, 15
      %s3039 = smul.addr %s3038, 2
      %s3040 = smul.addr %s3036, 32
      %s3041 = sadd.s32 %s3039, %s3040
      %s3042 = smul.addr %s3041, 8
      %s3043 = scalar_lea.vmem %s7, %s3042
      %p3044 = scmp.lt.s32.totalorder %s26, 1
      %s3045 = scalar_select %p3044, %s26, 1
      %p3046 = scmp.lt.s32.totalorder %s27, 0
      %s3047 = scalar_select %p3046, %s27, 0
      %s3048 = sadd.s32 %s3047, %s3045
      %s3049 = scalar_lea.vmem %s8, %s3048
      %p3050 = scmp.lt.s32.totalorder %s26, 1
      %s3051 = scalar_select %p3050, %s26, 1
      %p3052 = scmp.lt.s32.totalorder %s27, 0
      %s3053 = scalar_select %p3052, %s27, 0
      %s3054 = sadd.s32 %s3053, %s3051
      %s3055 = scalar_lea.vmem %s9, %s3054
      // Predicated region
      $region49: #{residual_block_forward.4} parent=47 // pred_check
        %p3056 = pneg %p238
      $region50: #{residual_block_forward.4} parent=47 // pred_check_branch
        %3058 = sbr.rel (%p3056) target = $region52
      $region51: #{residual_block_forward.4} parent=47 // pred_region
        %s3059 = smul.u32 16, %s27
      $region52: #{residual_block_forward.4} parent=47 // pred_fallthru
        _
      // Predicated region
      $region53: #{residual_block_forward.4} parent=47 // pred_check
        %p3060 = pneg %p266
      $region54: #{residual_block_forward.4} parent=47 // pred_check_branch
        %3062 = sbr.rel (%p3060) target = $region56
      $region55: #{residual_block_forward.4} parent=47 // pred_region
        _
      $region56: #{residual_block_forward.4} parent=47 // pred_fallthru
        _
      // Predicated region
      $region57: #{residual_block_forward.4} parent=47 // pred_check
        %p3063 = pneg %p294
      $region58: #{residual_block_forward.4} parent=47 // pred_check_branch
        %3065 = sbr.rel (%p3063) target = $region60
      $region59: #{residual_block_forward.4} parent=47 // pred_region
        _
      $region60: #{residual_block_forward.4} parent=47 // pred_fallthru
        _
    $region48: #{residual_block_forward.4} parent=5 // pred_fallthru
      _
    %p3066 = scmp.le.s32.totalorder 2, %s17
    // Predicated region
    $region61: #{residual_block_forward.4} parent=5 // pred_check
      %p3067 = pneg %p3066
    $region62: #{residual_block_forward.4} parent=5 // pred_check_branch
      %3069 = sbr.rel (%p3067) target = $region64
    $region63: #{residual_block_forward.4} parent=5 // pred_region
      %s3070 = ssub.s32 %s17, 2
      // Predicated region
      $region65: #{residual_block_forward.4} parent=63 // pred_check
        %p3071 = pneg %p244
      $region66: #{residual_block_forward.4} parent=63 // pred_check_branch
        %3073 = sbr.rel (%p3071) target = $region68
      $region67: #{residual_block_forward.4} parent=63 // pred_region
        %s3074 = smul.u32 16, %s29
        %p3075 = scmp.lt.s32.totalorder %s28, 1
        %s3076 = scalar_select %p3075, %s28, 1
        %p3077 = scmp.lt.s32.totalorder %s3074, 15
        %s3078 = scalar_select %p3077, %s3074, 15
        %s3079 = smul.addr %s3078, 2
        %s3080 = smul.addr %s3076, 32
        %s3081 = sadd.s32 %s3079, %s3080
        %s3082 = smul.addr %s3081, 8
        %s3083 = scalar_lea.vmem %s7, %s3082
      $region68: #{residual_block_forward.4} parent=63 // pred_fallthru
        _
      // Predicated region
      $region69: #{residual_block_forward.4} parent=63 // pred_check
        %p3084 = pneg %p272
      $region70: #{residual_block_forward.4} parent=63 // pred_check_branch
        %3086 = sbr.rel (%p3084) target = $region72
      $region71: #{residual_block_forward.4} parent=63 // pred_region
        %p3087 = scmp.lt.s32.totalorder %s28, 1
        %s3088 = scalar_select %p3087, %s28, 1
        %p3089 = scmp.lt.s32.totalorder %s29, 0
        %s3090 = scalar_select %p3089, %s29, 0
        %s3091 = sadd.s32 %s3090, %s3088
        %s3092 = scalar_lea.vmem %s8, %s3091
      $region72: #{residual_block_forward.4} parent=63 // pred_fallthru
        _
      // Predicated region
      $region73: #{residual_block_forward.4} parent=63 // pred_check
        %p3093 = pneg %p300
      $region74: #{residual_block_forward.4} parent=63 // pred_check_branch
        %3095 = sbr.rel (%p3093) target = $region76
      $region75: #{residual_block_forward.4} parent=63 // pred_region
        %p3096 = scmp.lt.s32.totalorder %s28, 1
        %s3097 = scalar_select %p3096, %s28, 1
        %p3098 = scmp.lt.s32.totalorder %s29, 0
        %s3099 = scalar_select %p3098, %s29, 0
        %s3100 = sadd.s32 %s3099, %s3097
        %s3101 = scalar_lea.vmem %s9, %s3100
      $region76: #{residual_block_forward.4} parent=63 // pred_fallthru
        _
    $region64: #{residual_block_forward.4} parent=5 // pred_fallthru
      _
  $region6: #{residual_block_forward.4} parent=0 // loop_footer
    %s21 = sadd.s32 1, %s17
  $region7: #{residual_block_forward.4} parent=0 // loop_footer_branch
    %16 = sbr.rel target = $region3
  $region8: #{residual_block_forward.4} parent=0 // loop_exit
    _

</llo_original>
